<compile_context>
chip_gen: v5e
topology: v5e:2x2
jax: 0.10.0
libtpu: 0.0.40
codegen_flags: <defaults>
</compile_context>

<pallas_src>
import jax
import jax.numpy as jnp
import numpy as np
from jax.experimental import pallas as pl
from jax.experimental.pallas import tpu as pltpu

POOL = 5                  # MaxPool2d(5): kernel 5, stride 5, no padding
N_WIN = POOL * POOL       # 25 window taps
FEAT = 3264               # fc1.in_features = (240//5)*(340//5)
LANE_SPLIT = 1664         # 13*128: lane-aligned (and bf16 sublane-aligned) split


def _full_vmem_spec(shape):
    """Whole-array VMEM block (block == full array, trivially valid tiling)."""
    nd = len(shape)
    return pl.BlockSpec(shape, lambda i, _nd=nd: (0,) * _nd)


# ------------------------------ fused kernel --------------------------------

def _net_kernel(xp_ref, w1_ref, b1_ref, w2_ref, b2_ref, w3_ref, b3_ref,
                w4_ref, b4_ref, o_ref):
    # MaxPool2d(5) + flatten, fused: xp_ref is (25, n, 3264); pooling is a
    # 25-tap elementwise-maximum chain on the VPU over lane-dense slabs.
    # Two lane-aligned chunks bound the live vregs of the unrolled chain.
    def pooled(lo, hi):
        m = xp_ref[0, :, lo:hi]
        for k in range(1, N_WIN):
            m = jnp.maximum(m, xp_ref[k, :, lo:hi])
        return m.astype(jnp.bfloat16)

    # fc1 as a split-K accumulation matching the two pooled chunks; the bf16
    # weight feeds the MXU natively while accumulation stays in f32.
    acc = jnp.dot(pooled(0, LANE_SPLIT), w1_ref[:LANE_SPLIT, :],
                  preferred_element_type=jnp.float32)
    acc = acc + jnp.dot(pooled(LANE_SPLIT, FEAT), w1_ref[LANE_SPLIT:, :],
                        preferred_element_type=jnp.float32)
    h1 = jnp.maximum(acc + b1_ref[...], 0.0)

    h2 = jnp.maximum(
        jnp.dot(h1, w2_ref[...], preferred_element_type=jnp.float32)
        + b2_ref[...], 0.0)
    h3 = jnp.maximum(
        jnp.dot(h2, w3_ref[...], preferred_element_type=jnp.float32)
        + b3_ref[...], 0.0)
    o_ref[...] = (
        jnp.dot(h3, w4_ref[...], preferred_element_type=jnp.float32)
        + b4_ref[...])


# -------------------------------- wrapper ------------------------------------

def net_forward(x, params):
    n, h, w = x.shape
    ph, pw = h // POOL, w // POOL
    feat = ph * pw  # 3264

    # Put the 25 pooling taps on the leading axis so the kernel's pooled
    # activation is directly the lane-dense (n, ph*pw) fc1 input, in PyTorch's
    # flatten order.  With allow_input_fusion below, XLA may fuse this
    # rearrangement into the pallas_call operand instead of materializing it.
    xp = (x.reshape(n, ph, POOL, pw, POOL)
            .transpose(2, 4, 0, 1, 3)
            .reshape(N_WIN, n, feat))

    (w1, b1), (w2, b2), (w3, b3), (w4, b4) = params

    in_specs = [
        _full_vmem_spec(xp.shape),     # pooled-input taps (VMEM)
        _full_vmem_spec(w1.shape),     # fc1 weight (bf16) — prologue DMA
        _full_vmem_spec(b1.shape),
        _full_vmem_spec(w2.shape),
        _full_vmem_spec(b2.shape),
        _full_vmem_spec(w3.shape),
        _full_vmem_spec(b3.shape),
        _full_vmem_spec(w4.shape),
        _full_vmem_spec(b4.shape),
    ]

    n_out = w4.shape[1]
    return pl.pallas_call(
        _net_kernel,
        grid=(1,),
        in_specs=in_specs,
        out_specs=_full_vmem_spec((n, n_out)),
        out_shape=jax.ShapeDtypeStruct((n, n_out), jnp.float32),
        compiler_params=pltpu.CompilerParams(
            dimension_semantics=("arbitrary",),
            # Allow XLA to fuse the tap-rearrangement producer into operand 0.
            allow_input_fusion=[True] + [False] * 8,
            vmem_limit_bytes=32 * 1024 * 1024),
    )(xp, w1, b1, w2, b2, w3, b3, w4, b4)


# --------------------------- parameter creation -----------------------------

def init_params(key):
    """Deterministic init mimicking torch.nn.Linear U(-1/sqrt(fan_in), +...).

    Weights are stored as (in_features, out_features); biases as (1, out).
    fc1's weight is stored in bfloat16 (it dominates HBM traffic); all other
    tensors stay float32."""
    dims = [(3264, 300), (300, 30), (30, 10), (10, 3)]
    params = []
    for i, (fi, fo) in enumerate(dims):
        key, kw, kb = jax.random.split(key, 3)
        bound = 1.0 / np.sqrt(fi)
        w = jax.random.uniform(kw, (fi, fo), jnp.float32, -bound, bound)
        b = jax.random.uniform(kb, (1, fo), jnp.float32, -bound, bound)
        if i == 0:
            w = w.astype(jnp.bfloat16)
        params.append((w, b))
    return params


# ------------------------------- reference ----------------------------------

def ref_forward(x, params):
    n, h, w = x.shape
    ph, pw = h // POOL, w // POOL
    p = x.reshape(n, ph, POOL, pw, POOL).max(axis=(2, 4))
    a = p.reshape(n, -1)
    (w1, b1), (w2, b2), (w3, b3), (w4, b4) = params
    # fc1 uses the same bf16-weight / bf16-activation / f32-accumulate recipe
    # as the kernel so the comparison stays tight.
    a = jnp.maximum(
        jnp.dot(a.astype(jnp.bfloat16), w1,
                preferred_element_type=jnp.float32) + b1, 0.0)
    a = jnp.maximum(a @ w2 + b2, 0.0)
    a = jnp.maximum(a @ w3 + b3, 0.0)
    return a @ w4 + b4


# --------------------------------- main --------------------------------------

if __name__ == "__main__":
    key = jax.random.PRNGKey(0)
    k_x, k_p = jax.random.split(key)
    n, h, w = 2, 240, 340                 # (h//5)*(w//5) = 48*68 = 3264
    x = jax.random.normal(k_x, (n, h, w), dtype=jnp.float32)
    params = init_params(k_p)

    out = jax.block_until_ready(net_forward(x, params))
    ref = jax.block_until_ready(ref_forward(x, params))

    assert out.shape == (n, 3), out.shape
    assert np.allclose(np.asarray(out), np.asarray(ref), rtol=2e-3, atol=2e-3)

    print("KERNEL_OK")
</pallas_src>

<mosaic_0001>
module attributes {stable_mosaic.version = 11 : i64} {
  func.func @_net_kernel(%arg0: i32, %arg1: memref<25x2x3264xf32, #tpu.memory_space<vmem>>, %arg2: memref<3264x300xbf16, #tpu.memory_space<vmem>>, %arg3: memref<1x300xf32, #tpu.memory_space<vmem>>, %arg4: memref<300x30xf32, #tpu.memory_space<vmem>>, %arg5: memref<1x30xf32, #tpu.memory_space<vmem>>, %arg6: memref<30x10xf32, #tpu.memory_space<vmem>>, %arg7: memref<1x10xf32, #tpu.memory_space<vmem>>, %arg8: memref<10x3xf32, #tpu.memory_space<vmem>>, %arg9: memref<1x3xf32, #tpu.memory_space<vmem>>, %arg10: memref<2x3xf32, #tpu.memory_space<vmem>>) attributes {dimension_semantics = [#tpu.dimension_semantics<arbitrary>], iteration_bounds = array<i64: 1>, scalar_prefetch = 0 : i64, scratch_operands = 0 : i64, tpu.core_type = #tpu.core_type<tc>, window_params = [{pipeline_mode = #tpu.pipeline_mode<synchronous>, transform_indices = @transform_0, window_bounds = array<i64: 25, 2, 3264>}, {pipeline_mode = #tpu.pipeline_mode<synchronous>, transform_indices = @transform_1, window_bounds = array<i64: 3264, 300>}, {pipeline_mode = #tpu.pipeline_mode<synchronous>, transform_indices = @transform_2, window_bounds = array<i64: 1, 300>}, {pipeline_mode = #tpu.pipeline_mode<synchronous>, transform_indices = @transform_3, window_bounds = array<i64: 300, 30>}, {pipeline_mode = #tpu.pipeline_mode<synchronous>, transform_indices = @transform_4, window_bounds = array<i64: 1, 30>}, {pipeline_mode = #tpu.pipeline_mode<synchronous>, transform_indices = @transform_5, window_bounds = array<i64: 30, 10>}, {pipeline_mode = #tpu.pipeline_mode<synchronous>, transform_indices = @transform_6, window_bounds = array<i64: 1, 10>}, {pipeline_mode = #tpu.pipeline_mode<synchronous>, transform_indices = @transform_7, window_bounds = array<i64: 10, 3>}, {pipeline_mode = #tpu.pipeline_mode<synchronous>, transform_indices = @transform_8, window_bounds = array<i64: 1, 3>}, {pipeline_mode = #tpu.pipeline_mode<synchronous>, transform_indices = @transform_9, window_bounds = array<i64: 2, 3>}]} {
    %c0 = arith.constant 0 : index
    %c0_0 = arith.constant 0 : index
    %c0_1 = arith.constant 0 : index
    %0 = vector.load %arg1[%c0, %c0_0, %c0_1] : memref<25x2x3264xf32, #tpu.memory_space<vmem>>, vector<1x2x1664xf32>
    %1 = vector.shape_cast %0 : vector<1x2x1664xf32> to vector<2x1664xf32>
    %c1 = arith.constant 1 : index
    %c0_2 = arith.constant 0 : index
    %c0_3 = arith.constant 0 : index
    %2 = vector.load %arg1[%c1, %c0_2, %c0_3] : memref<25x2x3264xf32, #tpu.memory_space<vmem>>, vector<1x2x1664xf32>
    %3 = vector.shape_cast %2 : vector<1x2x1664xf32> to vector<2x1664xf32>
    %4 = arith.maximumf %1, %3 : vector<2x1664xf32>
    %c2 = arith.constant 2 : index
    %c0_4 = arith.constant 0 : index
    %c0_5 = arith.constant 0 : index
    %5 = vector.load %arg1[%c2, %c0_4, %c0_5] : memref<25x2x3264xf32, #tpu.memory_space<vmem>>, vector<1x2x1664xf32>
    %6 = vector.shape_cast %5 : vector<1x2x1664xf32> to vector<2x1664xf32>
    %7 = arith.maximumf %4, %6 : vector<2x1664xf32>
    %c3 = arith.constant 3 : index
    %c0_6 = arith.constant 0 : index
    %c0_7 = arith.constant 0 : index
    %8 = vector.load %arg1[%c3, %c0_6, %c0_7] : memref<25x2x3264xf32, #tpu.memory_space<vmem>>, vector<1x2x1664xf32>
    %9 = vector.shape_cast %8 : vector<1x2x1664xf32> to vector<2x1664xf32>
    %10 = arith.maximumf %7, %9 : vector<2x1664xf32>
    %c4 = arith.constant 4 : index
    %c0_8 = arith.constant 0 : index
    %c0_9 = arith.constant 0 : index
    %11 = vector.load %arg1[%c4, %c0_8, %c0_9] : memref<25x2x3264xf32, #tpu.memory_space<vmem>>, vector<1x2x1664xf32>
    %12 = vector.shape_cast %11 : vector<1x2x1664xf32> to vector<2x1664xf32>
    %13 = arith.maximumf %10, %12 : vector<2x1664xf32>
    %c5 = arith.constant 5 : index
    %c0_10 = arith.constant 0 : index
    %c0_11 = arith.constant 0 : index
    %14 = vector.load %arg1[%c5, %c0_10, %c0_11] : memref<25x2x3264xf32, #tpu.memory_space<vmem>>, vector<1x2x1664xf32>
    %15 = vector.shape_cast %14 : vector<1x2x1664xf32> to vector<2x1664xf32>
    %16 = arith.maximumf %13, %15 : vector<2x1664xf32>
    %c6 = arith.constant 6 : index
    %c0_12 = arith.constant 0 : index
    %c0_13 = arith.constant 0 : index
    %17 = vector.load %arg1[%c6, %c0_12, %c0_13] : memref<25x2x3264xf32, #tpu.memory_space<vmem>>, vector<1x2x1664xf32>
    %18 = vector.shape_cast %17 : vector<1x2x1664xf32> to vector<2x1664xf32>
    %19 = arith.maximumf %16, %18 : vector<2x1664xf32>
    %c7 = arith.constant 7 : index
    %c0_14 = arith.constant 0 : index
    %c0_15 = arith.constant 0 : index
    %20 = vector.load %arg1[%c7, %c0_14, %c0_15] : memref<25x2x3264xf32, #tpu.memory_space<vmem>>, vector<1x2x1664xf32>
    %21 = vector.shape_cast %20 : vector<1x2x1664xf32> to vector<2x1664xf32>
    %22 = arith.maximumf %19, %21 : vector<2x1664xf32>
    %c8 = arith.constant 8 : index
    %c0_16 = arith.constant 0 : index
    %c0_17 = arith.constant 0 : index
    %23 = vector.load %arg1[%c8, %c0_16, %c0_17] : memref<25x2x3264xf32, #tpu.memory_space<vmem>>, vector<1x2x1664xf32>
    %24 = vector.shape_cast %23 : vector<1x2x1664xf32> to vector<2x1664xf32>
    %25 = arith.maximumf %22, %24 : vector<2x1664xf32>
    %c9 = arith.constant 9 : index
    %c0_18 = arith.constant 0 : index
    %c0_19 = arith.constant 0 : index
    %26 = vector.load %arg1[%c9, %c0_18, %c0_19] : memref<25x2x3264xf32, #tpu.memory_space<vmem>>, vector<1x2x1664xf32>
    %27 = vector.shape_cast %26 : vector<1x2x1664xf32> to vector<2x1664xf32>
    %28 = arith.maximumf %25, %27 : vector<2x1664xf32>
    %c10 = arith.constant 10 : index
    %c0_20 = arith.constant 0 : index
    %c0_21 = arith.constant 0 : index
    %29 = vector.load %arg1[%c10, %c0_20, %c0_21] : memref<25x2x3264xf32, #tpu.memory_space<vmem>>, vector<1x2x1664xf32>
    %30 = vector.shape_cast %29 : vector<1x2x1664xf32> to vector<2x1664xf32>
    %31 = arith.maximumf %28, %30 : vector<2x1664xf32>
    %c11 = arith.constant 11 : index
    %c0_22 = arith.constant 0 : index
    %c0_23 = arith.constant 0 : index
    %32 = vector.load %arg1[%c11, %c0_22, %c0_23] : memref<25x2x3264xf32, #tpu.memory_space<vmem>>, vector<1x2x1664xf32>
    %33 = vector.shape_cast %32 : vector<1x2x1664xf32> to vector<2x1664xf32>
    %34 = arith.maximumf %31, %33 : vector<2x1664xf32>
    %c12 = arith.constant 12 : index
    %c0_24 = arith.constant 0 : index
    %c0_25 = arith.constant 0 : index
    %35 = vector.load %arg1[%c12, %c0_24, %c0_25] : memref<25x2x3264xf32, #tpu.memory_space<vmem>>, vector<1x2x1664xf32>
    %36 = vector.shape_cast %35 : vector<1x2x1664xf32> to vector<2x1664xf32>
    %37 = arith.maximumf %34, %36 : vector<2x1664xf32>
    %c13 = arith.constant 13 : index
    %c0_26 = arith.constant 0 : index
    %c0_27 = arith.constant 0 : index
    %38 = vector.load %arg1[%c13, %c0_26, %c0_27] : memref<25x2x3264xf32, #tpu.memory_space<vmem>>, vector<1x2x1664xf32>
    %39 = vector.shape_cast %38 : vector<1x2x1664xf32> to vector<2x1664xf32>
    %40 = arith.maximumf %37, %39 : vector<2x1664xf32>
    %c14 = arith.constant 14 : index
    %c0_28 = arith.constant 0 : index
    %c0_29 = arith.constant 0 : index
    %41 = vector.load %arg1[%c14, %c0_28, %c0_29] : memref<25x2x3264xf32, #tpu.memory_space<vmem>>, vector<1x2x1664xf32>
    %42 = vector.shape_cast %41 : vector<1x2x1664xf32> to vector<2x1664xf32>
    %43 = arith.maximumf %40, %42 : vector<2x1664xf32>
    %c15 = arith.constant 15 : index
    %c0_30 = arith.constant 0 : index
    %c0_31 = arith.constant 0 : index
    %44 = vector.load %arg1[%c15, %c0_30, %c0_31] : memref<25x2x3264xf32, #tpu.memory_space<vmem>>, vector<1x2x1664xf32>
    %45 = vector.shape_cast %44 : vector<1x2x1664xf32> to vector<2x1664xf32>
    %46 = arith.maximumf %43, %45 : vector<2x1664xf32>
    %c16 = arith.constant 16 : index
    %c0_32 = arith.constant 0 : index
    %c0_33 = arith.constant 0 : index
    %47 = vector.load %arg1[%c16, %c0_32, %c0_33] : memref<25x2x3264xf32, #tpu.memory_space<vmem>>, vector<1x2x1664xf32>
    %48 = vector.shape_cast %47 : vector<1x2x1664xf32> to vector<2x1664xf32>
    %49 = arith.maximumf %46, %48 : vector<2x1664xf32>
    %c17 = arith.constant 17 : index
    %c0_34 = arith.constant 0 : index
    %c0_35 = arith.constant 0 : index
    %50 = vector.load %arg1[%c17, %c0_34, %c0_35] : memref<25x2x3264xf32, #tpu.memory_space<vmem>>, vector<1x2x1664xf32>
    %51 = vector.shape_cast %50 : vector<1x2x1664xf32> to vector<2x1664xf32>
    %52 = arith.maximumf %49, %51 : vector<2x1664xf32>
    %c18 = arith.constant 18 : index
    %c0_36 = arith.constant 0 : index
    %c0_37 = arith.constant 0 : index
    %53 = vector.load %arg1[%c18, %c0_36, %c0_37] : memref<25x2x3264xf32, #tpu.memory_space<vmem>>, vector<1x2x1664xf32>
    %54 = vector.shape_cast %53 : vector<1x2x1664xf32> to vector<2x1664xf32>
    %55 = arith.maximumf %52, %54 : vector<2x1664xf32>
    %c19 = arith.constant 19 : index
    %c0_38 = arith.constant 0 : index
    %c0_39 = arith.constant 0 : index
    %56 = vector.load %arg1[%c19, %c0_38, %c0_39] : memref<25x2x3264xf32, #tpu.memory_space<vmem>>, vector<1x2x1664xf32>
    %57 = vector.shape_cast %56 : vector<1x2x1664xf32> to vector<2x1664xf32>
    %58 = arith.maximumf %55, %57 : vector<2x1664xf32>
    %c20 = arith.constant 20 : index
    %c0_40 = arith.constant 0 : index
    %c0_41 = arith.constant 0 : index
    %59 = vector.load %arg1[%c20, %c0_40, %c0_41] : memref<25x2x3264xf32, #tpu.memory_space<vmem>>, vector<1x2x1664xf32>
    %60 = vector.shape_cast %59 : vector<1x2x1664xf32> to vector<2x1664xf32>
    %61 = arith.maximumf %58, %60 : vector<2x1664xf32>
    %c21 = arith.constant 21 : index
    %c0_42 = arith.constant 0 : index
    %c0_43 = arith.constant 0 : index
    %62 = vector.load %arg1[%c21, %c0_42, %c0_43] : memref<25x2x3264xf32, #tpu.memory_space<vmem>>, vector<1x2x1664xf32>
    %63 = vector.shape_cast %62 : vector<1x2x1664xf32> to vector<2x1664xf32>
    %64 = arith.maximumf %61, %63 : vector<2x1664xf32>
    %c22 = arith.constant 22 : index
    %c0_44 = arith.constant 0 : index
    %c0_45 = arith.constant 0 : index
    %65 = vector.load %arg1[%c22, %c0_44, %c0_45] : memref<25x2x3264xf32, #tpu.memory_space<vmem>>, vector<1x2x1664xf32>
    %66 = vector.shape_cast %65 : vector<1x2x1664xf32> to vector<2x1664xf32>
    %67 = arith.maximumf %64, %66 : vector<2x1664xf32>
    %c23 = arith.constant 23 : index
    %c0_46 = arith.constant 0 : index
    %c0_47 = arith.constant 0 : index
    %68 = vector.load %arg1[%c23, %c0_46, %c0_47] : memref<25x2x3264xf32, #tpu.memory_space<vmem>>, vector<1x2x1664xf32>
    %69 = vector.shape_cast %68 : vector<1x2x1664xf32> to vector<2x1664xf32>
    %70 = arith.maximumf %67, %69 : vector<2x1664xf32>
    %c24 = arith.constant 24 : index
    %c0_48 = arith.constant 0 : index
    %c0_49 = arith.constant 0 : index
    %71 = vector.load %arg1[%c24, %c0_48, %c0_49] : memref<25x2x3264xf32, #tpu.memory_space<vmem>>, vector<1x2x1664xf32>
    %72 = vector.shape_cast %71 : vector<1x2x1664xf32> to vector<2x1664xf32>
    %73 = arith.maximumf %70, %72 : vector<2x1664xf32>
    %74 = arith.truncf %73 : vector<2x1664xf32> to vector<2x1664xbf16>
    %c0_50 = arith.constant 0 : index
    %c0_51 = arith.constant 0 : index
    %75 = vector.load %arg2[%c0_50, %c0_51] : memref<3264x300xbf16, #tpu.memory_space<vmem>>, vector<1664x300xbf16>
    %cst = arith.constant dense<0.000000e+00> : vector<2x300xf32>
    %76 = tpu.matmul %74, %75, %cst {dimension_numbers = #tpu.dot_dimension_numbers<[1], [0], [0], [1], [0, 0, 1, 1], [], []>} : vector<2x1664xbf16>, vector<1664x300xbf16>, vector<2x300xf32> -> vector<2x300xf32>
    %c0_52 = arith.constant 0 : index
    %c0_53 = arith.constant 0 : index
    %c1664 = arith.constant 1664 : index
    %77 = vector.load %arg1[%c0_52, %c0_53, %c1664] : memref<25x2x3264xf32, #tpu.memory_space<vmem>>, vector<1x2x1600xf32>
    %78 = vector.shape_cast %77 : vector<1x2x1600xf32> to vector<2x1600xf32>
    %c1_54 = arith.constant 1 : index
    %c0_55 = arith.constant 0 : index
    %c1664_56 = arith.constant 1664 : index
    %79 = vector.load %arg1[%c1_54, %c0_55, %c1664_56] : memref<25x2x3264xf32, #tpu.memory_space<vmem>>, vector<1x2x1600xf32>
    %80 = vector.shape_cast %79 : vector<1x2x1600xf32> to vector<2x1600xf32>
    %81 = arith.maximumf %78, %80 : vector<2x1600xf32>
    %c2_57 = arith.constant 2 : index
    %c0_58 = arith.constant 0 : index
    %c1664_59 = arith.constant 1664 : index
    %82 = vector.load %arg1[%c2_57, %c0_58, %c1664_59] : memref<25x2x3264xf32, #tpu.memory_space<vmem>>, vector<1x2x1600xf32>
    %83 = vector.shape_cast %82 : vector<1x2x1600xf32> to vector<2x1600xf32>
    %84 = arith.maximumf %81, %83 : vector<2x1600xf32>
    %c3_60 = arith.constant 3 : index
    %c0_61 = arith.constant 0 : index
    %c1664_62 = arith.constant 1664 : index
    %85 = vector.load %arg1[%c3_60, %c0_61, %c1664_62] : memref<25x2x3264xf32, #tpu.memory_space<vmem>>, vector<1x2x1600xf32>
    %86 = vector.shape_cast %85 : vector<1x2x1600xf32> to vector<2x1600xf32>
    %87 = arith.maximumf %84, %86 : vector<2x1600xf32>
    %c4_63 = arith.constant 4 : index
    %c0_64 = arith.constant 0 : index
    %c1664_65 = arith.constant 1664 : index
    %88 = vector.load %arg1[%c4_63, %c0_64, %c1664_65] : memref<25x2x3264xf32, #tpu.memory_space<vmem>>, vector<1x2x1600xf32>
    %89 = vector.shape_cast %88 : vector<1x2x1600xf32> to vector<2x1600xf32>
    %90 = arith.maximumf %87, %89 : vector<2x1600xf32>
    %c5_66 = arith.constant 5 : index
    %c0_67 = arith.constant 0 : index
    %c1664_68 = arith.constant 1664 : index
    %91 = vector.load %arg1[%c5_66, %c0_67, %c1664_68] : memref<25x2x3264xf32, #tpu.memory_space<vmem>>, vector<1x2x1600xf32>
    %92 = vector.shape_cast %91 : vector<1x2x1600xf32> to vector<2x1600xf32>
    %93 = arith.maximumf %90, %92 : vector<2x1600xf32>
    %c6_69 = arith.constant 6 : index
    %c0_70 = arith.constant 0 : index
    %c1664_71 = arith.constant 1664 : index
    %94 = vector.load %arg1[%c6_69, %c0_70, %c1664_71] : memref<25x2x3264xf32, #tpu.memory_space<vmem>>, vector<1x2x1600xf32>
    %95 = vector.shape_cast %94 : vector<1x2x1600xf32> to vector<2x1600xf32>
    %96 = arith.maximumf %93, %95 : vector<2x1600xf32>
    %c7_72 = arith.constant 7 : index
    %c0_73 = arith.constant 0 : index
    %c1664_74 = arith.constant 1664 : index
    %97 = vector.load %arg1[%c7_72, %c0_73, %c1664_74] : memref<25x2x3264xf32, #tpu.memory_space<vmem>>, vector<1x2x1600xf32>
    %98 = vector.shape_cast %97 : vector<1x2x1600xf32> to vector<2x1600xf32>
    %99 = arith.maximumf %96, %98 : vector<2x1600xf32>
    %c8_75 = arith.constant 8 : index
    %c0_76 = arith.constant 0 : index
    %c1664_77 = arith.constant 1664 : index
    %100 = vector.load %arg1[%c8_75, %c0_76, %c1664_77] : memref<25x2x3264xf32, #tpu.memory_space<vmem>>, vector<1x2x1600xf32>
    %101 = vector.shape_cast %100 : vector<1x2x1600xf32> to vector<2x1600xf32>
    %102 = arith.maximumf %99, %101 : vector<2x1600xf32>
    %c9_78 = arith.constant 9 : index
    %c0_79 = arith.constant 0 : index
    %c1664_80 = arith.constant 1664 : index
    %103 = vector.load %arg1[%c9_78, %c0_79, %c1664_80] : memref<25x2x3264xf32, #tpu.memory_space<vmem>>, vector<1x2x1600xf32>
    %104 = vector.shape_cast %103 : vector<1x2x1600xf32> to vector<2x1600xf32>
    %105 = arith.maximumf %102, %104 : vector<2x1600xf32>
    %c10_81 = arith.constant 10 : index
    %c0_82 = arith.constant 0 : index
    %c1664_83 = arith.constant 1664 : index
    %106 = vector.load %arg1[%c10_81, %c0_82, %c1664_83] : memref<25x2x3264xf32, #tpu.memory_space<vmem>>, vector<1x2x1600xf32>
    %107 = vector.shape_cast %106 : vector<1x2x1600xf32> to vector<2x1600xf32>
    %108 = arith.maximumf %105, %107 : vector<2x1600xf32>
    %c11_84 = arith.constant 11 : index
    %c0_85 = arith.constant 0 : index
    %c1664_86 = arith.constant 1664 : index
    %109 = vector.load %arg1[%c11_84, %c0_85, %c1664_86] : memref<25x2x3264xf32, #tpu.memory_space<vmem>>, vector<1x2x1600xf32>
    %110 = vector.shape_cast %109 : vector<1x2x1600xf32> to vector<2x1600xf32>
    %111 = arith.maximumf %108, %110 : vector<2x1600xf32>
    %c12_87 = arith.constant 12 : index
    %c0_88 = arith.constant 0 : index
    %c1664_89 = arith.constant 1664 : index
    %112 = vector.load %arg1[%c12_87, %c0_88, %c1664_89] : memref<25x2x3264xf32, #tpu.memory_space<vmem>>, vector<1x2x1600xf32>
    %113 = vector.shape_cast %112 : vector<1x2x1600xf32> to vector<2x1600xf32>
    %114 = arith.maximumf %111, %113 : vector<2x1600xf32>
    %c13_90 = arith.constant 13 : index
    %c0_91 = arith.constant 0 : index
    %c1664_92 = arith.constant 1664 : index
    %115 = vector.load %arg1[%c13_90, %c0_91, %c1664_92] : memref<25x2x3264xf32, #tpu.memory_space<vmem>>, vector<1x2x1600xf32>
    %116 = vector.shape_cast %115 : vector<1x2x1600xf32> to vector<2x1600xf32>
    %117 = arith.maximumf %114, %116 : vector<2x1600xf32>
    %c14_93 = arith.constant 14 : index
    %c0_94 = arith.constant 0 : index
    %c1664_95 = arith.constant 1664 : index
    %118 = vector.load %arg1[%c14_93, %c0_94, %c1664_95] : memref<25x2x3264xf32, #tpu.memory_space<vmem>>, vector<1x2x1600xf32>
    %119 = vector.shape_cast %118 : vector<1x2x1600xf32> to vector<2x1600xf32>
    %120 = arith.maximumf %117, %119 : vector<2x1600xf32>
    %c15_96 = arith.constant 15 : index
    %c0_97 = arith.constant 0 : index
    %c1664_98 = arith.constant 1664 : index
    %121 = vector.load %arg1[%c15_96, %c0_97, %c1664_98] : memref<25x2x3264xf32, #tpu.memory_space<vmem>>, vector<1x2x1600xf32>
    %122 = vector.shape_cast %121 : vector<1x2x1600xf32> to vector<2x1600xf32>
    %123 = arith.maximumf %120, %122 : vector<2x1600xf32>
    %c16_99 = arith.constant 16 : index
    %c0_100 = arith.constant 0 : index
    %c1664_101 = arith.constant 1664 : index
    %124 = vector.load %arg1[%c16_99, %c0_100, %c1664_101] : memref<25x2x3264xf32, #tpu.memory_space<vmem>>, vector<1x2x1600xf32>
    %125 = vector.shape_cast %124 : vector<1x2x1600xf32> to vector<2x1600xf32>
    %126 = arith.maximumf %123, %125 : vector<2x1600xf32>
    %c17_102 = arith.constant 17 : index
    %c0_103 = arith.constant 0 : index
    %c1664_104 = arith.constant 1664 : index
    %127 = vector.load %arg1[%c17_102, %c0_103, %c1664_104] : memref<25x2x3264xf32, #tpu.memory_space<vmem>>, vector<1x2x1600xf32>
    %128 = vector.shape_cast %127 : vector<1x2x1600xf32> to vector<2x1600xf32>
    %129 = arith.maximumf %126, %128 : vector<2x1600xf32>
    %c18_105 = arith.constant 18 : index
    %c0_106 = arith.constant 0 : index
    %c1664_107 = arith.constant 1664 : index
    %130 = vector.load %arg1[%c18_105, %c0_106, %c1664_107] : memref<25x2x3264xf32, #tpu.memory_space<vmem>>, vector<1x2x1600xf32>
    %131 = vector.shape_cast %130 : vector<1x2x1600xf32> to vector<2x1600xf32>
    %132 = arith.maximumf %129, %131 : vector<2x1600xf32>
    %c19_108 = arith.constant 19 : index
    %c0_109 = arith.constant 0 : index
    %c1664_110 = arith.constant 1664 : index
    %133 = vector.load %arg1[%c19_108, %c0_109, %c1664_110] : memref<25x2x3264xf32, #tpu.memory_space<vmem>>, vector<1x2x1600xf32>
    %134 = vector.shape_cast %133 : vector<1x2x1600xf32> to vector<2x1600xf32>
    %135 = arith.maximumf %132, %134 : vector<2x1600xf32>
    %c20_111 = arith.constant 20 : index
    %c0_112 = arith.constant 0 : index
    %c1664_113 = arith.constant 1664 : index
    %136 = vector.load %arg1[%c20_111, %c0_112, %c1664_113] : memref<25x2x3264xf32, #tpu.memory_space<vmem>>, vector<1x2x1600xf32>
    %137 = vector.shape_cast %136 : vector<1x2x1600xf32> to vector<2x1600xf32>
    %138 = arith.maximumf %135, %137 : vector<2x1600xf32>
    %c21_114 = arith.constant 21 : index
    %c0_115 = arith.constant 0 : index
    %c1664_116 = arith.constant 1664 : index
    %139 = vector.load %arg1[%c21_114, %c0_115, %c1664_116] : memref<25x2x3264xf32, #tpu.memory_space<vmem>>, vector<1x2x1600xf32>
    %140 = vector.shape_cast %139 : vector<1x2x1600xf32> to vector<2x1600xf32>
    %141 = arith.maximumf %138, %140 : vector<2x1600xf32>
    %c22_117 = arith.constant 22 : index
    %c0_118 = arith.constant 0 : index
    %c1664_119 = arith.constant 1664 : index
    %142 = vector.load %arg1[%c22_117, %c0_118, %c1664_119] : memref<25x2x3264xf32, #tpu.memory_space<vmem>>, vector<1x2x1600xf32>
    %143 = vector.shape_cast %142 : vector<1x2x1600xf32> to vector<2x1600xf32>
    %144 = arith.maximumf %141, %143 : vector<2x1600xf32>
    %c23_120 = arith.constant 23 : index
    %c0_121 = arith.constant 0 : index
    %c1664_122 = arith.constant 1664 : index
    %145 = vector.load %arg1[%c23_120, %c0_121, %c1664_122] : memref<25x2x3264xf32, #tpu.memory_space<vmem>>, vector<1x2x1600xf32>
    %146 = vector.shape_cast %145 : vector<1x2x1600xf32> to vector<2x1600xf32>
    %147 = arith.maximumf %144, %146 : vector<2x1600xf32>
    %c24_123 = arith.constant 24 : index
    %c0_124 = arith.constant 0 : index
    %c1664_125 = arith.constant 1664 : index
    %148 = vector.load %arg1[%c24_123, %c0_124, %c1664_125] : memref<25x2x3264xf32, #tpu.memory_space<vmem>>, vector<1x2x1600xf32>
    %149 = vector.shape_cast %148 : vector<1x2x1600xf32> to vector<2x1600xf32>
    %150 = arith.maximumf %147, %149 : vector<2x1600xf32>
    %151 = arith.truncf %150 : vector<2x1600xf32> to vector<2x1600xbf16>
    %c1664_126 = arith.constant 1664 : index
    %c0_127 = arith.constant 0 : index
    %152 = vector.load %arg2[%c1664_126, %c0_127] : memref<3264x300xbf16, #tpu.memory_space<vmem>>, vector<1600x300xbf16>
    %cst_128 = arith.constant dense<0.000000e+00> : vector<2x300xf32>
    %153 = tpu.matmul %151, %152, %cst_128 {dimension_numbers = #tpu.dot_dimension_numbers<[1], [0], [0], [1], [0, 0, 1, 1], [], []>} : vector<2x1600xbf16>, vector<1600x300xbf16>, vector<2x300xf32> -> vector<2x300xf32>
    %154 = arith.addf %76, %153 : vector<2x300xf32>
    %c0_129 = arith.constant 0 : index
    %c0_130 = arith.constant 0 : index
    %155 = vector.load %arg3[%c0_129, %c0_130] : memref<1x300xf32, #tpu.memory_space<vmem>>, vector<1x300xf32>
    %156 = vector.broadcast %155 : vector<1x300xf32> to vector<2x300xf32>
    %157 = arith.addf %154, %156 : vector<2x300xf32>
    %cst_131 = arith.constant 0.000000e+00 : f32
    %158 = vector.broadcast %cst_131 : f32 to vector<2x300xf32>
    %159 = arith.maximumf %157, %158 : vector<2x300xf32>
    %c0_132 = arith.constant 0 : index
    %c0_133 = arith.constant 0 : index
    %160 = vector.load %arg4[%c0_132, %c0_133] : memref<300x30xf32, #tpu.memory_space<vmem>>, vector<300x30xf32>
    %cst_134 = arith.constant dense<0.000000e+00> : vector<2x30xf32>
    %161 = tpu.matmul %159, %160, %cst_134 {dimension_numbers = #tpu.dot_dimension_numbers<[1], [0], [0], [1], [0, 0, 1, 1], [], []>} : vector<2x300xf32>, vector<300x30xf32>, vector<2x30xf32> -> vector<2x30xf32>
    %c0_135 = arith.constant 0 : index
    %c0_136 = arith.constant 0 : index
    %162 = vector.load %arg5[%c0_135, %c0_136] : memref<1x30xf32, #tpu.memory_space<vmem>>, vector<1x30xf32>
    %163 = vector.broadcast %162 : vector<1x30xf32> to vector<2x30xf32>
    %164 = arith.addf %161, %163 : vector<2x30xf32>
    %cst_137 = arith.constant 0.000000e+00 : f32
    %165 = vector.broadcast %cst_137 : f32 to vector<2x30xf32>
    %166 = arith.maximumf %164, %165 : vector<2x30xf32>
    %c0_138 = arith.constant 0 : index
    %c0_139 = arith.constant 0 : index
    %167 = vector.load %arg6[%c0_138, %c0_139] : memref<30x10xf32, #tpu.memory_space<vmem>>, vector<30x10xf32>
    %cst_140 = arith.constant dense<0.000000e+00> : vector<2x10xf32>
    %168 = tpu.matmul %166, %167, %cst_140 {dimension_numbers = #tpu.dot_dimension_numbers<[1], [0], [0], [1], [0, 0, 1, 1], [], []>} : vector<2x30xf32>, vector<30x10xf32>, vector<2x10xf32> -> vector<2x10xf32>
    %c0_141 = arith.constant 0 : index
    %c0_142 = arith.constant 0 : index
    %169 = vector.load %arg7[%c0_141, %c0_142] : memref<1x10xf32, #tpu.memory_space<vmem>>, vector<1x10xf32>
    %170 = vector.broadcast %169 : vector<1x10xf32> to vector<2x10xf32>
    %171 = arith.addf %168, %170 : vector<2x10xf32>
    %cst_143 = arith.constant 0.000000e+00 : f32
    %172 = vector.broadcast %cst_143 : f32 to vector<2x10xf32>
    %173 = arith.maximumf %171, %172 : vector<2x10xf32>
    %c0_144 = arith.constant 0 : index
    %c0_145 = arith.constant 0 : index
    %174 = vector.load %arg8[%c0_144, %c0_145] : memref<10x3xf32, #tpu.memory_space<vmem>>, vector<10x3xf32>
    %cst_146 = arith.constant dense<0.000000e+00> : vector<2x3xf32>
    %175 = tpu.matmul %173, %174, %cst_146 {dimension_numbers = #tpu.dot_dimension_numbers<[1], [0], [0], [1], [0, 0, 1, 1], [], []>} : vector<2x10xf32>, vector<10x3xf32>, vector<2x3xf32> -> vector<2x3xf32>
    %c0_147 = arith.constant 0 : index
    %c0_148 = arith.constant 0 : index
    %176 = vector.load %arg9[%c0_147, %c0_148] : memref<1x3xf32, #tpu.memory_space<vmem>>, vector<1x3xf32>
    %177 = vector.broadcast %176 : vector<1x3xf32> to vector<2x3xf32>
    %178 = arith.addf %175, %177 : vector<2x3xf32>
    %c0_149 = arith.constant 0 : index
    %c0_150 = arith.constant 0 : index
    %179 = vector.load %arg10[%c0_149, %c0_150] : memref<2x3xf32, #tpu.memory_space<vmem>>, vector<2x3xf32>
    tpu.vector_store %arg10[%c0_149, %c0_150], %178 {strides = array<i32>} : memref<2x3xf32, #tpu.memory_space<vmem>>, vector<2x3xf32>,
    return
  }
  func.func @transform_0(%arg0: i32) -> (i32, i32, i32) {
    %c0_i32 = arith.constant 0 : i32
    %c0_i32_0 = arith.constant 0 : i32
    %c0_i32_1 = arith.constant 0 : i32
    %c0_i32_2 = arith.constant 0 : i32
    return %c0_i32, %c0_i32_0, %c0_i32_1 : i32, i32, i32
  }
  func.func @transform_1(%arg0: i32) -> (i32, i32) {
    %c0_i32 = arith.constant 0 : i32
    %c0_i32_0 = arith.constant 0 : i32
    %c0_i32_1 = arith.constant 0 : i32
    return %c0_i32, %c0_i32_0 : i32, i32
  }
  func.func @transform_2(%arg0: i32) -> (i32, i32) {
    %c0_i32 = arith.constant 0 : i32
    %c0_i32_0 = arith.constant 0 : i32
    %c0_i32_1 = arith.constant 0 : i32
    return %c0_i32, %c0_i32_0 : i32, i32
  }
  func.func @transform_3(%arg0: i32) -> (i32, i32) {
    %c0_i32 = arith.constant 0 : i32
    %c0_i32_0 = arith.constant 0 : i32
    %c0_i32_1 = arith.constant 0 : i32
    return %c0_i32, %c0_i32_0 : i32, i32
  }
  func.func @transform_4(%arg0: i32) -> (i32, i32) {
    %c0_i32 = arith.constant 0 : i32
    %c0_i32_0 = arith.constant 0 : i32
    %c0_i32_1 = arith.constant 0 : i32
    return %c0_i32, %c0_i32_0 : i32, i32
  }
  func.func @transform_5(%arg0: i32) -> (i32, i32) {
    %c0_i32 = arith.constant 0 : i32
    %c0_i32_0 = arith.constant 0 : i32
    %c0_i32_1 = arith.constant 0 : i32
    return %c0_i32, %c0_i32_0 : i32, i32
  }
  func.func @transform_6(%arg0: i32) -> (i32, i32) {
    %c0_i32 = arith.constant 0 : i32
    %c0_i32_0 = arith.constant 0 : i32
    %c0_i32_1 = arith.constant 0 : i32
    return %c0_i32, %c0_i32_0 : i32, i32
  }
  func.func @transform_7(%arg0: i32) -> (i32, i32) {
    %c0_i32 = arith.constant 0 : i32
    %c0_i32_0 = arith.constant 0 : i32
    %c0_i32_1 = arith.constant 0 : i32
    return %c0_i32, %c0_i32_0 : i32, i32
  }
  func.func @transform_8(%arg0: i32) -> (i32, i32) {
    %c0_i32 = arith.constant 0 : i32
    %c0_i32_0 = arith.constant 0 : i32
    %c0_i32_1 = arith.constant 0 : i32
    return %c0_i32, %c0_i32_0 : i32, i32
  }
  func.func @transform_9(%arg0: i32) -> (i32, i32) {
    %c0_i32 = arith.constant 0 : i32
    %c0_i32_0 = arith.constant 0 : i32
    %c0_i32_1 = arith.constant 0 : i32
    return %c0_i32, %c0_i32_0 : i32, i32
  }
}

</mosaic_0001>

<llo_original>
// kernel: tpu_custom_call.1
$region0: #{tpu_custom_call.1}
  #allocation0 [shape = 'u32[]', space=smem, size = 0x4, offset = 0x4, fixed_abs, tag = 'smem constant byte address 0x4 - core index']
  #allocation1 [shape = 'u32[72,128]{1,0:T(1,128)}', space=vmem, size = 0x9000, scoped, tag = 'internal scratch']
  %s0 = inlined_call_operand.vmem [shape: f32[25,2,3264], index: 0, kind: input, shape index: {}]
  %s1 = inlined_call_operand.vmem [shape: bf16[3264,300], index: 1, kind: input, shape index: {}]
  %s2 = inlined_call_operand.vmem [shape: f32[1,300], index: 2, kind: input, shape index: {}]
  %s3 = inlined_call_operand.vmem [shape: f32[300,30], index: 3, kind: input, shape index: {}]
  %s4 = inlined_call_operand.vmem [shape: f32[1,30], index: 4, kind: input, shape index: {}]
  %s5 = inlined_call_operand.vmem [shape: f32[30,10], index: 5, kind: input, shape index: {}]
  %s6 = inlined_call_operand.vmem [shape: f32[1,10], index: 6, kind: input, shape index: {}]
  %s7 = inlined_call_operand.vmem [shape: f32[10,3], index: 7, kind: input, shape index: {}]
  %s8 = inlined_call_operand.vmem [shape: f32[1,3], index: 8, kind: input, shape index: {}]
  %s9 = inlined_call_operand.hbm [shape: f32[2,3], index: 9, kind: output, shape index: {}]
  %s10 = sld [smem:[#allocation0]]
  $region46: #{tpu_custom_call.1} parent=0
    _
  %s12 = ssub.s32 1, %s10
  %s13 = scalar_select 0, %s12, %s10
  $region1: #{tpu_custom_call.1} parent=0
    #allocation2 [shape = 'u8[1024]{0}', space=vmem, size = 0x400, scoped, tag = 'output window, operand 0, single buffered']
    #allocation3 [shape = 's32[1]{0}', space=sflag, size = 0x4, scoped, tag = 'scoped memory for tpu_custom_call.1']
    %14 = vsyncpa [#allocation3], 0
    // Predicated region
    $region2: #{tpu_custom_call.1} parent=1 // pred_check
      _
    $region3: #{tpu_custom_call.1} parent=1 // pred_check_branch
      %16 = sbr.rel (0) target = $region5
    $region4: #{tpu_custom_call.1} parent=1 // pred_region
      _
    $region5: #{tpu_custom_call.1} parent=1 // pred_fallthru
      _
    // Predicated region
    $region6: #{tpu_custom_call.1} parent=1 // pred_check
      _
    $region7: #{tpu_custom_call.1} parent=1 // pred_check_branch
      %18 = sbr.rel (0) target = $region9
    $region8: #{tpu_custom_call.1} parent=1 // pred_region
      _
    $region9: #{tpu_custom_call.1} parent=1 // pred_fallthru
      _
    // Predicated region
    $region10: #{tpu_custom_call.1} parent=1 // pred_check
      _
    $region11: #{tpu_custom_call.1} parent=1 // pred_check_branch
      %20 = sbr.rel (0) target = $region13
    $region12: #{tpu_custom_call.1} parent=1 // pred_region
      _
    $region13: #{tpu_custom_call.1} parent=1 // pred_fallthru
      _
    // Predicated region
    $region14: #{tpu_custom_call.1} parent=1 // pred_check
      _
    $region15: #{tpu_custom_call.1} parent=1 // pred_check_branch
      %22 = sbr.rel (0) target = $region17
    $region16: #{tpu_custom_call.1} parent=1 // pred_region
      _
    $region17: #{tpu_custom_call.1} parent=1 // pred_fallthru
      _
    // Predicated region
    $region18: #{tpu_custom_call.1} parent=1 // pred_check
      _
    $region19: #{tpu_custom_call.1} parent=1 // pred_check_branch
      %24 = sbr.rel (0) target = $region21
    $region20: #{tpu_custom_call.1} parent=1 // pred_region
      _
    $region21: #{tpu_custom_call.1} parent=1 // pred_fallthru
      _
    // Predicated region
    $region22: #{tpu_custom_call.1} parent=1 // pred_check
      _
    $region23: #{tpu_custom_call.1} parent=1 // pred_check_branch
      %26 = sbr.rel (0) target = $region25
    $region24: #{tpu_custom_call.1} parent=1 // pred_region
      _
    $region25: #{tpu_custom_call.1} parent=1 // pred_fallthru
      _
    // Predicated region
    $region26: #{tpu_custom_call.1} parent=1 // pred_check
      _
    $region27: #{tpu_custom_call.1} parent=1 // pred_check_branch
      %28 = sbr.rel (0) target = $region29
    $region28: #{tpu_custom_call.1} parent=1 // pred_region
      _
    $region29: #{tpu_custom_call.1} parent=1 // pred_fallthru
      _
    // Predicated region
    $region30: #{tpu_custom_call.1} parent=1 // pred_check
      _
    $region31: #{tpu_custom_call.1} parent=1 // pred_check_branch
      %30 = sbr.rel (0) target = $region33
    $region32: #{tpu_custom_call.1} parent=1 // pred_region
      _
    $region33: #{tpu_custom_call.1} parent=1 // pred_fallthru
      _
    // Predicated region
    $region34: #{tpu_custom_call.1} parent=1 // pred_check
      _
    $region35: #{tpu_custom_call.1} parent=1 // pred_check_branch
      %32 = sbr.rel (0) target = $region37
    $region36: #{tpu_custom_call.1} parent=1 // pred_region
      _
    $region37: #{tpu_custom_call.1} parent=1 // pred_fallthru
      _
    %v34 = vld [vmem:[%s0] sm:$0xff]
    %v35 = vld [vmem:[%s0 + $0x8] sm:$0xff]
    %v36 = vld [vmem:[%s0 + $0x10] sm:$0xff]
    %v37 = vld [vmem:[%s0 + $0x18] sm:$0x3]
    %s38 = scalar_lea.vmem %s0, 52
    %v39 = vld [vmem:[%s38] sm:$0xff]
    %v40 = vld [vmem:[%s38 + $0x8] sm:$0xff]
    %v41 = vld [vmem:[%s38 + $0x10] sm:$0xff]
    %v42 = vld [vmem:[%s38 + $0x18] sm:$0x3]
    %v43 = vmax.f32 %v34, %v39
    %v44 = vmax.f32 %v35, %v40
    %v45 = vmax.f32 %v36, %v41
    %v46 = vmax.f32 %v37, %v42
    %s47 = scalar_lea.vmem %s0, 104
    %v48 = vld [vmem:[%s47] sm:$0xff]
    %v49 = vld [vmem:[%s47 + $0x8] sm:$0xff]
    %v50 = vld [vmem:[%s47 + $0x10] sm:$0xff]
    %v51 = vld [vmem:[%s47 + $0x18] sm:$0x3]
    %v52 = vmax.f32 %v43, %v48
    %v53 = vmax.f32 %v44, %v49
    %v54 = vmax.f32 %v45, %v50
    %v55 = vmax.f32 %v46, %v51
    %s56 = scalar_lea.vmem %s0, 156
    %v57 = vld [vmem:[%s56] sm:$0xff]
    %v58 = vld [vmem:[%s56 + $0x8] sm:$0xff]
    %v59 = vld [vmem:[%s56 + $0x10] sm:$0xff]
    %v60 = vld [vmem:[%s56 + $0x18] sm:$0x3]
    %v61 = vmax.f32 %v52, %v57
    %v62 = vmax.f32 %v53, %v58
    %v63 = vmax.f32 %v54, %v59
    %v64 = vmax.f32 %v55, %v60
    %s65 = scalar_lea.vmem %s0, 208
    %v66 = vld [vmem:[%s65] sm:$0xff]
    %v67 = vld [vmem:[%s65 + $0x8] sm:$0xff]
    %v68 = vld [vmem:[%s65 + $0x10] sm:$0xff]
    %v69 = vld [vmem:[%s65 + $0x18] sm:$0x3]
    %v70 = vmax.f32 %v61, %v66
    %v71 = vmax.f32 %v62, %v67
    %v72 = vmax.f32 %v63, %v68
    %v73 = vmax.f32 %v64, %v69
    %s74 = scalar_lea.vmem %s0, 260
    %v75 = vld [vmem:[%s74] sm:$0xff]
    %v76 = vld [vmem:[%s74 + $0x8] sm:$0xff]
    %v77 = vld [vmem:[%s74 + $0x10] sm:$0xff]
    %v78 = vld [vmem:[%s74 + $0x18] sm:$0x3]
    %v79 = vmax.f32 %v70, %v75
    %v80 = vmax.f32 %v71, %v76
    %v81 = vmax.f32 %v72, %v77
    %v82 = vmax.f32 %v73, %v78
    %s83 = scalar_lea.vmem %s0, 312
    %v84 = vld [vmem:[%s83] sm:$0xff]
    %v85 = vld [vmem:[%s83 + $0x8] sm:$0xff]
    %v86 = vld [vmem:[%s83 + $0x10] sm:$0xff]
    %v87 = vld [vmem:[%s83 + $0x18] sm:$0x3]
    %v88 = vmax.f32 %v79, %v84
    %v89 = vmax.f32 %v80, %v85
    %v90 = vmax.f32 %v81, %v86
    %v91 = vmax.f32 %v82, %v87
    %s92 = scalar_lea.vmem %s0, 364
    %v93 = vld [vmem:[%s92] sm:$0xff]
    %v94 = vld [vmem:[%s92 + $0x8] sm:$0xff]
    %v95 = vld [vmem:[%s92 + $0x10] sm:$0xff]
    %v96 = vld [vmem:[%s92 + $0x18] sm:$0x3]
    %v97 = vmax.f32 %v88, %v93
    %v98 = vmax.f32 %v89, %v94
    %v99 = vmax.f32 %v90, %v95
    %v100 = vmax.f32 %v91, %v96
    %s101 = scalar_lea.vmem %s0, 416
    %v102 = vld [vmem:[%s101] sm:$0xff]
    %v103 = vld [vmem:[%s101 + $0x8] sm:$0xff]
    %v104 = vld [vmem:[%s101 + $0x10] sm:$0xff]
    %v105 = vld [vmem:[%s101 + $0x18] sm:$0x3]
    %v106 = vmax.f32 %v97, %v102
    %v107 = vmax.f32 %v98, %v103
    %v108 = vmax.f32 %v99, %v104
    %v109 = vmax.f32 %v100, %v105
    %s110 = scalar_lea.vmem %s0, 468
    %v111 = vld [vmem:[%s110] sm:$0xff]
    %v112 = vld [vmem:[%s110 + $0x8] sm:$0xff]
    %v113 = vld [vmem:[%s110 + $0x10] sm:$0xff]
    %v114 = vld [vmem:[%s110 + $0x18] sm:$0x3]
    %v115 = vmax.f32 %v106, %v111
    %v116 = vmax.f32 %v107, %v112
    %v117 = vmax.f32 %v108, %v113
    %v118 = vmax.f32 %v109, %v114
    %s119 = scalar_lea.vmem %s0, 520
    %v120 = vld [vmem:[%s119] sm:$0xff]
    %v121 = vld [vmem:[%s119 + $0x8] sm:$0xff]
    %v122 = vld [vmem:[%s119 + $0x10] sm:$0xff]
    %v123 = vld [vmem:[%s119 + $0x18] sm:$0x3]
    %v124 = vmax.f32 %v115, %v120
    %v125 = vmax.f32 %v116, %v121
    %v126 = vmax.f32 %v117, %v122
    %v127 = vmax.f32 %v118, %v123
    %s128 = scalar_lea.vmem %s0, 572
    %v129 = vld [vmem:[%s128] sm:$0xff]
    %v130 = vld [vmem:[%s128 + $0x8] sm:$0xff]
    %v131 = vld [vmem:[%s128 + $0x10] sm:$0xff]
    %v132 = vld [vmem:[%s128 + $0x18] sm:$0x3]
    %v133 = vmax.f32 %v124, %v129
    %v134 = vmax.f32 %v125, %v130
    %v135 = vmax.f32 %v126, %v131
    %v136 = vmax.f32 %v127, %v132
    %s137 = scalar_lea.vmem %s0, 624
    %v138 = vld [vmem:[%s137] sm:$0xff]
    %v139 = vld [vmem:[%s137 + $0x8] sm:$0xff]
    %v140 = vld [vmem:[%s137 + $0x10] sm:$0xff]
    %v141 = vld [vmem:[%s137 + $0x18] sm:$0x3]
    %v142 = vmax.f32 %v133, %v138
    %v143 = vmax.f32 %v134, %v139
    %v144 = vmax.f32 %v135, %v140
    %v145 = vmax.f32 %v136, %v141
    %s146 = scalar_lea.vmem %s0, 676
    %v147 = vld [vmem:[%s146] sm:$0xff]
    %v148 = vld [vmem:[%s146 + $0x8] sm:$0xff]
    %v149 = vld [vmem:[%s146 + $0x10] sm:$0xff]
    %v150 = vld [vmem:[%s146 + $0x18] sm:$0x3]
    %v151 = vmax.f32 %v142, %v147
    %v152 = vmax.f32 %v143, %v148
    %v153 = vmax.f32 %v144, %v149
    %v154 = vmax.f32 %v145, %v150
    %s155 = scalar_lea.vmem %s0, 728
    %v156 = vld [vmem:[%s155] sm:$0xff]
    %v157 = vld [vmem:[%s155 + $0x8] sm:$0xff]
    %v158 = vld [vmem:[%s155 + $0x10] sm:$0xff]
    %v159 = vld [vmem:[%s155 + $0x18] sm:$0x3]
    %v160 = vmax.f32 %v151, %v156
    %v161 = vmax.f32 %v152, %v157
    %v162 = vmax.f32 %v153, %v158
    %v163 = vmax.f32 %v154, %v159
    %s164 = scalar_lea.vmem %s0, 780
    %v165 = vld [vmem:[%s164] sm:$0xff]
    %v166 = vld [vmem:[%s164 + $0x8] sm:$0xff]
    %v167 = vld [vmem:[%s164 + $0x10] sm:$0xff]
    %v168 = vld [vmem:[%s164 + $0x18] sm:$0x3]
    %v169 = vmax.f32 %v160, %v165
    %v170 = vmax.f32 %v161, %v166
    %v171 = vmax.f32 %v162, %v167
    %v172 = vmax.f32 %v163, %v168
    %s173 = scalar_lea.vmem %s0, 832
    %v174 = vld [vmem:[%s173] sm:$0xff]
    %v175 = vld [vmem:[%s173 + $0x8] sm:$0xff]
    %v176 = vld [vmem:[%s173 + $0x10] sm:$0xff]
    %v177 = vld [vmem:[%s173 + $0x18] sm:$0x3]
    %v178 = vmax.f32 %v169, %v174
    %v179 = vmax.f32 %v170, %v175
    %v180 = vmax.f32 %v171, %v176
    %v181 = vmax.f32 %v172, %v177
    %s182 = scalar_lea.vmem %s0, 884
    %v183 = vld [vmem:[%s182] sm:$0xff]
    %v184 = vld [vmem:[%s182 + $0x8] sm:$0xff]
    %v185 = vld [vmem:[%s182 + $0x10] sm:$0xff]
    %v186 = vld [vmem:[%s182 + $0x18] sm:$0x3]
    %v187 = vmax.f32 %v178, %v183
    %v188 = vmax.f32 %v179, %v184
    %v189 = vmax.f32 %v180, %v185
    %v190 = vmax.f32 %v181, %v186
    %s191 = scalar_lea.vmem %s0, 936
    %v192 = vld [vmem:[%s191] sm:$0xff]
    %v193 = vld [vmem:[%s191 + $0x8] sm:$0xff]
    %v194 = vld [vmem:[%s191 + $0x10] sm:$0xff]
    %v195 = vld [vmem:[%s191 + $0x18] sm:$0x3]
    %v196 = vmax.f32 %v187, %v192
    %v197 = vmax.f32 %v188, %v193
    %v198 = vmax.f32 %v189, %v194
    %v199 = vmax.f32 %v190, %v195
    %s200 = scalar_lea.vmem %s0, 988
    %v201 = vld [vmem:[%s200] sm:$0xff]
    %v202 = vld [vmem:[%s200 + $0x8] sm:$0xff]
    %v203 = vld [vmem:[%s200 + $0x10] sm:$0xff]
    %v204 = vld [vmem:[%s200 + $0x18] sm:$0x3]
    %v205 = vmax.f32 %v196, %v201
    %v206 = vmax.f32 %v197, %v202
    %v207 = vmax.f32 %v198, %v203
    %v208 = vmax.f32 %v199, %v204
    %s209 = scalar_lea.vmem %s0, 1040
    %v210 = vld [vmem:[%s209] sm:$0xff]
    %v211 = vld [vmem:[%s209 + $0x8] sm:$0xff]
    %v212 = vld [vmem:[%s209 + $0x10] sm:$0xff]
    %v213 = vld [vmem:[%s209 + $0x18] sm:$0x3]
    %v214 = vmax.f32 %v205, %v210
    %v215 = vmax.f32 %v206, %v211
    %v216 = vmax.f32 %v207, %v212
    %v217 = vmax.f32 %v208, %v213
    %s218 = scalar_lea.vmem %s0, 1092
    %v219 = vld [vmem:[%s218] sm:$0xff]
    %v220 = vld [vmem:[%s218 + $0x8] sm:$0xff]
    %v221 = vld [vmem:[%s218 + $0x10] sm:$0xff]
    %v222 = vld [vmem:[%s218 + $0x18] sm:$0x3]
    %v223 = vmax.f32 %v214, %v219
    %v224 = vmax.f32 %v215, %v220
    %v225 = vmax.f32 %v216, %v221
    %v226 = vmax.f32 %v217, %v222
    %s227 = scalar_lea.vmem %s0, 1144
    %v228 = vld [vmem:[%s227] sm:$0xff]
    %v229 = vld [vmem:[%s227 + $0x8] sm:$0xff]
    %v230 = vld [vmem:[%s227 + $0x10] sm:$0xff]
    %v231 = vld [vmem:[%s227 + $0x18] sm:$0x3]
    %v232 = vmax.f32 %v223, %v228
    %v233 = vmax.f32 %v224, %v229
    %v234 = vmax.f32 %v225, %v230
    %v235 = vmax.f32 %v226, %v231
    %s236 = scalar_lea.vmem %s0, 1196
    %v237 = vld [vmem:[%s236] sm:$0xff]
    %v238 = vld [vmem:[%s236 + $0x8] sm:$0xff]
    %v239 = vld [vmem:[%s236 + $0x10] sm:$0xff]
    %v240 = vld [vmem:[%s236 + $0x18] sm:$0x3]
    %v241 = vmax.f32 %v232, %v237
    %v242 = vmax.f32 %v233, %v238
    %v243 = vmax.f32 %v234, %v239
    %v244 = vmax.f32 %v235, %v240
    %s245 = scalar_lea.vmem %s0, 1248
    %v246 = vld [vmem:[%s245] sm:$0xff]
    %v247 = vld [vmem:[%s245 + $0x8] sm:$0xff]
    %v248 = vld [vmem:[%s245 + $0x10] sm:$0xff]
    %v249 = vld [vmem:[%s245 + $0x18] sm:$0x3]
    %v250 = vmax.f32 %v241, %v246
    %v251 = vmax.f32 %v242, %v247
    %v252 = vmax.f32 %v243, %v248
    %v253 = vmax.f32 %v244, %v249
    %258 = vst [vmem:[#allocation1] ss:$4 sm:$0xff] %v250
    %s259 = scalar_lea.vmem [#allocation1], 32
    %260 = vst [vmem:[%s259] ss:$4 sm:$0xff] %v251
    %v261 = vld.sshfl [vmem:[#allocation1] sm:$0xff pattern:$0x73625140]
    %v262 = vld.sshfl [vmem:[#allocation1 + $0x8] sm:$0xff pattern:$0x73625140]
    %v263 = vld.sshfl [vmem:[#allocation1 + $0x10] sm:$0xff pattern:$0x73625140]
    %v264 = vld.sshfl [vmem:[#allocation1 + $0x18] sm:$0xff pattern:$0x73625140]
    %v265 = vld.sshfl [vmem:[#allocation1 + $0x20] sm:$0xff pattern:$0x73625140]
    %v266 = vld.sshfl [vmem:[#allocation1 + $0x28] sm:$0xff pattern:$0x73625140]
    %v267 = vld.sshfl [vmem:[#allocation1 + $0x30] sm:$0xff pattern:$0x73625140]
    %v268 = vld.sshfl [vmem:[#allocation1 + $0x38] sm:$0xff pattern:$0x73625140]
    %269 = vst [vmem:[#allocation1] ss:$4 sm:$0xff] %v252
    %270 = vst [vmem:[%s259] ss:$4 sm:$0xff] %v253
    %v271 = vld.sshfl [vmem:[#allocation1] sm:$0xff pattern:$0x73625140]
    %v272 = vld.sshfl [vmem:[#allocation1 + $0x8] sm:$0xff pattern:$0x73625140]
    %v273 = vld.sshfl [vmem:[#allocation1 + $0x10] sm:$0xff pattern:$0x73625140]
    %v274 = vld.sshfl [vmem:[#allocation1 + $0x18] sm:$0xff pattern:$0x73625140]
    %v275 = vld.sshfl [vmem:[#allocation1 + $0x20] sm:$0xff pattern:$0x73625140]
    %v289 = vpack.c.bf16 %v261, %v261
    %v290 = vpack.c.bf16 %v262, %v262
    %v291 = vpack.c.bf16 %v263, %v263
    %v292 = vpack.c.bf16 %v264, %v264
    %v293 = vpack.c.bf16 %v265, %v265
    %v294 = vpack.c.bf16 %v266, %v266
    %v295 = vpack.c.bf16 %v267, %v267
    %v296 = vpack.c.bf16 %v268, %v268
    %v297 = vpack.c.bf16 %v271, %v271
    %v298 = vpack.c.bf16 %v272, %v272
    %v299 = vpack.c.bf16 %v273, %v273
    %v300 = vpack.c.bf16 %v274, %v274
    %v301 = vpack.c.bf16 %v275, %v275
    %v302 = vld [vmem:[%s1] sm:$0xff]
    %v303 = vld [vmem:[%s1 + $0x8] sm:$0xf]
    %v304 = vld [vmem:[%s1 + $0xc] sm:$0xff]
    %v305 = vld [vmem:[%s1 + $0x14] sm:$0xf]
    %v306 = vld [vmem:[%s1 + $0x18] sm:$0xff]
    %v307 = vld [vmem:[%s1 + $0x20] sm:$0xf]
    %v308 = vld [vmem:[%s1 + $0x24] sm:$0xff]
    %v309 = vld [vmem:[%s1 + $0x2c] sm:$0xf]
    %v310 = vld [vmem:[%s1 + $0x30] sm:$0xff]
    %v311 = vld [vmem:[%s1 + $0x38] sm:$0xf]
    %v312 = vld [vmem:[%s1 + $0x3c] sm:$0xff]
    %v313 = vld [vmem:[%s1 + $0x44] sm:$0xf]
    %v314 = vld [vmem:[%s1 + $0x48] sm:$0xff]
    %v315 = vld [vmem:[%s1 + $0x50] sm:$0xf]
    %v316 = vld [vmem:[%s1 + $0x54] sm:$0xff]
    %v317 = vld [vmem:[%s1 + $0x5c] sm:$0xf]
    %v318 = vld [vmem:[%s1 + $0x60] sm:$0xff]
    %v319 = vld [vmem:[%s1 + $0x68] sm:$0xf]
    %v320 = vld [vmem:[%s1 + $0x6c] sm:$0xff]
    %v321 = vld [vmem:[%s1 + $0x74] sm:$0xf]
    %v322 = vld [vmem:[%s1 + $0x78] sm:$0xff]
    %v323 = vld [vmem:[%s1 + $0x80] sm:$0xf]
    %v324 = vld [vmem:[%s1 + $0x84] sm:$0xff]
    %v325 = vld [vmem:[%s1 + $0x8c] sm:$0xf]
    %v326 = vld [vmem:[%s1 + $0x90] sm:$0xff]
    %v327 = vld [vmem:[%s1 + $0x98] sm:$0xf]
    %v328 = vld [vmem:[%s1 + $0x9c] sm:$0xff]
    %v329 = vld [vmem:[%s1 + $0xa4] sm:$0xf]
    %v330 = vld [vmem:[%s1 + $0xa8] sm:$0xff]
    %v331 = vld [vmem:[%s1 + $0xb0] sm:$0xf]
    %v332 = vld [vmem:[%s1 + $0xb4] sm:$0xff]
    %v333 = vld [vmem:[%s1 + $0xbc] sm:$0xf]
    %v334 = vld [vmem:[%s1 + $0xc0] sm:$0xff]
    %v335 = vld [vmem:[%s1 + $0xc8] sm:$0xf]
    %v336 = vld [vmem:[%s1 + $0xcc] sm:$0xff]
    %v337 = vld [vmem:[%s1 + $0xd4] sm:$0xf]
    %v338 = vld [vmem:[%s1 + $0xd8] sm:$0xff]
    %v339 = vld [vmem:[%s1 + $0xe0] sm:$0xf]
    %v340 = vld [vmem:[%s1 + $0xe4] sm:$0xff]
    %v341 = vld [vmem:[%s1 + $0xec] sm:$0xf]
    %v342 = vld [vmem:[%s1 + $0xf0] sm:$0xff]
    %v343 = vld [vmem:[%s1 + $0xf8] sm:$0xf]
    %v344 = vld [vmem:[%s1 + $0xfc] sm:$0xff]
    %v345 = vld [vmem:[%s1 + $0x104] sm:$0xf]
    %v346 = vld [vmem:[%s1 + $0x108] sm:$0xff]
    %v347 = vld [vmem:[%s1 + $0x110] sm:$0xf]
    %v348 = vld [vmem:[%s1 + $0x114] sm:$0xff]
    %v349 = vld [vmem:[%s1 + $0x11c] sm:$0xf]
    %v350 = vld [vmem:[%s1 + $0x120] sm:$0xff]
    %v351 = vld [vmem:[%s1 + $0x128] sm:$0xf]
    %v352 = vld [vmem:[%s1 + $0x12c] sm:$0xff]
    %v353 = vld [vmem:[%s1 + $0x134] sm:$0xf]
    %v354 = vld [vmem:[%s1 + $0x138] sm:$0xff]
    %v355 = vld [vmem:[%s1 + $0x140] sm:$0xf]
    %v356 = vld [vmem:[%s1 + $0x144] sm:$0xff]
    %v357 = vld [vmem:[%s1 + $0x14c] sm:$0xf]
    %v358 = vld [vmem:[%s1 + $0x150] sm:$0xff]
    %v359 = vld [vmem:[%s1 + $0x158] sm:$0xf]
    %v360 = vld [vmem:[%s1 + $0x15c] sm:$0xff]
    %v361 = vld [vmem:[%s1 + $0x164] sm:$0xf]
    %v362 = vld [vmem:[%s1 + $0x168] sm:$0xff]
    %v363 = vld [vmem:[%s1 + $0x170] sm:$0xf]
    %v364 = vld [vmem:[%s1 + $0x174] sm:$0xff]
    %v365 = vld [vmem:[%s1 + $0x17c] sm:$0xf]
    %v366 = vld [vmem:[%s1 + $0x180] sm:$0xff]
    %v367 = vld [vmem:[%s1 + $0x188] sm:$0xf]
    %v368 = vld [vmem:[%s1 + $0x18c] sm:$0xff]
    %v369 = vld [vmem:[%s1 + $0x194] sm:$0xf]
    %v370 = vld [vmem:[%s1 + $0x198] sm:$0xff]
    %v371 = vld [vmem:[%s1 + $0x1a0] sm:$0xf]
    %v372 = vld [vmem:[%s1 + $0x1a4] sm:$0xff]
    %v373 = vld [vmem:[%s1 + $0x1ac] sm:$0xf]
    %v374 = vld [vmem:[%s1 + $0x1b0] sm:$0xff]
    %v375 = vld [vmem:[%s1 + $0x1b8] sm:$0xf]
    %v376 = vld [vmem:[%s1 + $0x1bc] sm:$0xff]
    %v377 = vld [vmem:[%s1 + $0x1c4] sm:$0xf]
    %v378 = vld [vmem:[%s1 + $0x1c8] sm:$0xff]
    %v379 = vld [vmem:[%s1 + $0x1d0] sm:$0xf]
    %v380 = vld [vmem:[%s1 + $0x1d4] sm:$0xff]
    %v381 = vld [vmem:[%s1 + $0x1dc] sm:$0xf]
    %v382 = vld [vmem:[%s1 + $0x1e0] sm:$0xff]
    %v383 = vld [vmem:[%s1 + $0x1e8] sm:$0xf]
    %v384 = vld [vmem:[%s1 + $0x1ec] sm:$0xff]
    %v385 = vld [vmem:[%s1 + $0x1f4] sm:$0xf]
    %v386 = vld [vmem:[%s1 + $0x1f8] sm:$0xff]
    %v387 = vld [vmem:[%s1 + $0x200] sm:$0xf]
    %v388 = vld [vmem:[%s1 + $0x204] sm:$0xff]
    %v389 = vld [vmem:[%s1 + $0x20c] sm:$0xf]
    %v390 = vld [vmem:[%s1 + $0x210] sm:$0xff]
    %v391 = vld [vmem:[%s1 + $0x218] sm:$0xf]
    %v392 = vld [vmem:[%s1 + $0x21c] sm:$0xff]
    %v393 = vld [vmem:[%s1 + $0x224] sm:$0xf]
    %v394 = vld [vmem:[%s1 + $0x228] sm:$0xff]
    %v395 = vld [vmem:[%s1 + $0x230] sm:$0xf]
    %v396 = vld [vmem:[%s1 + $0x234] sm:$0xff]
    %v397 = vld [vmem:[%s1 + $0x23c] sm:$0xf]
    %v398 = vld [vmem:[%s1 + $0x240] sm:$0xff]
    %v399 = vld [vmem:[%s1 + $0x248] sm:$0xf]
    %v400 = vld [vmem:[%s1 + $0x24c] sm:$0xff]
    %v401 = vld [vmem:[%s1 + $0x254] sm:$0xf]
    %v402 = vld [vmem:[%s1 + $0x258] sm:$0xff]
    %v403 = vld [vmem:[%s1 + $0x260] sm:$0xf]
    %v404 = vld [vmem:[%s1 + $0x264] sm:$0xff]
    %v405 = vld [vmem:[%s1 + $0x26c] sm:$0xf]
    %v406 = vld [vmem:[%s1 + $0x270] sm:$0xff]
    %v407 = vld [vmem:[%s1 + $0x278] sm:$0xf]
    %v408 = vld [vmem:[%s1 + $0x27c] sm:$0xff]
    %v409 = vld [vmem:[%s1 + $0x284] sm:$0xf]
    %v410 = vld [vmem:[%s1 + $0x288] sm:$0xff]
    %v411 = vld [vmem:[%s1 + $0x290] sm:$0xf]
    %v412 = vld [vmem:[%s1 + $0x294] sm:$0xff]
    %v413 = vld [vmem:[%s1 + $0x29c] sm:$0xf]
    %v414 = vld [vmem:[%s1 + $0x2a0] sm:$0xff]
    %v415 = vld [vmem:[%s1 + $0x2a8] sm:$0xf]
    %v416 = vld [vmem:[%s1 + $0x2ac] sm:$0xff]
    %v417 = vld [vmem:[%s1 + $0x2b4] sm:$0xf]
    %v418 = vld [vmem:[%s1 + $0x2b8] sm:$0xff]
    %v419 = vld [vmem:[%s1 + $0x2c0] sm:$0xf]
    %v420 = vld [vmem:[%s1 + $0x2c4] sm:$0xff]
    %v421 = vld [vmem:[%s1 + $0x2cc] sm:$0xf]
    %v422 = vld [vmem:[%s1 + $0x2d0] sm:$0xff]
    %v423 = vld [vmem:[%s1 + $0x2d8] sm:$0xf]
    %v424 = vld [vmem:[%s1 + $0x2dc] sm:$0xff]
    %v425 = vld [vmem:[%s1 + $0x2e4] sm:$0xf]
    %v426 = vld [vmem:[%s1 + $0x2e8] sm:$0xff]
    %v427 = vld [vmem:[%s1 + $0x2f0] sm:$0xf]
    %v428 = vld [vmem:[%s1 + $0x2f4] sm:$0xff]
    %v429 = vld [vmem:[%s1 + $0x2fc] sm:$0xf]
    %v430 = vld [vmem:[%s1 + $0x300] sm:$0xff]
    %v431 = vld [vmem:[%s1 + $0x308] sm:$0xf]
    %v432 = vld [vmem:[%s1 + $0x30c] sm:$0xff]
    %v433 = vld [vmem:[%s1 + $0x314] sm:$0xf]
    %v434 = vld [vmem:[%s1 + $0x318] sm:$0xff]
    %v435 = vld [vmem:[%s1 + $0x320] sm:$0xf]
    %v436 = vld [vmem:[%s1 + $0x324] sm:$0xff]
    %v437 = vld [vmem:[%s1 + $0x32c] sm:$0xf]
    %v438 = vld [vmem:[%s1 + $0x330] sm:$0xff]
    %v439 = vld [vmem:[%s1 + $0x338] sm:$0xf]
    %v440 = vld [vmem:[%s1 + $0x33c] sm:$0xff]
    %v441 = vld [vmem:[%s1 + $0x344] sm:$0xf]
    %v442 = vld [vmem:[%s1 + $0x348] sm:$0xff]
    %v443 = vld [vmem:[%s1 + $0x350] sm:$0xf]
    %v444 = vld [vmem:[%s1 + $0x354] sm:$0xff]
    %v445 = vld [vmem:[%s1 + $0x35c] sm:$0xf]
    %v446 = vld [vmem:[%s1 + $0x360] sm:$0xff]
    %v447 = vld [vmem:[%s1 + $0x368] sm:$0xf]
    %v448 = vld [vmem:[%s1 + $0x36c] sm:$0xff]
    %v449 = vld [vmem:[%s1 + $0x374] sm:$0xf]
    %v450 = vld [vmem:[%s1 + $0x378] sm:$0xff]
    %v451 = vld [vmem:[%s1 + $0x380] sm:$0xf]
    %v452 = vld [vmem:[%s1 + $0x384] sm:$0xff]
    %v453 = vld [vmem:[%s1 + $0x38c] sm:$0xf]
    %v454 = vld [vmem:[%s1 + $0x390] sm:$0xff]
    %v455 = vld [vmem:[%s1 + $0x398] sm:$0xf]
    %v456 = vld [vmem:[%s1 + $0x39c] sm:$0xff]
    %v457 = vld [vmem:[%s1 + $0x3a4] sm:$0xf]
    %v458 = vld [vmem:[%s1 + $0x3a8] sm:$0xff]
    %v459 = vld [vmem:[%s1 + $0x3b0] sm:$0xf]
    %v460 = vld [vmem:[%s1 + $0x3b4] sm:$0xff]
    %v461 = vld [vmem:[%s1 + $0x3bc] sm:$0xf]
    %v462 = vld [vmem:[%s1 + $0x3c0] sm:$0xff]
    %v463 = vld [vmem:[%s1 + $0x3c8] sm:$0xf]
    %v464 = vld [vmem:[%s1 + $0x3cc] sm:$0xff]
    %v465 = vld [vmem:[%s1 + $0x3d4] sm:$0xf]
    %v466 = vld [vmem:[%s1 + $0x3d8] sm:$0xff]
    %v467 = vld [vmem:[%s1 + $0x3e0] sm:$0xf]
    %v468 = vld [vmem:[%s1 + $0x3e4] sm:$0xff]
    %v469 = vld [vmem:[%s1 + $0x3ec] sm:$0xf]
    %v470 = vld [vmem:[%s1 + $0x3f0] sm:$0xff]
    %v471 = vld [vmem:[%s1 + $0x3f8] sm:$0xf]
    %v472 = vld [vmem:[%s1 + $0x3fc] sm:$0xff]
    %v473 = vld [vmem:[%s1 + $0x404] sm:$0xf]
    %v474 = vld [vmem:[%s1 + $0x408] sm:$0xff]
    %v475 = vld [vmem:[%s1 + $0x410] sm:$0xf]
    %v476 = vld [vmem:[%s1 + $0x414] sm:$0xff]
    %v477 = vld [vmem:[%s1 + $0x41c] sm:$0xf]
    %v478 = vld [vmem:[%s1 + $0x420] sm:$0xff]
    %v479 = vld [vmem:[%s1 + $0x428] sm:$0xf]
    %v480 = vld [vmem:[%s1 + $0x42c] sm:$0xff]
    %v481 = vld [vmem:[%s1 + $0x434] sm:$0xf]
    %v482 = vld [vmem:[%s1 + $0x438] sm:$0xff]
    %v483 = vld [vmem:[%s1 + $0x440] sm:$0xf]
    %v484 = vld [vmem:[%s1 + $0x444] sm:$0xff]
    %v485 = vld [vmem:[%s1 + $0x44c] sm:$0xf]
    %v486 = vld [vmem:[%s1 + $0x450] sm:$0xff]
    %v487 = vld [vmem:[%s1 + $0x458] sm:$0xf]
    %v488 = vld [vmem:[%s1 + $0x45c] sm:$0xff]
    %v489 = vld [vmem:[%s1 + $0x464] sm:$0xf]
    %v490 = vld [vmem:[%s1 + $0x468] sm:$0xff]
    %v491 = vld [vmem:[%s1 + $0x470] sm:$0xf]
    %v492 = vld [vmem:[%s1 + $0x474] sm:$0xff]
    %v493 = vld [vmem:[%s1 + $0x47c] sm:$0xf]
    %v494 = vld [vmem:[%s1 + $0x480] sm:$0xff]
    %v495 = vld [vmem:[%s1 + $0x488] sm:$0xf]
    %v496 = vld [vmem:[%s1 + $0x48c] sm:$0xff]
    %v497 = vld [vmem:[%s1 + $0x494] sm:$0xf]
    %v498 = vld [vmem:[%s1 + $0x498] sm:$0xff]
    %v499 = vld [vmem:[%s1 + $0x4a0] sm:$0xf]
    %v500 = vld [vmem:[%s1 + $0x4a4] sm:$0xff]
    %v501 = vld [vmem:[%s1 + $0x4ac] sm:$0xf]
    %v502 = vld [vmem:[%s1 + $0x4b0] sm:$0xff]
    %v503 = vld [vmem:[%s1 + $0x4b8] sm:$0xf]
    %v504 = vld [vmem:[%s1 + $0x4bc] sm:$0xff]
    %v505 = vld [vmem:[%s1 + $0x4c4] sm:$0xf]
    %v506 = vld [vmem:[%s1 + $0x4c8] sm:$0xff]
    %v507 = vld [vmem:[%s1 + $0x4d0] sm:$0xf]
    %v508 = vld [vmem:[%s1 + $0x4d4] sm:$0xff]
    %v509 = vld [vmem:[%s1 + $0x4dc] sm:$0xf]
    %v510 = vld [vmem:[%s1 + $0x4e0] sm:$0xff]
    %v511 = vld [vmem:[%s1 + $0x4e8] sm:$0xf]
    %v512 = vld [vmem:[%s1 + $0x4ec] sm:$0xff]
    %v513 = vld [vmem:[%s1 + $0x4f4] sm:$0xf]
    %v514 = vld [vmem:[%s1 + $0x4f8] sm:$0xff]
    %v515 = vld [vmem:[%s1 + $0x500] sm:$0xf]
    %v516 = vld [vmem:[%s1 + $0x504] sm:$0xff]
    %v517 = vld [vmem:[%s1 + $0x50c] sm:$0xf]
    %v518 = vld [vmem:[%s1 + $0x510] sm:$0xff]
    %v519 = vld [vmem:[%s1 + $0x518] sm:$0xf]
    %v520 = vld [vmem:[%s1 + $0x51c] sm:$0xff]
    %v521 = vld [vmem:[%s1 + $0x524] sm:$0xf]
    %v522 = vld [vmem:[%s1 + $0x528] sm:$0xff]
    %v523 = vld [vmem:[%s1 + $0x530] sm:$0xf]
    %v524 = vld [vmem:[%s1 + $0x534] sm:$0xff]
    %v525 = vld [vmem:[%s1 + $0x53c] sm:$0xf]
    %v526 = vld [vmem:[%s1 + $0x540] sm:$0xff]
    %v527 = vld [vmem:[%s1 + $0x548] sm:$0xf]
    %v528 = vld [vmem:[%s1 + $0x54c] sm:$0xff]
    %v529 = vld [vmem:[%s1 + $0x554] sm:$0xf]
    %v530 = vld [vmem:[%s1 + $0x558] sm:$0xff]
    %v531 = vld [vmem:[%s1 + $0x560] sm:$0xf]
    %v532 = vld [vmem:[%s1 + $0x564] sm:$0xff]
    %v533 = vld [vmem:[%s1 + $0x56c] sm:$0xf]
    %v534 = vld [vmem:[%s1 + $0x570] sm:$0xff]
    %v535 = vld [vmem:[%s1 + $0x578] sm:$0xf]
    %v536 = vld [vmem:[%s1 + $0x57c] sm:$0xff]
    %v537 = vld [vmem:[%s1 + $0x584] sm:$0xf]
    %v538 = vld [vmem:[%s1 + $0x588] sm:$0xff]
    %v539 = vld [vmem:[%s1 + $0x590] sm:$0xf]
    %v540 = vld [vmem:[%s1 + $0x594] sm:$0xff]
    %v541 = vld [vmem:[%s1 + $0x59c] sm:$0xf]
    %v542 = vld [vmem:[%s1 + $0x5a0] sm:$0xff]
    %v543 = vld [vmem:[%s1 + $0x5a8] sm:$0xf]
    %v544 = vld [vmem:[%s1 + $0x5ac] sm:$0xff]
    %v545 = vld [vmem:[%s1 + $0x5b4] sm:$0xf]
    %v546 = vld [vmem:[%s1 + $0x5b8] sm:$0xff]
    %v547 = vld [vmem:[%s1 + $0x5c0] sm:$0xf]
    %v548 = vld [vmem:[%s1 + $0x5c4] sm:$0xff]
    %v549 = vld [vmem:[%s1 + $0x5cc] sm:$0xf]
    %v550 = vld [vmem:[%s1 + $0x5d0] sm:$0xff]
    %v551 = vld [vmem:[%s1 + $0x5d8] sm:$0xf]
    %v552 = vld [vmem:[%s1 + $0x5dc] sm:$0xff]
    %v553 = vld [vmem:[%s1 + $0x5e4] sm:$0xf]
    %v554 = vld [vmem:[%s1 + $0x5e8] sm:$0xff]
    %v555 = vld [vmem:[%s1 + $0x5f0] sm:$0xf]
    %v556 = vld [vmem:[%s1 + $0x5f4] sm:$0xff]
    %v557 = vld [vmem:[%s1 + $0x5fc] sm:$0xf]
    %v558 = vld [vmem:[%s1 + $0x600] sm:$0xff]
    %v559 = vld [vmem:[%s1 + $0x608] sm:$0xf]
    %v560 = vld [vmem:[%s1 + $0x60c] sm:$0xff]
    %v561 = vld [vmem:[%s1 + $0x614] sm:$0xf]
    %v562 = vld [vmem:[%s1 + $0x618] sm:$0xff]
    %v563 = vld [vmem:[%s1 + $0x620] sm:$0xf]
    %v564 = vld [vmem:[%s1 + $0x624] sm:$0xff]
    %v565 = vld [vmem:[%s1 + $0x62c] sm:$0xf]
    %v566 = vld [vmem:[%s1 + $0x630] sm:$0xff]
    %v567 = vld [vmem:[%s1 + $0x638] sm:$0xf]
    %v568 = vld [vmem:[%s1 + $0x63c] sm:$0xff]
    %v569 = vld [vmem:[%s1 + $0x644] sm:$0xf]
    %v570 = vld [vmem:[%s1 + $0x648] sm:$0xff]
    %v571 = vld [vmem:[%s1 + $0x650] sm:$0xf]
    %v572 = vld [vmem:[%s1 + $0x654] sm:$0xff]
    %v573 = vld [vmem:[%s1 + $0x65c] sm:$0xf]
    %v574 = vld [vmem:[%s1 + $0x660] sm:$0xff]
    %v575 = vld [vmem:[%s1 + $0x668] sm:$0xf]
    %v576 = vld [vmem:[%s1 + $0x66c] sm:$0xff]
    %v577 = vld [vmem:[%s1 + $0x674] sm:$0xf]
    %v578 = vld [vmem:[%s1 + $0x678] sm:$0xff]
    %v579 = vld [vmem:[%s1 + $0x680] sm:$0xf]
    %v580 = vld [vmem:[%s1 + $0x684] sm:$0xff]
    %v581 = vld [vmem:[%s1 + $0x68c] sm:$0xf]
    %v582 = vld [vmem:[%s1 + $0x690] sm:$0xff]
    %v583 = vld [vmem:[%s1 + $0x698] sm:$0xf]
    %v584 = vld [vmem:[%s1 + $0x69c] sm:$0xff]
    %v585 = vld [vmem:[%s1 + $0x6a4] sm:$0xf]
    %v586 = vld [vmem:[%s1 + $0x6a8] sm:$0xff]
    %v587 = vld [vmem:[%s1 + $0x6b0] sm:$0xf]
    %v588 = vld [vmem:[%s1 + $0x6b4] sm:$0xff]
    %v589 = vld [vmem:[%s1 + $0x6bc] sm:$0xf]
    %v590 = vld [vmem:[%s1 + $0x6c0] sm:$0xff]
    %v591 = vld [vmem:[%s1 + $0x6c8] sm:$0xf]
    %v592 = vld [vmem:[%s1 + $0x6cc] sm:$0xff]
    %v593 = vld [vmem:[%s1 + $0x6d4] sm:$0xf]
    %v594 = vld [vmem:[%s1 + $0x6d8] sm:$0xff]
    %v595 = vld [vmem:[%s1 + $0x6e0] sm:$0xf]
    %v596 = vld [vmem:[%s1 + $0x6e4] sm:$0xff]
    %v597 = vld [vmem:[%s1 + $0x6ec] sm:$0xf]
    %v598 = vld [vmem:[%s1 + $0x6f0] sm:$0xff]
    %v599 = vld [vmem:[%s1 + $0x6f8] sm:$0xf]
    %v600 = vld [vmem:[%s1 + $0x6fc] sm:$0xff]
    %v601 = vld [vmem:[%s1 + $0x704] sm:$0xf]
    %v602 = vld [vmem:[%s1 + $0x708] sm:$0xff]
    %v603 = vld [vmem:[%s1 + $0x710] sm:$0xf]
    %v604 = vld [vmem:[%s1 + $0x714] sm:$0xff]
    %v605 = vld [vmem:[%s1 + $0x71c] sm:$0xf]
    %v606 = vld [vmem:[%s1 + $0x720] sm:$0xff]
    %v607 = vld [vmem:[%s1 + $0x728] sm:$0xf]
    %v608 = vld [vmem:[%s1 + $0x72c] sm:$0xff]
    %v609 = vld [vmem:[%s1 + $0x734] sm:$0xf]
    %v610 = vld [vmem:[%s1 + $0x738] sm:$0xff]
    %v611 = vld [vmem:[%s1 + $0x740] sm:$0xf]
    %v612 = vld [vmem:[%s1 + $0x744] sm:$0xff]
    %v613 = vld [vmem:[%s1 + $0x74c] sm:$0xf]
    %v614 = vld [vmem:[%s1 + $0x750] sm:$0xff]
    %v615 = vld [vmem:[%s1 + $0x758] sm:$0xf]
    %v616 = vld [vmem:[%s1 + $0x75c] sm:$0xff]
    %v617 = vld [vmem:[%s1 + $0x764] sm:$0xf]
    %v618 = vld [vmem:[%s1 + $0x768] sm:$0xff]
    %v619 = vld [vmem:[%s1 + $0x770] sm:$0xf]
    %v620 = vld [vmem:[%s1 + $0x774] sm:$0xff]
    %v621 = vld [vmem:[%s1 + $0x77c] sm:$0xf]
    %v622 = vld [vmem:[%s1 + $0x780] sm:$0xff]
    %v623 = vld [vmem:[%s1 + $0x788] sm:$0xf]
    %v624 = vld [vmem:[%s1 + $0x78c] sm:$0xff]
    %v625 = vld [vmem:[%s1 + $0x794] sm:$0xf]
    %v626 = vld [vmem:[%s1 + $0x798] sm:$0xff]
    %v627 = vld [vmem:[%s1 + $0x7a0] sm:$0xf]
    %v628 = vld [vmem:[%s1 + $0x7a4] sm:$0xff]
    %v629 = vld [vmem:[%s1 + $0x7ac] sm:$0xf]
    %v630 = vld [vmem:[%s1 + $0x7b0] sm:$0xff]
    %v631 = vld [vmem:[%s1 + $0x7b8] sm:$0xf]
    %v632 = vld [vmem:[%s1 + $0x7bc] sm:$0xff]
    %v633 = vld [vmem:[%s1 + $0x7c4] sm:$0xf]
    %v634 = vld [vmem:[%s1 + $0x7c8] sm:$0xff]
    %v635 = vld [vmem:[%s1 + $0x7d0] sm:$0xf]
    %v636 = vld [vmem:[%s1 + $0x7d4] sm:$0xff]
    %v637 = vld [vmem:[%s1 + $0x7dc] sm:$0xf]
    %v638 = vld [vmem:[%s1 + $0x7e0] sm:$0xff]
    %v639 = vld [vmem:[%s1 + $0x7e8] sm:$0xf]
    %v640 = vld [vmem:[%s1 + $0x7ec] sm:$0xff]
    %v641 = vld [vmem:[%s1 + $0x7f4] sm:$0xf]
    %v642 = vld [vmem:[%s1 + $0x7f8] sm:$0xff]
    %v643 = vld [vmem:[%s1 + $0x800] sm:$0xf]
    %v644 = vld [vmem:[%s1 + $0x804] sm:$0xff]
    %v645 = vld [vmem:[%s1 + $0x80c] sm:$0xf]
    %v646 = vld [vmem:[%s1 + $0x810] sm:$0xff]
    %v647 = vld [vmem:[%s1 + $0x818] sm:$0xf]
    %v648 = vld [vmem:[%s1 + $0x81c] sm:$0xff]
    %v649 = vld [vmem:[%s1 + $0x824] sm:$0xf]
    %v650 = vld [vmem:[%s1 + $0x828] sm:$0xff]
    %v651 = vld [vmem:[%s1 + $0x830] sm:$0xf]
    %v652 = vld [vmem:[%s1 + $0x834] sm:$0xff]
    %v653 = vld [vmem:[%s1 + $0x83c] sm:$0xf]
    %v654 = vld [vmem:[%s1 + $0x840] sm:$0xff]
    %v655 = vld [vmem:[%s1 + $0x848] sm:$0xf]
    %v656 = vld [vmem:[%s1 + $0x84c] sm:$0xff]
    %v657 = vld [vmem:[%s1 + $0x854] sm:$0xf]
    %v658 = vld [vmem:[%s1 + $0x858] sm:$0xff]
    %v659 = vld [vmem:[%s1 + $0x860] sm:$0xf]
    %v660 = vld [vmem:[%s1 + $0x864] sm:$0xff]
    %v661 = vld [vmem:[%s1 + $0x86c] sm:$0xf]
    %v662 = vld [vmem:[%s1 + $0x870] sm:$0xff]
    %v663 = vld [vmem:[%s1 + $0x878] sm:$0xf]
    %v664 = vld [vmem:[%s1 + $0x87c] sm:$0xff]
    %v665 = vld [vmem:[%s1 + $0x884] sm:$0xf]
    %v666 = vld [vmem:[%s1 + $0x888] sm:$0xff]
    %v667 = vld [vmem:[%s1 + $0x890] sm:$0xf]
    %v668 = vld [vmem:[%s1 + $0x894] sm:$0xff]
    %v669 = vld [vmem:[%s1 + $0x89c] sm:$0xf]
    %v670 = vld [vmem:[%s1 + $0x8a0] sm:$0xff]
    %v671 = vld [vmem:[%s1 + $0x8a8] sm:$0xf]
    %v672 = vld [vmem:[%s1 + $0x8ac] sm:$0xff]
    %v673 = vld [vmem:[%s1 + $0x8b4] sm:$0xf]
    %v674 = vld [vmem:[%s1 + $0x8b8] sm:$0xff]
    %v675 = vld [vmem:[%s1 + $0x8c0] sm:$0xf]
    %v676 = vld [vmem:[%s1 + $0x8c4] sm:$0xff]
    %v677 = vld [vmem:[%s1 + $0x8cc] sm:$0xf]
    %v678 = vld [vmem:[%s1 + $0x8d0] sm:$0xff]
    %v679 = vld [vmem:[%s1 + $0x8d8] sm:$0xf]
    %v680 = vld [vmem:[%s1 + $0x8dc] sm:$0xff]
    %v681 = vld [vmem:[%s1 + $0x8e4] sm:$0xf]
    %v682 = vld [vmem:[%s1 + $0x8e8] sm:$0xff]
    %v683 = vld [vmem:[%s1 + $0x8f0] sm:$0xf]
    %v684 = vld [vmem:[%s1 + $0x8f4] sm:$0xff]
    %v685 = vld [vmem:[%s1 + $0x8fc] sm:$0xf]
    %v686 = vld [vmem:[%s1 + $0x900] sm:$0xff]
    %v687 = vld [vmem:[%s1 + $0x908] sm:$0xf]
    %v688 = vld [vmem:[%s1 + $0x90c] sm:$0xff]
    %v689 = vld [vmem:[%s1 + $0x914] sm:$0xf]
    %v690 = vld [vmem:[%s1 + $0x918] sm:$0xff]
    %v691 = vld [vmem:[%s1 + $0x920] sm:$0xf]
    %v692 = vld [vmem:[%s1 + $0x924] sm:$0xff]
    %v693 = vld [vmem:[%s1 + $0x92c] sm:$0xf]
    %v694 = vld [vmem:[%s1 + $0x930] sm:$0xff]
    %v695 = vld [vmem:[%s1 + $0x938] sm:$0xf]
    %v696 = vld [vmem:[%s1 + $0x93c] sm:$0xff]
    %v697 = vld [vmem:[%s1 + $0x944] sm:$0xf]
    %v698 = vld [vmem:[%s1 + $0x948] sm:$0xff]
    %v699 = vld [vmem:[%s1 + $0x950] sm:$0xf]
    %v700 = vld [vmem:[%s1 + $0x954] sm:$0xff]
    %v701 = vld [vmem:[%s1 + $0x95c] sm:$0xf]
    %v702 = vld [vmem:[%s1 + $0x960] sm:$0xff]
    %v703 = vld [vmem:[%s1 + $0x968] sm:$0xf]
    %v704 = vld [vmem:[%s1 + $0x96c] sm:$0xff]
    %v705 = vld [vmem:[%s1 + $0x974] sm:$0xf]
    %v706 = vld [vmem:[%s1 + $0x978] sm:$0xff]
    %v707 = vld [vmem:[%s1 + $0x980] sm:$0xf]
    %v708 = vld [vmem:[%s1 + $0x984] sm:$0xff]
    %v709 = vld [vmem:[%s1 + $0x98c] sm:$0xf]
    %v710 = vld [vmem:[%s1 + $0x990] sm:$0xff]
    %v711 = vld [vmem:[%s1 + $0x998] sm:$0xf]
    %v712 = vld [vmem:[%s1 + $0x99c] sm:$0xff]
    %v713 = vld [vmem:[%s1 + $0x9a4] sm:$0xf]
    %v714 = vld [vmem:[%s1 + $0x9a8] sm:$0xff]
    %v715 = vld [vmem:[%s1 + $0x9b0] sm:$0xf]
    %v716 = vld [vmem:[%s1 + $0x9b4] sm:$0xff]
    %v717 = vld [vmem:[%s1 + $0x9bc] sm:$0xf]
    %v718 = vld [vmem:[%s0 + $0x1a] sm:$0xff]
    %v719 = vld [vmem:[%s0 + $0x22] sm:$0xff]
    %v720 = vld [vmem:[%s0 + $0x2a] sm:$0xff]
    %v721 = vld [vmem:[%s0 + $0x32] sm:$0x3]
    %v722 = vld [vmem:[%s38 + $0x1a] sm:$0xff]
    %v723 = vld [vmem:[%s38 + $0x22] sm:$0xff]
    %v724 = vld [vmem:[%s38 + $0x2a] sm:$0xff]
    %v725 = vld [vmem:[%s38 + $0x32] sm:$0x3]
    %v726 = vmax.f32 %v718, %v722
    %v727 = vmax.f32 %v719, %v723
    %v728 = vmax.f32 %v720, %v724
    %v729 = vmax.f32 %v721, %v725
    %v730 = vld [vmem:[%s47 + $0x1a] sm:$0xff]
    %v731 = vld [vmem:[%s47 + $0x22] sm:$0xff]
    %v732 = vld [vmem:[%s47 + $0x2a] sm:$0xff]
    %v733 = vld [vmem:[%s47 + $0x32] sm:$0x3]
    %v734 = vmax.f32 %v726, %v730
    %v735 = vmax.f32 %v727, %v731
    %v736 = vmax.f32 %v728, %v732
    %v737 = vmax.f32 %v729, %v733
    %v738 = vld [vmem:[%s56 + $0x1a] sm:$0xff]
    %v739 = vld [vmem:[%s56 + $0x22] sm:$0xff]
    %v740 = vld [vmem:[%s56 + $0x2a] sm:$0xff]
    %v741 = vld [vmem:[%s56 + $0x32] sm:$0x3]
    %v742 = vmax.f32 %v734, %v738
    %v743 = vmax.f32 %v735, %v739
    %v744 = vmax.f32 %v736, %v740
    %v745 = vmax.f32 %v737, %v741
    %v746 = vld [vmem:[%s65 + $0x1a] sm:$0xff]
    %v747 = vld [vmem:[%s65 + $0x22] sm:$0xff]
    %v748 = vld [vmem:[%s65 + $0x2a] sm:$0xff]
    %v749 = vld [vmem:[%s65 + $0x32] sm:$0x3]
    %v750 = vmax.f32 %v742, %v746
    %v751 = vmax.f32 %v743, %v747
    %v752 = vmax.f32 %v744, %v748
    %v753 = vmax.f32 %v745, %v749
    %v754 = vld [vmem:[%s74 + $0x1a] sm:$0xff]
    %v755 = vld [vmem:[%s74 + $0x22] sm:$0xff]
    %v756 = vld [vmem:[%s74 + $0x2a] sm:$0xff]
    %v757 = vld [vmem:[%s74 + $0x32] sm:$0x3]
    %v758 = vmax.f32 %v750, %v754
    %v759 = vmax.f32 %v751, %v755
    %v760 = vmax.f32 %v752, %v756
    %v761 = vmax.f32 %v753, %v757
    %v762 = vld [vmem:[%s83 + $0x1a] sm:$0xff]
    %v763 = vld [vmem:[%s83 + $0x22] sm:$0xff]
    %v764 = vld [vmem:[%s83 + $0x2a] sm:$0xff]
    %v765 = vld [vmem:[%s83 + $0x32] sm:$0x3]
    %v766 = vmax.f32 %v758, %v762
    %v767 = vmax.f32 %v759, %v763
    %v768 = vmax.f32 %v760, %v764
    %v769 = vmax.f32 %v761, %v765
    %v770 = vld [vmem:[%s92 + $0x1a] sm:$0xff]
    %v771 = vld [vmem:[%s92 + $0x22] sm:$0xff]
    %v772 = vld [vmem:[%s92 + $0x2a] sm:$0xff]
    %v773 = vld [vmem:[%s92 + $0x32] sm:$0x3]
    %v774 = vmax.f32 %v766, %v770
    %v775 = vmax.f32 %v767, %v771
    %v776 = vmax.f32 %v768, %v772
    %v777 = vmax.f32 %v769, %v773
    %v778 = vld [vmem:[%s101 + $0x1a] sm:$0xff]
    %v779 = vld [vmem:[%s101 + $0x22] sm:$0xff]
    %v780 = vld [vmem:[%s101 + $0x2a] sm:$0xff]
    %v781 = vld [vmem:[%s101 + $0x32] sm:$0x3]
    %v782 = vmax.f32 %v774, %v778
    %v783 = vmax.f32 %v775, %v779
    %v784 = vmax.f32 %v776, %v780
    %v785 = vmax.f32 %v777, %v781
    %v786 = vld [vmem:[%s110 + $0x1a] sm:$0xff]
    %v787 = vld [vmem:[%s110 + $0x22] sm:$0xff]
    %v788 = vld [vmem:[%s110 + $0x2a] sm:$0xff]
    %v789 = vld [vmem:[%s110 + $0x32] sm:$0x3]
    %v790 = vmax.f32 %v782, %v786
    %v791 = vmax.f32 %v783, %v787
    %v792 = vmax.f32 %v784, %v788
    %v793 = vmax.f32 %v785, %v789
    %v794 = vld [vmem:[%s119 + $0x1a] sm:$0xff]
    %v795 = vld [vmem:[%s119 + $0x22] sm:$0xff]
    %v796 = vld [vmem:[%s119 + $0x2a] sm:$0xff]
    %v797 = vld [vmem:[%s119 + $0x32] sm:$0x3]
    %v798 = vmax.f32 %v790, %v794
    %v799 = vmax.f32 %v791, %v795
    %v800 = vmax.f32 %v792, %v796
    %v801 = vmax.f32 %v793, %v797
    %v802 = vld [vmem:[%s128 + $0x1a] sm:$0xff]
    %v803 = vld [vmem:[%s128 + $0x22] sm:$0xff]
    %v804 = vld [vmem:[%s128 + $0x2a] sm:$0xff]
    %v805 = vld [vmem:[%s128 + $0x32] sm:$0x3]
    %v806 = vmax.f32 %v798, %v802
    %v807 = vmax.f32 %v799, %v803
    %v808 = vmax.f32 %v800, %v804
    %v809 = vmax.f32 %v801, %v805
    %v810 = vld [vmem:[%s137 + $0x1a] sm:$0xff]
    %v811 = vld [vmem:[%s137 + $0x22] sm:$0xff]
    %v812 = vld [vmem:[%s137 + $0x2a] sm:$0xff]
    %v813 = vld [vmem:[%s137 + $0x32] sm:$0x3]
    %v814 = vmax.f32 %v806, %v810
    %v815 = vmax.f32 %v807, %v811
    %v816 = vmax.f32 %v808, %v812
    %v817 = vmax.f32 %v809, %v813
    %v818 = vld [vmem:[%s146 + $0x1a] sm:$0xff]
    %v819 = vld [vmem:[%s146 + $0x22] sm:$0xff]
    %v820 = vld [vmem:[%s146 + $0x2a] sm:$0xff]
    %v821 = vld [vmem:[%s146 + $0x32] sm:$0x3]
    %v822 = vmax.f32 %v814, %v818
    %v823 = vmax.f32 %v815, %v819
    %v824 = vmax.f32 %v816, %v820
    %v825 = vmax.f32 %v817, %v821
    %v826 = vld [vmem:[%s155 + $0x1a] sm:$0xff]
    %v827 = vld [vmem:[%s155 + $0x22] sm:$0xff]
    %v828 = vld [vmem:[%s155 + $0x2a] sm:$0xff]
    %v829 = vld [vmem:[%s155 + $0x32] sm:$0x3]
    %v830 = vmax.f32 %v822, %v826
    %v831 = vmax.f32 %v823, %v827
    %v832 = vmax.f32 %v824, %v828
    %v833 = vmax.f32 %v825, %v829
    %v834 = vld [vmem:[%s164 + $0x1a] sm:$0xff]
    %v835 = vld [vmem:[%s164 + $0x22] sm:$0xff]
    %v836 = vld [vmem:[%s164 + $0x2a] sm:$0xff]
    %v837 = vld [vmem:[%s164 + $0x32] sm:$0x3]
    %v838 = vmax.f32 %v830, %v834
    %v839 = vmax.f32 %v831, %v835
    %v840 = vmax.f32 %v832, %v836
    %v841 = vmax.f32 %v833, %v837
    %v842 = vld [vmem:[%s173 + $0x1a] sm:$0xff]
    %v843 = vld [vmem:[%s173 + $0x22] sm:$0xff]
    %v844 = vld [vmem:[%s173 + $0x2a] sm:$0xff]
    %v845 = vld [vmem:[%s173 + $0x32] sm:$0x3]
    %v846 = vmax.f32 %v838, %v842
    %v847 = vmax.f32 %v839, %v843
    %v848 = vmax.f32 %v840, %v844
    %v849 = vmax.f32 %v841, %v845
    %v850 = vld [vmem:[%s182 + $0x1a] sm:$0xff]
    %v851 = vld [vmem:[%s182 + $0x22] sm:$0xff]
    %v852 = vld [vmem:[%s182 + $0x2a] sm:$0xff]
    %v853 = vld [vmem:[%s182 + $0x32] sm:$0x3]
    %v854 = vmax.f32 %v846, %v850
    %v855 = vmax.f32 %v847, %v851
    %v856 = vmax.f32 %v848, %v852
    %v857 = vmax.f32 %v849, %v853
    %v858 = vld [vmem:[%s191 + $0x1a] sm:$0xff]
    %v859 = vld [vmem:[%s191 + $0x22] sm:$0xff]
    %v860 = vld [vmem:[%s191 + $0x2a] sm:$0xff]
    %v861 = vld [vmem:[%s191 + $0x32] sm:$0x3]
    %v862 = vmax.f32 %v854, %v858
    %v863 = vmax.f32 %v855, %v859
    %v864 = vmax.f32 %v856, %v860
    %v865 = vmax.f32 %v857, %v861
    %v866 = vld [vmem:[%s200 + $0x1a] sm:$0xff]
    %v867 = vld [vmem:[%s200 + $0x22] sm:$0xff]
    %v868 = vld [vmem:[%s200 + $0x2a] sm:$0xff]
    %v869 = vld [vmem:[%s200 + $0x32] sm:$0x3]
    %v870 = vmax.f32 %v862, %v866
    %v871 = vmax.f32 %v863, %v867
    %v872 = vmax.f32 %v864, %v868
    %v873 = vmax.f32 %v865, %v869
    %v874 = vld [vmem:[%s209 + $0x1a] sm:$0xff]
    %v875 = vld [vmem:[%s209 + $0x22] sm:$0xff]
    %v876 = vld [vmem:[%s209 + $0x2a] sm:$0xff]
    %v877 = vld [vmem:[%s209 + $0x32] sm:$0x3]
    %v878 = vmax.f32 %v870, %v874
    %v879 = vmax.f32 %v871, %v875
    %v880 = vmax.f32 %v872, %v876
    %v881 = vmax.f32 %v873, %v877
    %v882 = vld [vmem:[%s218 + $0x1a] sm:$0xff]
    %v883 = vld [vmem:[%s218 + $0x22] sm:$0xff]
    %v884 = vld [vmem:[%s218 + $0x2a] sm:$0xff]
    %v885 = vld [vmem:[%s218 + $0x32] sm:$0x3]
    %v886 = vmax.f32 %v878, %v882
    %v887 = vmax.f32 %v879, %v883
    %v888 = vmax.f32 %v880, %v884
    %v889 = vmax.f32 %v881, %v885
    %v890 = vld [vmem:[%s227 + $0x1a] sm:$0xff]
    %v891 = vld [vmem:[%s227 + $0x22] sm:$0xff]
    %v892 = vld [vmem:[%s227 + $0x2a] sm:$0xff]
    %v893 = vld [vmem:[%s227 + $0x32] sm:$0x3]
    %v894 = vmax.f32 %v886, %v890
    %v895 = vmax.f32 %v887, %v891
    %v896 = vmax.f32 %v888, %v892
    %v897 = vmax.f32 %v889, %v893
    %v898 = vld [vmem:[%s236 + $0x1a] sm:$0xff]
    %v899 = vld [vmem:[%s236 + $0x22] sm:$0xff]
    %v900 = vld [vmem:[%s236 + $0x2a] sm:$0xff]
    %v901 = vld [vmem:[%s236 + $0x32] sm:$0x3]
    %v902 = vmax.f32 %v894, %v898
    %v903 = vmax.f32 %v895, %v899
    %v904 = vmax.f32 %v896, %v900
    %v905 = vmax.f32 %v897, %v901
    %v906 = vld [vmem:[%s245 + $0x1a] sm:$0xff]
    %v907 = vld [vmem:[%s245 + $0x22] sm:$0xff]
    %v908 = vld [vmem:[%s245 + $0x2a] sm:$0xff]
    %v909 = vld [vmem:[%s245 + $0x32] sm:$0x3]
    %v910 = vmax.f32 %v902, %v906
    %v911 = vmax.f32 %v903, %v907
    %v912 = vmax.f32 %v904, %v908
    %v913 = vmax.f32 %v905, %v909
    %918 = vst [vmem:[#allocation1] ss:$4 sm:$0xff] %v910
    %s919 = scalar_lea.vmem [#allocation1], 32
    %920 = vst [vmem:[%s919] ss:$4 sm:$0xff] %v911
    %v921 = vld.sshfl [vmem:[#allocation1] sm:$0xff pattern:$0x73625140]
    %v922 = vld.sshfl [vmem:[#allocation1 + $0x8] sm:$0xff pattern:$0x73625140]
    %v923 = vld.sshfl [vmem:[#allocation1 + $0x10] sm:$0xff pattern:$0x73625140]
    %v924 = vld.sshfl [vmem:[#allocation1 + $0x18] sm:$0xff pattern:$0x73625140]
    %v925 = vld.sshfl [vmem:[#allocation1 + $0x20] sm:$0xff pattern:$0x73625140]
    %v926 = vld.sshfl [vmem:[#allocation1 + $0x28] sm:$0xff pattern:$0x73625140]
    %v927 = vld.sshfl [vmem:[#allocation1 + $0x30] sm:$0xff pattern:$0x73625140]
    %v928 = vld.sshfl [vmem:[#allocation1 + $0x38] sm:$0xff pattern:$0x73625140]
    %929 = vst [vmem:[#allocation1] ss:$4 sm:$0xff] %v912
    %930 = vst [vmem:[%s919] ss:$4 sm:$0xff] %v913
    %v931 = vld.sshfl [vmem:[#allocation1] sm:$0xff pattern:$0x73625140]
    %v932 = vld.sshfl [vmem:[#allocation1 + $0x8] sm:$0xff pattern:$0x73625140]
    %v933 = vld.sshfl [vmem:[#allocation1 + $0x10] sm:$0xff pattern:$0x73625140]
    %v934 = vld.sshfl [vmem:[#allocation1 + $0x18] sm:$0xff pattern:$0x73625140]
    %v935 = vld.sshfl [vmem:[#allocation1 + $0x20] sm:$0xff pattern:$0x73625140]
    %v949 = vpack.c.bf16 %v921, %v921
    %v950 = vpack.c.bf16 %v922, %v922
    %v951 = vpack.c.bf16 %v923, %v923
    %v952 = vpack.c.bf16 %v924, %v924
    %v953 = vpack.c.bf16 %v925, %v925
    %v954 = vpack.c.bf16 %v926, %v926
    %v955 = vpack.c.bf16 %v927, %v927
    %v956 = vpack.c.bf16 %v928, %v928
    %v957 = vpack.c.bf16 %v931, %v931
    %v958 = vpack.c.bf16 %v932, %v932
    %v959 = vpack.c.bf16 %v933, %v933
    %v960 = vpack.c.bf16 %v934, %v934
    %v961 = vpack.c.bf16 %v935, %v935
    %v962 = vld [vmem:[%s1 + $0x9c0] sm:$0xff]
    %v963 = vld [vmem:[%s1 + $0x9c8] sm:$0xf]
    %v964 = vld [vmem:[%s1 + $0x9cc] sm:$0xff]
    %v965 = vld [vmem:[%s1 + $0x9d4] sm:$0xf]
    %v966 = vld [vmem:[%s1 + $0x9d8] sm:$0xff]
    %v967 = vld [vmem:[%s1 + $0x9e0] sm:$0xf]
    %v968 = vld [vmem:[%s1 + $0x9e4] sm:$0xff]
    %v969 = vld [vmem:[%s1 + $0x9ec] sm:$0xf]
    %v970 = vld [vmem:[%s1 + $0x9f0] sm:$0xff]
    %v971 = vld [vmem:[%s1 + $0x9f8] sm:$0xf]
    %v972 = vld [vmem:[%s1 + $0x9fc] sm:$0xff]
    %v973 = vld [vmem:[%s1 + $0xa04] sm:$0xf]
    %v974 = vld [vmem:[%s1 + $0xa08] sm:$0xff]
    %v975 = vld [vmem:[%s1 + $0xa10] sm:$0xf]
    %v976 = vld [vmem:[%s1 + $0xa14] sm:$0xff]
    %v977 = vld [vmem:[%s1 + $0xa1c] sm:$0xf]
    %v978 = vld [vmem:[%s1 + $0xa20] sm:$0xff]
    %v979 = vld [vmem:[%s1 + $0xa28] sm:$0xf]
    %v980 = vld [vmem:[%s1 + $0xa2c] sm:$0xff]
    %v981 = vld [vmem:[%s1 + $0xa34] sm:$0xf]
    %v982 = vld [vmem:[%s1 + $0xa38] sm:$0xff]
    %v983 = vld [vmem:[%s1 + $0xa40] sm:$0xf]
    %v984 = vld [vmem:[%s1 + $0xa44] sm:$0xff]
    %v985 = vld [vmem:[%s1 + $0xa4c] sm:$0xf]
    %v986 = vld [vmem:[%s1 + $0xa50] sm:$0xff]
    %v987 = vld [vmem:[%s1 + $0xa58] sm:$0xf]
    %v988 = vld [vmem:[%s1 + $0xa5c] sm:$0xff]
    %v989 = vld [vmem:[%s1 + $0xa64] sm:$0xf]
    %v990 = vld [vmem:[%s1 + $0xa68] sm:$0xff]
    %v991 = vld [vmem:[%s1 + $0xa70] sm:$0xf]
    %v992 = vld [vmem:[%s1 + $0xa74] sm:$0xff]
    %v993 = vld [vmem:[%s1 + $0xa7c] sm:$0xf]
    %v994 = vld [vmem:[%s1 + $0xa80] sm:$0xff]
    %v995 = vld [vmem:[%s1 + $0xa88] sm:$0xf]
    %v996 = vld [vmem:[%s1 + $0xa8c] sm:$0xff]
    %v997 = vld [vmem:[%s1 + $0xa94] sm:$0xf]
    %v998 = vld [vmem:[%s1 + $0xa98] sm:$0xff]
    %v999 = vld [vmem:[%s1 + $0xaa0] sm:$0xf]
    %v1000 = vld [vmem:[%s1 + $0xaa4] sm:$0xff]
    %v1001 = vld [vmem:[%s1 + $0xaac] sm:$0xf]
    %v1002 = vld [vmem:[%s1 + $0xab0] sm:$0xff]
    %v1003 = vld [vmem:[%s1 + $0xab8] sm:$0xf]
    %v1004 = vld [vmem:[%s1 + $0xabc] sm:$0xff]
    %v1005 = vld [vmem:[%s1 + $0xac4] sm:$0xf]
    %v1006 = vld [vmem:[%s1 + $0xac8] sm:$0xff]
    %v1007 = vld [vmem:[%s1 + $0xad0] sm:$0xf]
    %v1008 = vld [vmem:[%s1 + $0xad4] sm:$0xff]
    %v1009 = vld [vmem:[%s1 + $0xadc] sm:$0xf]
    %v1010 = vld [vmem:[%s1 + $0xae0] sm:$0xff]
    %v1011 = vld [vmem:[%s1 + $0xae8] sm:$0xf]
    %v1012 = vld [vmem:[%s1 + $0xaec] sm:$0xff]
    %v1013 = vld [vmem:[%s1 + $0xaf4] sm:$0xf]
    %v1014 = vld [vmem:[%s1 + $0xaf8] sm:$0xff]
    %v1015 = vld [vmem:[%s1 + $0xb00] sm:$0xf]
    %v1016 = vld [vmem:[%s1 + $0xb04] sm:$0xff]
    %v1017 = vld [vmem:[%s1 + $0xb0c] sm:$0xf]
    %v1018 = vld [vmem:[%s1 + $0xb10] sm:$0xff]
    %v1019 = vld [vmem:[%s1 + $0xb18] sm:$0xf]
    %v1020 = vld [vmem:[%s1 + $0xb1c] sm:$0xff]
    %v1021 = vld [vmem:[%s1 + $0xb24] sm:$0xf]
    %v1022 = vld [vmem:[%s1 + $0xb28] sm:$0xff]
    %v1023 = vld [vmem:[%s1 + $0xb30] sm:$0xf]
    %v1024 = vld [vmem:[%s1 + $0xb34] sm:$0xff]
    %v1025 = vld [vmem:[%s1 + $0xb3c] sm:$0xf]
    %v1026 = vld [vmem:[%s1 + $0xb40] sm:$0xff]
    %v1027 = vld [vmem:[%s1 + $0xb48] sm:$0xf]
    %v1028 = vld [vmem:[%s1 + $0xb4c] sm:$0xff]
    %v1029 = vld [vmem:[%s1 + $0xb54] sm:$0xf]
    %v1030 = vld [vmem:[%s1 + $0xb58] sm:$0xff]
    %v1031 = vld [vmem:[%s1 + $0xb60] sm:$0xf]
    %v1032 = vld [vmem:[%s1 + $0xb64] sm:$0xff]
    %v1033 = vld [vmem:[%s1 + $0xb6c] sm:$0xf]
    %v1034 = vld [vmem:[%s1 + $0xb70] sm:$0xff]
    %v1035 = vld [vmem:[%s1 + $0xb78] sm:$0xf]
    %v1036 = vld [vmem:[%s1 + $0xb7c] sm:$0xff]
    %v1037 = vld [vmem:[%s1 + $0xb84] sm:$0xf]
    %v1038 = vld [vmem:[%s1 + $0xb88] sm:$0xff]
    %v1039 = vld [vmem:[%s1 + $0xb90] sm:$0xf]
    %v1040 = vld [vmem:[%s1 + $0xb94] sm:$0xff]
    %v1041 = vld [vmem:[%s1 + $0xb9c] sm:$0xf]
    %v1042 = vld [vmem:[%s1 + $0xba0] sm:$0xff]
    %v1043 = vld [vmem:[%s1 + $0xba8] sm:$0xf]
    %v1044 = vld [vmem:[%s1 + $0xbac] sm:$0xff]
    %v1045 = vld [vmem:[%s1 + $0xbb4] sm:$0xf]
    %v1046 = vld [vmem:[%s1 + $0xbb8] sm:$0xff]
    %v1047 = vld [vmem:[%s1 + $0xbc0] sm:$0xf]
    %v1048 = vld [vmem:[%s1 + $0xbc4] sm:$0xff]
    %v1049 = vld [vmem:[%s1 + $0xbcc] sm:$0xf]
    %v1050 = vld [vmem:[%s1 + $0xbd0] sm:$0xff]
    %v1051 = vld [vmem:[%s1 + $0xbd8] sm:$0xf]
    %v1052 = vld [vmem:[%s1 + $0xbdc] sm:$0xff]
    %v1053 = vld [vmem:[%s1 + $0xbe4] sm:$0xf]
    %v1054 = vld [vmem:[%s1 + $0xbe8] sm:$0xff]
    %v1055 = vld [vmem:[%s1 + $0xbf0] sm:$0xf]
    %v1056 = vld [vmem:[%s1 + $0xbf4] sm:$0xff]
    %v1057 = vld [vmem:[%s1 + $0xbfc] sm:$0xf]
    %v1058 = vld [vmem:[%s1 + $0xc00] sm:$0xff]
    %v1059 = vld [vmem:[%s1 + $0xc08] sm:$0xf]
    %v1060 = vld [vmem:[%s1 + $0xc0c] sm:$0xff]
    %v1061 = vld [vmem:[%s1 + $0xc14] sm:$0xf]
    %v1062 = vld [vmem:[%s1 + $0xc18] sm:$0xff]
    %v1063 = vld [vmem:[%s1 + $0xc20] sm:$0xf]
    %v1064 = vld [vmem:[%s1 + $0xc24] sm:$0xff]
    %v1065 = vld [vmem:[%s1 + $0xc2c] sm:$0xf]
    %v1066 = vld [vmem:[%s1 + $0xc30] sm:$0xff]
    %v1067 = vld [vmem:[%s1 + $0xc38] sm:$0xf]
    %v1068 = vld [vmem:[%s1 + $0xc3c] sm:$0xff]
    %v1069 = vld [vmem:[%s1 + $0xc44] sm:$0xf]
    %v1070 = vld [vmem:[%s1 + $0xc48] sm:$0xff]
    %v1071 = vld [vmem:[%s1 + $0xc50] sm:$0xf]
    %v1072 = vld [vmem:[%s1 + $0xc54] sm:$0xff]
    %v1073 = vld [vmem:[%s1 + $0xc5c] sm:$0xf]
    %v1074 = vld [vmem:[%s1 + $0xc60] sm:$0xff]
    %v1075 = vld [vmem:[%s1 + $0xc68] sm:$0xf]
    %v1076 = vld [vmem:[%s1 + $0xc6c] sm:$0xff]
    %v1077 = vld [vmem:[%s1 + $0xc74] sm:$0xf]
    %v1078 = vld [vmem:[%s1 + $0xc78] sm:$0xff]
    %v1079 = vld [vmem:[%s1 + $0xc80] sm:$0xf]
    %v1080 = vld [vmem:[%s1 + $0xc84] sm:$0xff]
    %v1081 = vld [vmem:[%s1 + $0xc8c] sm:$0xf]
    %v1082 = vld [vmem:[%s1 + $0xc90] sm:$0xff]
    %v1083 = vld [vmem:[%s1 + $0xc98] sm:$0xf]
    %v1084 = vld [vmem:[%s1 + $0xc9c] sm:$0xff]
    %v1085 = vld [vmem:[%s1 + $0xca4] sm:$0xf]
    %v1086 = vld [vmem:[%s1 + $0xca8] sm:$0xff]
    %v1087 = vld [vmem:[%s1 + $0xcb0] sm:$0xf]
    %v1088 = vld [vmem:[%s1 + $0xcb4] sm:$0xff]
    %v1089 = vld [vmem:[%s1 + $0xcbc] sm:$0xf]
    %v1090 = vld [vmem:[%s1 + $0xcc0] sm:$0xff]
    %v1091 = vld [vmem:[%s1 + $0xcc8] sm:$0xf]
    %v1092 = vld [vmem:[%s1 + $0xccc] sm:$0xff]
    %v1093 = vld [vmem:[%s1 + $0xcd4] sm:$0xf]
    %v1094 = vld [vmem:[%s1 + $0xcd8] sm:$0xff]
    %v1095 = vld [vmem:[%s1 + $0xce0] sm:$0xf]
    %v1096 = vld [vmem:[%s1 + $0xce4] sm:$0xff]
    %v1097 = vld [vmem:[%s1 + $0xcec] sm:$0xf]
    %v1098 = vld [vmem:[%s1 + $0xcf0] sm:$0xff]
    %v1099 = vld [vmem:[%s1 + $0xcf8] sm:$0xf]
    %v1100 = vld [vmem:[%s1 + $0xcfc] sm:$0xff]
    %v1101 = vld [vmem:[%s1 + $0xd04] sm:$0xf]
    %v1102 = vld [vmem:[%s1 + $0xd08] sm:$0xff]
    %v1103 = vld [vmem:[%s1 + $0xd10] sm:$0xf]
    %v1104 = vld [vmem:[%s1 + $0xd14] sm:$0xff]
    %v1105 = vld [vmem:[%s1 + $0xd1c] sm:$0xf]
    %v1106 = vld [vmem:[%s1 + $0xd20] sm:$0xff]
    %v1107 = vld [vmem:[%s1 + $0xd28] sm:$0xf]
    %v1108 = vld [vmem:[%s1 + $0xd2c] sm:$0xff]
    %v1109 = vld [vmem:[%s1 + $0xd34] sm:$0xf]
    %v1110 = vld [vmem:[%s1 + $0xd38] sm:$0xff]
    %v1111 = vld [vmem:[%s1 + $0xd40] sm:$0xf]
    %v1112 = vld [vmem:[%s1 + $0xd44] sm:$0xff]
    %v1113 = vld [vmem:[%s1 + $0xd4c] sm:$0xf]
    %v1114 = vld [vmem:[%s1 + $0xd50] sm:$0xff]
    %v1115 = vld [vmem:[%s1 + $0xd58] sm:$0xf]
    %v1116 = vld [vmem:[%s1 + $0xd5c] sm:$0xff]
    %v1117 = vld [vmem:[%s1 + $0xd64] sm:$0xf]
    %v1118 = vld [vmem:[%s1 + $0xd68] sm:$0xff]
    %v1119 = vld [vmem:[%s1 + $0xd70] sm:$0xf]
    %v1120 = vld [vmem:[%s1 + $0xd74] sm:$0xff]
    %v1121 = vld [vmem:[%s1 + $0xd7c] sm:$0xf]
    %v1122 = vld [vmem:[%s1 + $0xd80] sm:$0xff]
    %v1123 = vld [vmem:[%s1 + $0xd88] sm:$0xf]
    %v1124 = vld [vmem:[%s1 + $0xd8c] sm:$0xff]
    %v1125 = vld [vmem:[%s1 + $0xd94] sm:$0xf]
    %v1126 = vld [vmem:[%s1 + $0xd98] sm:$0xff]
    %v1127 = vld [vmem:[%s1 + $0xda0] sm:$0xf]
    %v1128 = vld [vmem:[%s1 + $0xda4] sm:$0xff]
    %v1129 = vld [vmem:[%s1 + $0xdac] sm:$0xf]
    %v1130 = vld [vmem:[%s1 + $0xdb0] sm:$0xff]
    %v1131 = vld [vmem:[%s1 + $0xdb8] sm:$0xf]
    %v1132 = vld [vmem:[%s1 + $0xdbc] sm:$0xff]
    %v1133 = vld [vmem:[%s1 + $0xdc4] sm:$0xf]
    %v1134 = vld [vmem:[%s1 + $0xdc8] sm:$0xff]
    %v1135 = vld [vmem:[%s1 + $0xdd0] sm:$0xf]
    %v1136 = vld [vmem:[%s1 + $0xdd4] sm:$0xff]
    %v1137 = vld [vmem:[%s1 + $0xddc] sm:$0xf]
    %v1138 = vld [vmem:[%s1 + $0xde0] sm:$0xff]
    %v1139 = vld [vmem:[%s1 + $0xde8] sm:$0xf]
    %v1140 = vld [vmem:[%s1 + $0xdec] sm:$0xff]
    %v1141 = vld [vmem:[%s1 + $0xdf4] sm:$0xf]
    %v1142 = vld [vmem:[%s1 + $0xdf8] sm:$0xff]
    %v1143 = vld [vmem:[%s1 + $0xe00] sm:$0xf]
    %v1144 = vld [vmem:[%s1 + $0xe04] sm:$0xff]
    %v1145 = vld [vmem:[%s1 + $0xe0c] sm:$0xf]
    %v1146 = vld [vmem:[%s1 + $0xe10] sm:$0xff]
    %v1147 = vld [vmem:[%s1 + $0xe18] sm:$0xf]
    %v1148 = vld [vmem:[%s1 + $0xe1c] sm:$0xff]
    %v1149 = vld [vmem:[%s1 + $0xe24] sm:$0xf]
    %v1150 = vld [vmem:[%s1 + $0xe28] sm:$0xff]
    %v1151 = vld [vmem:[%s1 + $0xe30] sm:$0xf]
    %v1152 = vld [vmem:[%s1 + $0xe34] sm:$0xff]
    %v1153 = vld [vmem:[%s1 + $0xe3c] sm:$0xf]
    %v1154 = vld [vmem:[%s1 + $0xe40] sm:$0xff]
    %v1155 = vld [vmem:[%s1 + $0xe48] sm:$0xf]
    %v1156 = vld [vmem:[%s1 + $0xe4c] sm:$0xff]
    %v1157 = vld [vmem:[%s1 + $0xe54] sm:$0xf]
    %v1158 = vld [vmem:[%s1 + $0xe58] sm:$0xff]
    %v1159 = vld [vmem:[%s1 + $0xe60] sm:$0xf]
    %v1160 = vld [vmem:[%s1 + $0xe64] sm:$0xff]
    %v1161 = vld [vmem:[%s1 + $0xe6c] sm:$0xf]
    %v1162 = vld [vmem:[%s1 + $0xe70] sm:$0xff]
    %v1163 = vld [vmem:[%s1 + $0xe78] sm:$0xf]
    %v1164 = vld [vmem:[%s1 + $0xe7c] sm:$0xff]
    %v1165 = vld [vmem:[%s1 + $0xe84] sm:$0xf]
    %v1166 = vld [vmem:[%s1 + $0xe88] sm:$0xff]
    %v1167 = vld [vmem:[%s1 + $0xe90] sm:$0xf]
    %v1168 = vld [vmem:[%s1 + $0xe94] sm:$0xff]
    %v1169 = vld [vmem:[%s1 + $0xe9c] sm:$0xf]
    %v1170 = vld [vmem:[%s1 + $0xea0] sm:$0xff]
    %v1171 = vld [vmem:[%s1 + $0xea8] sm:$0xf]
    %v1172 = vld [vmem:[%s1 + $0xeac] sm:$0xff]
    %v1173 = vld [vmem:[%s1 + $0xeb4] sm:$0xf]
    %v1174 = vld [vmem:[%s1 + $0xeb8] sm:$0xff]
    %v1175 = vld [vmem:[%s1 + $0xec0] sm:$0xf]
    %v1176 = vld [vmem:[%s1 + $0xec4] sm:$0xff]
    %v1177 = vld [vmem:[%s1 + $0xecc] sm:$0xf]
    %v1178 = vld [vmem:[%s1 + $0xed0] sm:$0xff]
    %v1179 = vld [vmem:[%s1 + $0xed8] sm:$0xf]
    %v1180 = vld [vmem:[%s1 + $0xedc] sm:$0xff]
    %v1181 = vld [vmem:[%s1 + $0xee4] sm:$0xf]
    %v1182 = vld [vmem:[%s1 + $0xee8] sm:$0xff]
    %v1183 = vld [vmem:[%s1 + $0xef0] sm:$0xf]
    %v1184 = vld [vmem:[%s1 + $0xef4] sm:$0xff]
    %v1185 = vld [vmem:[%s1 + $0xefc] sm:$0xf]
    %v1186 = vld [vmem:[%s1 + $0xf00] sm:$0xff]
    %v1187 = vld [vmem:[%s1 + $0xf08] sm:$0xf]
    %v1188 = vld [vmem:[%s1 + $0xf0c] sm:$0xff]
    %v1189 = vld [vmem:[%s1 + $0xf14] sm:$0xf]
    %v1190 = vld [vmem:[%s1 + $0xf18] sm:$0xff]
    %v1191 = vld [vmem:[%s1 + $0xf20] sm:$0xf]
    %v1192 = vld [vmem:[%s1 + $0xf24] sm:$0xff]
    %v1193 = vld [vmem:[%s1 + $0xf2c] sm:$0xf]
    %v1194 = vld [vmem:[%s1 + $0xf30] sm:$0xff]
    %v1195 = vld [vmem:[%s1 + $0xf38] sm:$0xf]
    %v1196 = vld [vmem:[%s1 + $0xf3c] sm:$0xff]
    %v1197 = vld [vmem:[%s1 + $0xf44] sm:$0xf]
    %v1198 = vld [vmem:[%s1 + $0xf48] sm:$0xff]
    %v1199 = vld [vmem:[%s1 + $0xf50] sm:$0xf]
    %v1200 = vld [vmem:[%s1 + $0xf54] sm:$0xff]
    %v1201 = vld [vmem:[%s1 + $0xf5c] sm:$0xf]
    %v1202 = vld [vmem:[%s1 + $0xf60] sm:$0xff]
    %v1203 = vld [vmem:[%s1 + $0xf68] sm:$0xf]
    %v1204 = vld [vmem:[%s1 + $0xf6c] sm:$0xff]
    %v1205 = vld [vmem:[%s1 + $0xf74] sm:$0xf]
    %v1206 = vld [vmem:[%s1 + $0xf78] sm:$0xff]
    %v1207 = vld [vmem:[%s1 + $0xf80] sm:$0xf]
    %v1208 = vld [vmem:[%s1 + $0xf84] sm:$0xff]
    %v1209 = vld [vmem:[%s1 + $0xf8c] sm:$0xf]
    %v1210 = vld [vmem:[%s1 + $0xf90] sm:$0xff]
    %v1211 = vld [vmem:[%s1 + $0xf98] sm:$0xf]
    %v1212 = vld [vmem:[%s1 + $0xf9c] sm:$0xff]
    %v1213 = vld [vmem:[%s1 + $0xfa4] sm:$0xf]
    %v1214 = vld [vmem:[%s1 + $0xfa8] sm:$0xff]
    %v1215 = vld [vmem:[%s1 + $0xfb0] sm:$0xf]
    %v1216 = vld [vmem:[%s1 + $0xfb4] sm:$0xff]
    %v1217 = vld [vmem:[%s1 + $0xfbc] sm:$0xf]
    %v1218 = vld [vmem:[%s1 + $0xfc0] sm:$0xff]
    %v1219 = vld [vmem:[%s1 + $0xfc8] sm:$0xf]
    %v1220 = vld [vmem:[%s1 + $0xfcc] sm:$0xff]
    %v1221 = vld [vmem:[%s1 + $0xfd4] sm:$0xf]
    %v1222 = vld [vmem:[%s1 + $0xfd8] sm:$0xff]
    %v1223 = vld [vmem:[%s1 + $0xfe0] sm:$0xf]
    %v1224 = vld [vmem:[%s1 + $0xfe4] sm:$0xff]
    %v1225 = vld [vmem:[%s1 + $0xfec] sm:$0xf]
    %v1226 = vld [vmem:[%s1 + $0xff0] sm:$0xff]
    %v1227 = vld [vmem:[%s1 + $0xff8] sm:$0xf]
    %v1228 = vld [vmem:[%s1 + $0xffc] sm:$0xff]
    %v1229 = vld [vmem:[%s1 + $0x1004] sm:$0xf]
    %v1230 = vld [vmem:[%s1 + $0x1008] sm:$0xff]
    %v1231 = vld [vmem:[%s1 + $0x1010] sm:$0xf]
    %v1232 = vld [vmem:[%s1 + $0x1014] sm:$0xff]
    %v1233 = vld [vmem:[%s1 + $0x101c] sm:$0xf]
    %v1234 = vld [vmem:[%s1 + $0x1020] sm:$0xff]
    %v1235 = vld [vmem:[%s1 + $0x1028] sm:$0xf]
    %v1236 = vld [vmem:[%s1 + $0x102c] sm:$0xff]
    %v1237 = vld [vmem:[%s1 + $0x1034] sm:$0xf]
    %v1238 = vld [vmem:[%s1 + $0x1038] sm:$0xff]
    %v1239 = vld [vmem:[%s1 + $0x1040] sm:$0xf]
    %v1240 = vld [vmem:[%s1 + $0x1044] sm:$0xff]
    %v1241 = vld [vmem:[%s1 + $0x104c] sm:$0xf]
    %v1242 = vld [vmem:[%s1 + $0x1050] sm:$0xff]
    %v1243 = vld [vmem:[%s1 + $0x1058] sm:$0xf]
    %v1244 = vld [vmem:[%s1 + $0x105c] sm:$0xff]
    %v1245 = vld [vmem:[%s1 + $0x1064] sm:$0xf]
    %v1246 = vld [vmem:[%s1 + $0x1068] sm:$0xff]
    %v1247 = vld [vmem:[%s1 + $0x1070] sm:$0xf]
    %v1248 = vld [vmem:[%s1 + $0x1074] sm:$0xff]
    %v1249 = vld [vmem:[%s1 + $0x107c] sm:$0xf]
    %v1250 = vld [vmem:[%s1 + $0x1080] sm:$0xff]
    %v1251 = vld [vmem:[%s1 + $0x1088] sm:$0xf]
    %v1252 = vld [vmem:[%s1 + $0x108c] sm:$0xff]
    %v1253 = vld [vmem:[%s1 + $0x1094] sm:$0xf]
    %v1254 = vld [vmem:[%s1 + $0x1098] sm:$0xff]
    %v1255 = vld [vmem:[%s1 + $0x10a0] sm:$0xf]
    %v1256 = vld [vmem:[%s1 + $0x10a4] sm:$0xff]
    %v1257 = vld [vmem:[%s1 + $0x10ac] sm:$0xf]
    %v1258 = vld [vmem:[%s1 + $0x10b0] sm:$0xff]
    %v1259 = vld [vmem:[%s1 + $0x10b8] sm:$0xf]
    %v1260 = vld [vmem:[%s1 + $0x10bc] sm:$0xff]
    %v1261 = vld [vmem:[%s1 + $0x10c4] sm:$0xf]
    %v1262 = vld [vmem:[%s1 + $0x10c8] sm:$0xff]
    %v1263 = vld [vmem:[%s1 + $0x10d0] sm:$0xf]
    %v1264 = vld [vmem:[%s1 + $0x10d4] sm:$0xff]
    %v1265 = vld [vmem:[%s1 + $0x10dc] sm:$0xf]
    %v1266 = vld [vmem:[%s1 + $0x10e0] sm:$0xff]
    %v1267 = vld [vmem:[%s1 + $0x10e8] sm:$0xf]
    %v1268 = vld [vmem:[%s1 + $0x10ec] sm:$0xff]
    %v1269 = vld [vmem:[%s1 + $0x10f4] sm:$0xf]
    %v1270 = vld [vmem:[%s1 + $0x10f8] sm:$0xff]
    %v1271 = vld [vmem:[%s1 + $0x1100] sm:$0xf]
    %v1272 = vld [vmem:[%s1 + $0x1104] sm:$0xff]
    %v1273 = vld [vmem:[%s1 + $0x110c] sm:$0xf]
    %v1274 = vld [vmem:[%s1 + $0x1110] sm:$0xff]
    %v1275 = vld [vmem:[%s1 + $0x1118] sm:$0xf]
    %v1276 = vld [vmem:[%s1 + $0x111c] sm:$0xff]
    %v1277 = vld [vmem:[%s1 + $0x1124] sm:$0xf]
    %v1278 = vld [vmem:[%s1 + $0x1128] sm:$0xff]
    %v1279 = vld [vmem:[%s1 + $0x1130] sm:$0xf]
    %v1280 = vld [vmem:[%s1 + $0x1134] sm:$0xff]
    %v1281 = vld [vmem:[%s1 + $0x113c] sm:$0xf]
    %v1282 = vld [vmem:[%s1 + $0x1140] sm:$0xff]
    %v1283 = vld [vmem:[%s1 + $0x1148] sm:$0xf]
    %v1284 = vld [vmem:[%s1 + $0x114c] sm:$0xff]
    %v1285 = vld [vmem:[%s1 + $0x1154] sm:$0xf]
    %v1286 = vld [vmem:[%s1 + $0x1158] sm:$0xff]
    %v1287 = vld [vmem:[%s1 + $0x1160] sm:$0xf]
    %v1288 = vld [vmem:[%s1 + $0x1164] sm:$0xff]
    %v1289 = vld [vmem:[%s1 + $0x116c] sm:$0xf]
    %v1290 = vld [vmem:[%s1 + $0x1170] sm:$0xff]
    %v1291 = vld [vmem:[%s1 + $0x1178] sm:$0xf]
    %v1292 = vld [vmem:[%s1 + $0x117c] sm:$0xff]
    %v1293 = vld [vmem:[%s1 + $0x1184] sm:$0xf]
    %v1294 = vld [vmem:[%s1 + $0x1188] sm:$0xff]
    %v1295 = vld [vmem:[%s1 + $0x1190] sm:$0xf]
    %v1296 = vld [vmem:[%s1 + $0x1194] sm:$0xff]
    %v1297 = vld [vmem:[%s1 + $0x119c] sm:$0xf]
    %v1298 = vld [vmem:[%s1 + $0x11a0] sm:$0xff]
    %v1299 = vld [vmem:[%s1 + $0x11a8] sm:$0xf]
    %v1300 = vld [vmem:[%s1 + $0x11ac] sm:$0xff]
    %v1301 = vld [vmem:[%s1 + $0x11b4] sm:$0xf]
    %v1302 = vld [vmem:[%s1 + $0x11b8] sm:$0xff]
    %v1303 = vld [vmem:[%s1 + $0x11c0] sm:$0xf]
    %v1304 = vld [vmem:[%s1 + $0x11c4] sm:$0xff]
    %v1305 = vld [vmem:[%s1 + $0x11cc] sm:$0xf]
    %v1306 = vld [vmem:[%s1 + $0x11d0] sm:$0xff]
    %v1307 = vld [vmem:[%s1 + $0x11d8] sm:$0xf]
    %v1308 = vld [vmem:[%s1 + $0x11dc] sm:$0xff]
    %v1309 = vld [vmem:[%s1 + $0x11e4] sm:$0xf]
    %v1310 = vld [vmem:[%s1 + $0x11e8] sm:$0xff]
    %v1311 = vld [vmem:[%s1 + $0x11f0] sm:$0xf]
    %v1312 = vld [vmem:[%s1 + $0x11f4] sm:$0xff]
    %v1313 = vld [vmem:[%s1 + $0x11fc] sm:$0xf]
    %v1314 = vld [vmem:[%s1 + $0x1200] sm:$0xff]
    %v1315 = vld [vmem:[%s1 + $0x1208] sm:$0xf]
    %v1316 = vld [vmem:[%s1 + $0x120c] sm:$0xff]
    %v1317 = vld [vmem:[%s1 + $0x1214] sm:$0xf]
    %v1318 = vld [vmem:[%s1 + $0x1218] sm:$0xff]
    %v1319 = vld [vmem:[%s1 + $0x1220] sm:$0xf]
    %v1320 = vld [vmem:[%s1 + $0x1224] sm:$0xff]
    %v1321 = vld [vmem:[%s1 + $0x122c] sm:$0xf]
    %v1322 = vld [vmem:[%s1 + $0x1230] sm:$0xff]
    %v1323 = vld [vmem:[%s1 + $0x1238] sm:$0xf]
    %v1324 = vld [vmem:[%s1 + $0x123c] sm:$0xff]
    %v1325 = vld [vmem:[%s1 + $0x1244] sm:$0xf]
    %v1326 = vld [vmem:[%s1 + $0x1248] sm:$0xff]
    %v1327 = vld [vmem:[%s1 + $0x1250] sm:$0xf]
    %v1328 = vld [vmem:[%s1 + $0x1254] sm:$0xff]
    %v1329 = vld [vmem:[%s1 + $0x125c] sm:$0xf]
    %v1330 = vld [vmem:[%s1 + $0x1260] sm:$0xff]
    %v1331 = vld [vmem:[%s1 + $0x1268] sm:$0xf]
    %v1332 = vld [vmem:[%s1 + $0x126c] sm:$0xff]
    %v1333 = vld [vmem:[%s1 + $0x1274] sm:$0xf]
    %v1334 = vld [vmem:[%s1 + $0x1278] sm:$0xff]
    %v1335 = vld [vmem:[%s1 + $0x1280] sm:$0xf]
    %v1336 = vld [vmem:[%s1 + $0x1284] sm:$0xff]
    %v1337 = vld [vmem:[%s1 + $0x128c] sm:$0xf]
    %v1338 = vld [vmem:[%s1 + $0x1290] sm:$0xff]
    %v1339 = vld [vmem:[%s1 + $0x1298] sm:$0xf]
    %v1340 = vld [vmem:[%s1 + $0x129c] sm:$0xff]
    %v1341 = vld [vmem:[%s1 + $0x12a4] sm:$0xf]
    %v1342 = vld [vmem:[%s1 + $0x12a8] sm:$0xff]
    %v1343 = vld [vmem:[%s1 + $0x12b0] sm:$0xf]
    %v1344 = vld [vmem:[%s1 + $0x12b4] sm:$0xff]
    %v1345 = vld [vmem:[%s1 + $0x12bc] sm:$0xf]
    %v1346 = vld [vmem:[%s1 + $0x12c0] sm:$0xff]
    %v1347 = vld [vmem:[%s1 + $0x12c8] sm:$0xf]
    %v1348 = vld [vmem:[%s1 + $0x12cc] sm:$0xff]
    %v1349 = vld [vmem:[%s1 + $0x12d4] sm:$0xf]
    %v1350 = vld [vmem:[%s1 + $0x12d8] sm:$0xff]
    %v1351 = vld [vmem:[%s1 + $0x12e0] sm:$0xf]
    %v1352 = vld [vmem:[%s1 + $0x12e4] sm:$0xff]
    %v1353 = vld [vmem:[%s1 + $0x12ec] sm:$0xf]
    %v1354 = vld [vmem:[%s1 + $0x12f0] sm:$0xff]
    %v1355 = vld [vmem:[%s1 + $0x12f8] sm:$0xf]
    %v1356 = vld [vmem:[%s1 + $0x12fc] sm:$0xff]
    %v1357 = vld [vmem:[%s1 + $0x1304] sm:$0xf]
    %v1358 = vld [vmem:[%s1 + $0x1308] sm:$0xff]
    %v1359 = vld [vmem:[%s1 + $0x1310] sm:$0xf]
    %v1360 = vld [vmem:[%s1 + $0x1314] sm:$0xff]
    %v1361 = vld [vmem:[%s1 + $0x131c] sm:$0xf]
    %v1762 = vunpack.c.l.b16 %v962
    %v1763 = vunpack.c.h.b16 %v962
    %v1764 = vunpack.c.l.b16 %v963
    %v1765 = vunpack.c.l.b16 %v964
    %v1766 = vunpack.c.h.b16 %v964
    %v1767 = vunpack.c.l.b16 %v965
    %v1768 = vunpack.c.l.b16 %v966
    %v1769 = vunpack.c.h.b16 %v966
    %v1770 = vunpack.c.l.b16 %v967
    %v1771 = vunpack.c.l.b16 %v968
    %v1772 = vunpack.c.h.b16 %v968
    %v1773 = vunpack.c.l.b16 %v969
    %v1774 = vunpack.c.l.b16 %v970
    %v1775 = vunpack.c.h.b16 %v970
    %v1776 = vunpack.c.l.b16 %v971
    %v1777 = vunpack.c.l.b16 %v972
    %v1778 = vunpack.c.h.b16 %v972
    %v1779 = vunpack.c.l.b16 %v973
    %v1780 = vunpack.c.l.b16 %v974
    %v1781 = vunpack.c.h.b16 %v974
    %v1782 = vunpack.c.l.b16 %v975
    %v1783 = vunpack.c.l.b16 %v976
    %v1784 = vunpack.c.h.b16 %v976
    %v1785 = vunpack.c.l.b16 %v977
    %v1786 = vunpack.c.l.b16 %v978
    %v1787 = vunpack.c.h.b16 %v978
    %v1788 = vunpack.c.l.b16 %v979
    %v1789 = vunpack.c.l.b16 %v980
    %v1790 = vunpack.c.h.b16 %v980
    %v1791 = vunpack.c.l.b16 %v981
    %v1792 = vunpack.c.l.b16 %v982
    %v1793 = vunpack.c.h.b16 %v982
    %v1794 = vunpack.c.l.b16 %v983
    %v1795 = vunpack.c.l.b16 %v984
    %v1796 = vunpack.c.h.b16 %v984
    %v1797 = vunpack.c.l.b16 %v985
    %v1798 = vunpack.c.l.b16 %v986
    %v1799 = vunpack.c.h.b16 %v986
    %v1800 = vunpack.c.l.b16 %v987
    %v1801 = vunpack.c.l.b16 %v988
    %v1802 = vunpack.c.h.b16 %v988
    %v1803 = vunpack.c.l.b16 %v989
    %v1804 = vunpack.c.l.b16 %v990
    %v1805 = vunpack.c.h.b16 %v990
    %v1806 = vunpack.c.l.b16 %v991
    %v1807 = vunpack.c.l.b16 %v992
    %v1808 = vunpack.c.h.b16 %v992
    %v1809 = vunpack.c.l.b16 %v993
    %v1810 = vunpack.c.l.b16 %v994
    %v1811 = vunpack.c.h.b16 %v994
    %v1812 = vunpack.c.l.b16 %v995
    %v1813 = vunpack.c.l.b16 %v996
    %v1814 = vunpack.c.h.b16 %v996
    %v1815 = vunpack.c.l.b16 %v997
    %v1816 = vunpack.c.l.b16 %v998
    %v1817 = vunpack.c.h.b16 %v998
    %v1818 = vunpack.c.l.b16 %v999
    %v1819 = vunpack.c.l.b16 %v1000
    %v1820 = vunpack.c.h.b16 %v1000
    %v1821 = vunpack.c.l.b16 %v1001
    %v1822 = vunpack.c.l.b16 %v1002
    %v1823 = vunpack.c.h.b16 %v1002
    %v1824 = vunpack.c.l.b16 %v1003
    %v1825 = vunpack.c.l.b16 %v1004
    %v1826 = vunpack.c.h.b16 %v1004
    %v1827 = vunpack.c.l.b16 %v1005
    %v1828 = vunpack.c.l.b16 %v1006
    %v1829 = vunpack.c.h.b16 %v1006
    %v1830 = vunpack.c.l.b16 %v1007
    %v1831 = vunpack.c.l.b16 %v1008
    %v1832 = vunpack.c.h.b16 %v1008
    %v1833 = vunpack.c.l.b16 %v1009
    %v1834 = vunpack.c.l.b16 %v1010
    %v1835 = vunpack.c.h.b16 %v1010
    %v1836 = vunpack.c.l.b16 %v1011
    %v1837 = vunpack.c.l.b16 %v1012
    %v1838 = vunpack.c.h.b16 %v1012
    %v1839 = vunpack.c.l.b16 %v1013
    %v1840 = vunpack.c.l.b16 %v1014
    %v1841 = vunpack.c.h.b16 %v1014
    %v1842 = vunpack.c.l.b16 %v1015
    %v1843 = vunpack.c.l.b16 %v1016
    %v1844 = vunpack.c.h.b16 %v1016
    %v1845 = vunpack.c.l.b16 %v1017
    %v1846 = vunpack.c.l.b16 %v1018
    %v1847 = vunpack.c.h.b16 %v1018
    %v1848 = vunpack.c.l.b16 %v1019
    %v1849 = vunpack.c.l.b16 %v1020
    %v1850 = vunpack.c.h.b16 %v1020
    %v1851 = vunpack.c.l.b16 %v1021
    %v1852 = vunpack.c.l.b16 %v1022
    %v1853 = vunpack.c.h.b16 %v1022
    %v1854 = vunpack.c.l.b16 %v1023
    %v1855 = vunpack.c.l.b16 %v1024
    %v1856 = vunpack.c.h.b16 %v1024
    %v1857 = vunpack.c.l.b16 %v1025
    %v1858 = vunpack.c.l.b16 %v1026
    %v1859 = vunpack.c.h.b16 %v1026
    %v1860 = vunpack.c.l.b16 %v1027
    %v1861 = vunpack.c.l.b16 %v1028
    %v1862 = vunpack.c.h.b16 %v1028
    %v1863 = vunpack.c.l.b16 %v1029
    %v1864 = vunpack.c.l.b16 %v1030
    %v1865 = vunpack.c.h.b16 %v1030
    %v1866 = vunpack.c.l.b16 %v1031
    %v1867 = vunpack.c.l.b16 %v1032
    %v1868 = vunpack.c.h.b16 %v1032
    %v1869 = vunpack.c.l.b16 %v1033
    %v1870 = vunpack.c.l.b16 %v1034
    %v1871 = vunpack.c.h.b16 %v1034
    %v1872 = vunpack.c.l.b16 %v1035
    %v1873 = vunpack.c.l.b16 %v1036
    %v1874 = vunpack.c.h.b16 %v1036
    %v1875 = vunpack.c.l.b16 %v1037
    %v1876 = vunpack.c.l.b16 %v1038
    %v1877 = vunpack.c.h.b16 %v1038
    %v1878 = vunpack.c.l.b16 %v1039
    %v1879 = vunpack.c.l.b16 %v1040
    %v1880 = vunpack.c.h.b16 %v1040
    %v1881 = vunpack.c.l.b16 %v1041
    %v1882 = vunpack.c.l.b16 %v1042
    %v1883 = vunpack.c.h.b16 %v1042
    %v1884 = vunpack.c.l.b16 %v1043
    %v1885 = vunpack.c.l.b16 %v1044
    %v1886 = vunpack.c.h.b16 %v1044
    %v1887 = vunpack.c.l.b16 %v1045
    %v1888 = vunpack.c.l.b16 %v1046
    %v1889 = vunpack.c.h.b16 %v1046
    %v1890 = vunpack.c.l.b16 %v1047
    %v1891 = vunpack.c.l.b16 %v1048
    %v1892 = vunpack.c.h.b16 %v1048
    %v1893 = vunpack.c.l.b16 %v1049
    %v1894 = vunpack.c.l.b16 %v1050
    %v1895 = vunpack.c.h.b16 %v1050
    %v1896 = vunpack.c.l.b16 %v1051
    %v1897 = vunpack.c.l.b16 %v1052
    %v1898 = vunpack.c.h.b16 %v1052
    %v1899 = vunpack.c.l.b16 %v1053
    %v1900 = vunpack.c.l.b16 %v1054
    %v1901 = vunpack.c.h.b16 %v1054
    %v1902 = vunpack.c.l.b16 %v1055
    %v1903 = vunpack.c.l.b16 %v1056
    %v1904 = vunpack.c.h.b16 %v1056
    %v1905 = vunpack.c.l.b16 %v1057
    %v1906 = vunpack.c.l.b16 %v1058
    %v1907 = vunpack.c.h.b16 %v1058
    %v1908 = vunpack.c.l.b16 %v1059
    %v1909 = vunpack.c.l.b16 %v1060
    %v1910 = vunpack.c.h.b16 %v1060
    %v1911 = vunpack.c.l.b16 %v1061
    %v1912 = vunpack.c.l.b16 %v1062
    %v1913 = vunpack.c.h.b16 %v1062
    %v1914 = vunpack.c.l.b16 %v1063
    %v1915 = vunpack.c.l.b16 %v1064
    %v1916 = vunpack.c.h.b16 %v1064
    %v1917 = vunpack.c.l.b16 %v1065
    %v1918 = vunpack.c.l.b16 %v1066
    %v1919 = vunpack.c.h.b16 %v1066
    %v1920 = vunpack.c.l.b16 %v1067
    %v1921 = vunpack.c.l.b16 %v1068
    %v1922 = vunpack.c.h.b16 %v1068
    %v1923 = vunpack.c.l.b16 %v1069
    %v1924 = vunpack.c.l.b16 %v1070
    %v1925 = vunpack.c.h.b16 %v1070
    %v1926 = vunpack.c.l.b16 %v1071
    %v1927 = vunpack.c.l.b16 %v1072
    %v1928 = vunpack.c.h.b16 %v1072
    %v1929 = vunpack.c.l.b16 %v1073
    %v1930 = vunpack.c.l.b16 %v1074
    %v1931 = vunpack.c.h.b16 %v1074
    %v1932 = vunpack.c.l.b16 %v1075
    %v1933 = vunpack.c.l.b16 %v1076
    %v1934 = vunpack.c.h.b16 %v1076
    %v1935 = vunpack.c.l.b16 %v1077
    %v1936 = vunpack.c.l.b16 %v1078
    %v1937 = vunpack.c.h.b16 %v1078
    %v1938 = vunpack.c.l.b16 %v1079
    %v1939 = vunpack.c.l.b16 %v1080
    %v1940 = vunpack.c.h.b16 %v1080
    %v1941 = vunpack.c.l.b16 %v1081
    %v1942 = vunpack.c.l.b16 %v1082
    %v1943 = vunpack.c.h.b16 %v1082
    %v1944 = vunpack.c.l.b16 %v1083
    %v1945 = vunpack.c.l.b16 %v1084
    %v1946 = vunpack.c.h.b16 %v1084
    %v1947 = vunpack.c.l.b16 %v1085
    %v1948 = vunpack.c.l.b16 %v1086
    %v1949 = vunpack.c.h.b16 %v1086
    %v1950 = vunpack.c.l.b16 %v1087
    %v1951 = vunpack.c.l.b16 %v1088
    %v1952 = vunpack.c.h.b16 %v1088
    %v1953 = vunpack.c.l.b16 %v1089
    %v1954 = vunpack.c.l.b16 %v1090
    %v1955 = vunpack.c.h.b16 %v1090
    %v1956 = vunpack.c.l.b16 %v1091
    %v1957 = vunpack.c.l.b16 %v1092
    %v1958 = vunpack.c.h.b16 %v1092
    %v1959 = vunpack.c.l.b16 %v1093
    %v1960 = vunpack.c.l.b16 %v1094
    %v1961 = vunpack.c.h.b16 %v1094
    %v1962 = vunpack.c.l.b16 %v1095
    %v1963 = vunpack.c.l.b16 %v1096
    %v1964 = vunpack.c.h.b16 %v1096
    %v1965 = vunpack.c.l.b16 %v1097
    %v1966 = vunpack.c.l.b16 %v1098
    %v1967 = vunpack.c.h.b16 %v1098
    %v1968 = vunpack.c.l.b16 %v1099
    %v1969 = vunpack.c.l.b16 %v1100
    %v1970 = vunpack.c.h.b16 %v1100
    %v1971 = vunpack.c.l.b16 %v1101
    %v1972 = vunpack.c.l.b16 %v1102
    %v1973 = vunpack.c.h.b16 %v1102
    %v1974 = vunpack.c.l.b16 %v1103
    %v1975 = vunpack.c.l.b16 %v1104
    %v1976 = vunpack.c.h.b16 %v1104
    %v1977 = vunpack.c.l.b16 %v1105
    %v1978 = vunpack.c.l.b16 %v1106
    %v1979 = vunpack.c.h.b16 %v1106
    %v1980 = vunpack.c.l.b16 %v1107
    %v1981 = vunpack.c.l.b16 %v1108
    %v1982 = vunpack.c.h.b16 %v1108
    %v1983 = vunpack.c.l.b16 %v1109
    %v1984 = vunpack.c.l.b16 %v1110
    %v1985 = vunpack.c.h.b16 %v1110
    %v1986 = vunpack.c.l.b16 %v1111
    %v1987 = vunpack.c.l.b16 %v1112
    %v1988 = vunpack.c.h.b16 %v1112
    %v1989 = vunpack.c.l.b16 %v1113
    %v1990 = vunpack.c.l.b16 %v1114
    %v1991 = vunpack.c.h.b16 %v1114
    %v1992 = vunpack.c.l.b16 %v1115
    %v1993 = vunpack.c.l.b16 %v1116
    %v1994 = vunpack.c.h.b16 %v1116
    %v1995 = vunpack.c.l.b16 %v1117
    %v1996 = vunpack.c.l.b16 %v1118
    %v1997 = vunpack.c.h.b16 %v1118
    %v1998 = vunpack.c.l.b16 %v1119
    %v1999 = vunpack.c.l.b16 %v1120
    %v2000 = vunpack.c.h.b16 %v1120
    %v2001 = vunpack.c.l.b16 %v1121
    %v2002 = vunpack.c.l.b16 %v1122
    %v2003 = vunpack.c.h.b16 %v1122
    %v2004 = vunpack.c.l.b16 %v1123
    %v2005 = vunpack.c.l.b16 %v1124
    %v2006 = vunpack.c.h.b16 %v1124
    %v2007 = vunpack.c.l.b16 %v1125
    %v2008 = vunpack.c.l.b16 %v1126
    %v2009 = vunpack.c.h.b16 %v1126
    %v2010 = vunpack.c.l.b16 %v1127
    %v2011 = vunpack.c.l.b16 %v1128
    %v2012 = vunpack.c.h.b16 %v1128
    %v2013 = vunpack.c.l.b16 %v1129
    %v2014 = vunpack.c.l.b16 %v1130
    %v2015 = vunpack.c.h.b16 %v1130
    %v2016 = vunpack.c.l.b16 %v1131
    %v2017 = vunpack.c.l.b16 %v1132
    %v2018 = vunpack.c.h.b16 %v1132
    %v2019 = vunpack.c.l.b16 %v1133
    %v2020 = vunpack.c.l.b16 %v1134
    %v2021 = vunpack.c.h.b16 %v1134
    %v2022 = vunpack.c.l.b16 %v1135
    %v2023 = vunpack.c.l.b16 %v1136
    %v2024 = vunpack.c.h.b16 %v1136
    %v2025 = vunpack.c.l.b16 %v1137
    %v2026 = vunpack.c.l.b16 %v1138
    %v2027 = vunpack.c.h.b16 %v1138
    %v2028 = vunpack.c.l.b16 %v1139
    %v2029 = vunpack.c.l.b16 %v1140
    %v2030 = vunpack.c.h.b16 %v1140
    %v2031 = vunpack.c.l.b16 %v1141
    %v2032 = vunpack.c.l.b16 %v1142
    %v2033 = vunpack.c.h.b16 %v1142
    %v2034 = vunpack.c.l.b16 %v1143
    %v2035 = vunpack.c.l.b16 %v1144
    %v2036 = vunpack.c.h.b16 %v1144
    %v2037 = vunpack.c.l.b16 %v1145
    %v2038 = vunpack.c.l.b16 %v1146
    %v2039 = vunpack.c.h.b16 %v1146
    %v2040 = vunpack.c.l.b16 %v1147
    %v2041 = vunpack.c.l.b16 %v1148
    %v2042 = vunpack.c.h.b16 %v1148
    %v2043 = vunpack.c.l.b16 %v1149
    %v2044 = vunpack.c.l.b16 %v1150
    %v2045 = vunpack.c.h.b16 %v1150
    %v2046 = vunpack.c.l.b16 %v1151
    %v2047 = vunpack.c.l.b16 %v1152
    %v2048 = vunpack.c.h.b16 %v1152
    %v2049 = vunpack.c.l.b16 %v1153
    %v2050 = vunpack.c.l.b16 %v1154
    %v2051 = vunpack.c.h.b16 %v1154
    %v2052 = vunpack.c.l.b16 %v1155
    %v2053 = vunpack.c.l.b16 %v1156
    %v2054 = vunpack.c.h.b16 %v1156
    %v2055 = vunpack.c.l.b16 %v1157
    %v2056 = vunpack.c.l.b16 %v1158
    %v2057 = vunpack.c.h.b16 %v1158
    %v2058 = vunpack.c.l.b16 %v1159
    %v2059 = vunpack.c.l.b16 %v1160
    %v2060 = vunpack.c.h.b16 %v1160
    %v2061 = vunpack.c.l.b16 %v1161
    %v2062 = vunpack.c.l.b16 %v1162
    %v2063 = vunpack.c.h.b16 %v1162
    %v2064 = vunpack.c.l.b16 %v1163
    %v2065 = vunpack.c.l.b16 %v1164
    %v2066 = vunpack.c.h.b16 %v1164
    %v2067 = vunpack.c.l.b16 %v1165
    %v2068 = vunpack.c.l.b16 %v1166
    %v2069 = vunpack.c.h.b16 %v1166
    %v2070 = vunpack.c.l.b16 %v1167
    %v2071 = vunpack.c.l.b16 %v1168
    %v2072 = vunpack.c.h.b16 %v1168
    %v2073 = vunpack.c.l.b16 %v1169
    %v2074 = vunpack.c.l.b16 %v1170
    %v2075 = vunpack.c.h.b16 %v1170
    %v2076 = vunpack.c.l.b16 %v1171
    %v2077 = vunpack.c.l.b16 %v1172
    %v2078 = vunpack.c.h.b16 %v1172
    %v2079 = vunpack.c.l.b16 %v1173
    %v2080 = vunpack.c.l.b16 %v1174
    %v2081 = vunpack.c.h.b16 %v1174
    %v2082 = vunpack.c.l.b16 %v1175
    %v2083 = vunpack.c.l.b16 %v1176
    %v2084 = vunpack.c.h.b16 %v1176
    %v2085 = vunpack.c.l.b16 %v1177
    %v2086 = vunpack.c.l.b16 %v1178
    %v2087 = vunpack.c.h.b16 %v1178
    %v2088 = vunpack.c.l.b16 %v1179
    %v2089 = vunpack.c.l.b16 %v1180
    %v2090 = vunpack.c.h.b16 %v1180
    %v2091 = vunpack.c.l.b16 %v1181
    %v2092 = vunpack.c.l.b16 %v1182
    %v2093 = vunpack.c.h.b16 %v1182
    %v2094 = vunpack.c.l.b16 %v1183
    %v2095 = vunpack.c.l.b16 %v1184
    %v2096 = vunpack.c.h.b16 %v1184
    %v2097 = vunpack.c.l.b16 %v1185
    %v2098 = vunpack.c.l.b16 %v1186
    %v2099 = vunpack.c.h.b16 %v1186
    %v2100 = vunpack.c.l.b16 %v1187
    %v2101 = vunpack.c.l.b16 %v1188
    %v2102 = vunpack.c.h.b16 %v1188
    %v2103 = vunpack.c.l.b16 %v1189
    %v2104 = vunpack.c.l.b16 %v1190
    %v2105 = vunpack.c.h.b16 %v1190
    %v2106 = vunpack.c.l.b16 %v1191
    %v2107 = vunpack.c.l.b16 %v1192
    %v2108 = vunpack.c.h.b16 %v1192
    %v2109 = vunpack.c.l.b16 %v1193
    %v2110 = vunpack.c.l.b16 %v1194
    %v2111 = vunpack.c.h.b16 %v1194
    %v2112 = vunpack.c.l.b16 %v1195
    %v2113 = vunpack.c.l.b16 %v1196
    %v2114 = vunpack.c.h.b16 %v1196
    %v2115 = vunpack.c.l.b16 %v1197
    %v2116 = vunpack.c.l.b16 %v1198
    %v2117 = vunpack.c.h.b16 %v1198
    %v2118 = vunpack.c.l.b16 %v1199
    %v2119 = vunpack.c.l.b16 %v1200
    %v2120 = vunpack.c.h.b16 %v1200
    %v2121 = vunpack.c.l.b16 %v1201
    %v2122 = vunpack.c.l.b16 %v1202
    %v2123 = vunpack.c.h.b16 %v1202
    %v2124 = vunpack.c.l.b16 %v1203
    %v2125 = vunpack.c.l.b16 %v1204
    %v2126 = vunpack.c.h.b16 %v1204
    %v2127 = vunpack.c.l.b16 %v1205
    %v2128 = vunpack.c.l.b16 %v1206
    %v2129 = vunpack.c.h.b16 %v1206
    %v2130 = vunpack.c.l.b16 %v1207
    %v2131 = vunpack.c.l.b16 %v1208
    %v2132 = vunpack.c.h.b16 %v1208
    %v2133 = vunpack.c.l.b16 %v1209
    %v2134 = vunpack.c.l.b16 %v1210
    %v2135 = vunpack.c.h.b16 %v1210
    %v2136 = vunpack.c.l.b16 %v1211
    %v2137 = vunpack.c.l.b16 %v1212
    %v2138 = vunpack.c.h.b16 %v1212
    %v2139 = vunpack.c.l.b16 %v1213
    %v2140 = vunpack.c.l.b16 %v1214
    %v2141 = vunpack.c.h.b16 %v1214
    %v2142 = vunpack.c.l.b16 %v1215
    %v2143 = vunpack.c.l.b16 %v1216
    %v2144 = vunpack.c.h.b16 %v1216
    %v2145 = vunpack.c.l.b16 %v1217
    %v2146 = vunpack.c.l.b16 %v1218
    %v2147 = vunpack.c.h.b16 %v1218
    %v2148 = vunpack.c.l.b16 %v1219
    %v2149 = vunpack.c.l.b16 %v1220
    %v2150 = vunpack.c.h.b16 %v1220
    %v2151 = vunpack.c.l.b16 %v1221
    %v2152 = vunpack.c.l.b16 %v1222
    %v2153 = vunpack.c.h.b16 %v1222
    %v2154 = vunpack.c.l.b16 %v1223
    %v2155 = vunpack.c.l.b16 %v1224
    %v2156 = vunpack.c.h.b16 %v1224
    %v2157 = vunpack.c.l.b16 %v1225
    %v2158 = vunpack.c.l.b16 %v1226
    %v2159 = vunpack.c.h.b16 %v1226
    %v2160 = vunpack.c.l.b16 %v1227
    %v2161 = vunpack.c.l.b16 %v1228
    %v2162 = vunpack.c.h.b16 %v1228
    %v2163 = vunpack.c.l.b16 %v1229
    %v2164 = vunpack.c.l.b16 %v1230
    %v2165 = vunpack.c.h.b16 %v1230
    %v2166 = vunpack.c.l.b16 %v1231
    %v2167 = vunpack.c.l.b16 %v1232
    %v2168 = vunpack.c.h.b16 %v1232
    %v2169 = vunpack.c.l.b16 %v1233
    %v2170 = vunpack.c.l.b16 %v1234
    %v2171 = vunpack.c.h.b16 %v1234
    %v2172 = vunpack.c.l.b16 %v1235
    %v2173 = vunpack.c.l.b16 %v1236
    %v2174 = vunpack.c.h.b16 %v1236
    %v2175 = vunpack.c.l.b16 %v1237
    %v2176 = vunpack.c.l.b16 %v1238
    %v2177 = vunpack.c.h.b16 %v1238
    %v2178 = vunpack.c.l.b16 %v1239
    %v2179 = vunpack.c.l.b16 %v1240
    %v2180 = vunpack.c.h.b16 %v1240
    %v2181 = vunpack.c.l.b16 %v1241
    %v2182 = vunpack.c.l.b16 %v1242
    %v2183 = vunpack.c.h.b16 %v1242
    %v2184 = vunpack.c.l.b16 %v1243
    %v2185 = vunpack.c.l.b16 %v1244
    %v2186 = vunpack.c.h.b16 %v1244
    %v2187 = vunpack.c.l.b16 %v1245
    %v2188 = vunpack.c.l.b16 %v1246
    %v2189 = vunpack.c.h.b16 %v1246
    %v2190 = vunpack.c.l.b16 %v1247
    %v2191 = vunpack.c.l.b16 %v1248
    %v2192 = vunpack.c.h.b16 %v1248
    %v2193 = vunpack.c.l.b16 %v1249
    %v2194 = vunpack.c.l.b16 %v1250
    %v2195 = vunpack.c.h.b16 %v1250
    %v2196 = vunpack.c.l.b16 %v1251
    %v2197 = vunpack.c.l.b16 %v1252
    %v2198 = vunpack.c.h.b16 %v1252
    %v2199 = vunpack.c.l.b16 %v1253
    %v2200 = vunpack.c.l.b16 %v1254
    %v2201 = vunpack.c.h.b16 %v1254
    %v2202 = vunpack.c.l.b16 %v1255
    %v2203 = vunpack.c.l.b16 %v1256
    %v2204 = vunpack.c.h.b16 %v1256
    %v2205 = vunpack.c.l.b16 %v1257
    %v2206 = vunpack.c.l.b16 %v1258
    %v2207 = vunpack.c.h.b16 %v1258
    %v2208 = vunpack.c.l.b16 %v1259
    %v2209 = vunpack.c.l.b16 %v1260
    %v2210 = vunpack.c.h.b16 %v1260
    %v2211 = vunpack.c.l.b16 %v1261
    %v2212 = vunpack.c.l.b16 %v1262
    %v2213 = vunpack.c.h.b16 %v1262
    %v2214 = vunpack.c.l.b16 %v1263
    %v2215 = vunpack.c.l.b16 %v1264
    %v2216 = vunpack.c.h.b16 %v1264
    %v2217 = vunpack.c.l.b16 %v1265
    %v2218 = vunpack.c.l.b16 %v1266
    %v2219 = vunpack.c.h.b16 %v1266
    %v2220 = vunpack.c.l.b16 %v1267
    %v2221 = vunpack.c.l.b16 %v1268
    %v2222 = vunpack.c.h.b16 %v1268
    %v2223 = vunpack.c.l.b16 %v1269
    %v2224 = vunpack.c.l.b16 %v1270
    %v2225 = vunpack.c.h.b16 %v1270
    %v2226 = vunpack.c.l.b16 %v1271
    %v2227 = vunpack.c.l.b16 %v1272
    %v2228 = vunpack.c.h.b16 %v1272
    %v2229 = vunpack.c.l.b16 %v1273
    %v2230 = vunpack.c.l.b16 %v1274
    %v2231 = vunpack.c.h.b16 %v1274
    %v2232 = vunpack.c.l.b16 %v1275
    %v2233 = vunpack.c.l.b16 %v1276
    %v2234 = vunpack.c.h.b16 %v1276
    %v2235 = vunpack.c.l.b16 %v1277
    %v2236 = vunpack.c.l.b16 %v1278
    %v2237 = vunpack.c.h.b16 %v1278
    %v2238 = vunpack.c.l.b16 %v1279
    %v2239 = vunpack.c.l.b16 %v1280
    %v2240 = vunpack.c.h.b16 %v1280
    %v2241 = vunpack.c.l.b16 %v1281
    %v2242 = vunpack.c.l.b16 %v1282
    %v2243 = vunpack.c.h.b16 %v1282
    %v2244 = vunpack.c.l.b16 %v1283
    %v2245 = vunpack.c.l.b16 %v1284
    %v2246 = vunpack.c.h.b16 %v1284
    %v2247 = vunpack.c.l.b16 %v1285
    %v2248 = vunpack.c.l.b16 %v1286
    %v2249 = vunpack.c.h.b16 %v1286
    %v2250 = vunpack.c.l.b16 %v1287
    %v2251 = vunpack.c.l.b16 %v1288
    %v2252 = vunpack.c.h.b16 %v1288
    %v2253 = vunpack.c.l.b16 %v1289
    %v2254 = vunpack.c.l.b16 %v1290
    %v2255 = vunpack.c.h.b16 %v1290
    %v2256 = vunpack.c.l.b16 %v1291
    %v2257 = vunpack.c.l.b16 %v1292
    %v2258 = vunpack.c.h.b16 %v1292
    %v2259 = vunpack.c.l.b16 %v1293
    %v2260 = vunpack.c.l.b16 %v1294
    %v2261 = vunpack.c.h.b16 %v1294
    %v2262 = vunpack.c.l.b16 %v1295
    %v2263 = vunpack.c.l.b16 %v1296
    %v2264 = vunpack.c.h.b16 %v1296
    %v2265 = vunpack.c.l.b16 %v1297
    %v2266 = vunpack.c.l.b16 %v1298
    %v2267 = vunpack.c.h.b16 %v1298
    %v2268 = vunpack.c.l.b16 %v1299
    %v2269 = vunpack.c.l.b16 %v1300
    %v2270 = vunpack.c.h.b16 %v1300
    %v2271 = vunpack.c.l.b16 %v1301
    %v2272 = vunpack.c.l.b16 %v1302
    %v2273 = vunpack.c.h.b16 %v1302
    %v2274 = vunpack.c.l.b16 %v1303
    %v2275 = vunpack.c.l.b16 %v1304
    %v2276 = vunpack.c.h.b16 %v1304
    %v2277 = vunpack.c.l.b16 %v1305
    %v2278 = vunpack.c.l.b16 %v1306
    %v2279 = vunpack.c.h.b16 %v1306
    %v2280 = vunpack.c.l.b16 %v1307
    %v2281 = vunpack.c.l.b16 %v1308
    %v2282 = vunpack.c.h.b16 %v1308
    %v2283 = vunpack.c.l.b16 %v1309
    %v2284 = vunpack.c.l.b16 %v1310
    %v2285 = vunpack.c.h.b16 %v1310
    %v2286 = vunpack.c.l.b16 %v1311
    %v2287 = vunpack.c.l.b16 %v1312
    %v2288 = vunpack.c.h.b16 %v1312
    %v2289 = vunpack.c.l.b16 %v1313
    %v2290 = vunpack.c.l.b16 %v1314
    %v2291 = vunpack.c.h.b16 %v1314
    %v2292 = vunpack.c.l.b16 %v1315
    %v2293 = vunpack.c.l.b16 %v1316
    %v2294 = vunpack.c.h.b16 %v1316
    %v2295 = vunpack.c.l.b16 %v1317
    %v2296 = vunpack.c.l.b16 %v1318
    %v2297 = vunpack.c.h.b16 %v1318
    %v2298 = vunpack.c.l.b16 %v1319
    %v2299 = vunpack.c.l.b16 %v1320
    %v2300 = vunpack.c.h.b16 %v1320
    %v2301 = vunpack.c.l.b16 %v1321
    %v2302 = vunpack.c.l.b16 %v1322
    %v2303 = vunpack.c.h.b16 %v1322
    %v2304 = vunpack.c.l.b16 %v1323
    %v2305 = vunpack.c.l.b16 %v1324
    %v2306 = vunpack.c.h.b16 %v1324
    %v2307 = vunpack.c.l.b16 %v1325
    %v2308 = vunpack.c.l.b16 %v1326
    %v2309 = vunpack.c.h.b16 %v1326
    %v2310 = vunpack.c.l.b16 %v1327
    %v2311 = vunpack.c.l.b16 %v1328
    %v2312 = vunpack.c.h.b16 %v1328
    %v2313 = vunpack.c.l.b16 %v1329
    %v2314 = vunpack.c.l.b16 %v1330
    %v2315 = vunpack.c.h.b16 %v1330
    %v2316 = vunpack.c.l.b16 %v1331
    %v2317 = vunpack.c.l.b16 %v1332
    %v2318 = vunpack.c.h.b16 %v1332
    %v2319 = vunpack.c.l.b16 %v1333
    %v2320 = vunpack.c.l.b16 %v1334
    %v2321 = vunpack.c.h.b16 %v1334
    %v2322 = vunpack.c.l.b16 %v1335
    %v2323 = vunpack.c.l.b16 %v1336
    %v2324 = vunpack.c.h.b16 %v1336
    %v2325 = vunpack.c.l.b16 %v1337
    %v2326 = vunpack.c.l.b16 %v1338
    %v2327 = vunpack.c.h.b16 %v1338
    %v2328 = vunpack.c.l.b16 %v1339
    %v2329 = vunpack.c.l.b16 %v1340
    %v2330 = vunpack.c.h.b16 %v1340
    %v2331 = vunpack.c.l.b16 %v1341
    %v2332 = vunpack.c.l.b16 %v1342
    %v2333 = vunpack.c.h.b16 %v1342
    %v2334 = vunpack.c.l.b16 %v1343
    %v2335 = vunpack.c.l.b16 %v1344
    %v2336 = vunpack.c.h.b16 %v1344
    %v2337 = vunpack.c.l.b16 %v1345
    %v2338 = vunpack.c.l.b16 %v1346
    %v2339 = vunpack.c.h.b16 %v1346
    %v2340 = vunpack.c.l.b16 %v1347
    %v2341 = vunpack.c.l.b16 %v1348
    %v2342 = vunpack.c.h.b16 %v1348
    %v2343 = vunpack.c.l.b16 %v1349
    %v2344 = vunpack.c.l.b16 %v1350
    %v2345 = vunpack.c.h.b16 %v1350
    %v2346 = vunpack.c.l.b16 %v1351
    %v2347 = vunpack.c.l.b16 %v1352
    %v2348 = vunpack.c.h.b16 %v1352
    %v2349 = vunpack.c.l.b16 %v1353
    %v2350 = vunpack.c.l.b16 %v1354
    %v2351 = vunpack.c.h.b16 %v1354
    %v2352 = vunpack.c.l.b16 %v1355
    %v2353 = vunpack.c.l.b16 %v1356
    %v2354 = vunpack.c.h.b16 %v1356
    %v2355 = vunpack.c.l.b16 %v1357
    %v2356 = vunpack.c.l.b16 %v1358
    %v2357 = vunpack.c.h.b16 %v1358
    %v2358 = vunpack.c.l.b16 %v1359
    %v2359 = vunpack.c.l.b16 %v1360
    %v2360 = vunpack.c.h.b16 %v1360
    %v2361 = vunpack.c.l.b16 %v1361
    %v2362 = vpack.c.b16 %v1765, %v1762
    %v2363 = vpack.c.b16 %v1766, %v1763
    %v2364 = vpack.c.b16 %v1767, %v1764
    %v2365 = vpack.c.b16 %v1771, %v1768
    %v2366 = vpack.c.b16 %v1772, %v1769
    %v2367 = vpack.c.b16 %v1773, %v1770
    %v2368 = vpack.c.b16 %v1777, %v1774
    %v2369 = vpack.c.b16 %v1778, %v1775
    %v2370 = vpack.c.b16 %v1779, %v1776
    %v2371 = vpack.c.b16 %v1783, %v1780
    %v2372 = vpack.c.b16 %v1784, %v1781
    %v2373 = vpack.c.b16 %v1785, %v1782
    %v2374 = vpack.c.b16 %v1789, %v1786
    %v2375 = vpack.c.b16 %v1790, %v1787
    %v2376 = vpack.c.b16 %v1791, %v1788
    %v2377 = vpack.c.b16 %v1795, %v1792
    %v2378 = vpack.c.b16 %v1796, %v1793
    %v2379 = vpack.c.b16 %v1797, %v1794
    %v2380 = vpack.c.b16 %v1801, %v1798
    %v2381 = vpack.c.b16 %v1802, %v1799
    %v2382 = vpack.c.b16 %v1803, %v1800
    %v2383 = vpack.c.b16 %v1807, %v1804
    %v2384 = vpack.c.b16 %v1808, %v1805
    %v2385 = vpack.c.b16 %v1809, %v1806
    %v2386 = vpack.c.b16 %v1813, %v1810
    %v2387 = vpack.c.b16 %v1814, %v1811
    %v2388 = vpack.c.b16 %v1815, %v1812
    %v2389 = vpack.c.b16 %v1819, %v1816
    %v2390 = vpack.c.b16 %v1820, %v1817
    %v2391 = vpack.c.b16 %v1821, %v1818
    %v2392 = vpack.c.b16 %v1825, %v1822
    %v2393 = vpack.c.b16 %v1826, %v1823
    %v2394 = vpack.c.b16 %v1827, %v1824
    %v2395 = vpack.c.b16 %v1831, %v1828
    %v2396 = vpack.c.b16 %v1832, %v1829
    %v2397 = vpack.c.b16 %v1833, %v1830
    %v2398 = vpack.c.b16 %v1837, %v1834
    %v2399 = vpack.c.b16 %v1838, %v1835
    %v2400 = vpack.c.b16 %v1839, %v1836
    %v2401 = vpack.c.b16 %v1843, %v1840
    %v2402 = vpack.c.b16 %v1844, %v1841
    %v2403 = vpack.c.b16 %v1845, %v1842
    %v2404 = vpack.c.b16 %v1849, %v1846
    %v2405 = vpack.c.b16 %v1850, %v1847
    %v2406 = vpack.c.b16 %v1851, %v1848
    %v2407 = vpack.c.b16 %v1855, %v1852
    %v2408 = vpack.c.b16 %v1856, %v1853
    %v2409 = vpack.c.b16 %v1857, %v1854
    %v2410 = vpack.c.b16 %v1861, %v1858
    %v2411 = vpack.c.b16 %v1862, %v1859
    %v2412 = vpack.c.b16 %v1863, %v1860
    %v2413 = vpack.c.b16 %v1867, %v1864
    %v2414 = vpack.c.b16 %v1868, %v1865
    %v2415 = vpack.c.b16 %v1869, %v1866
    %v2416 = vpack.c.b16 %v1873, %v1870
    %v2417 = vpack.c.b16 %v1874, %v1871
    %v2418 = vpack.c.b16 %v1875, %v1872
    %v2419 = vpack.c.b16 %v1879, %v1876
    %v2420 = vpack.c.b16 %v1880, %v1877
    %v2421 = vpack.c.b16 %v1881, %v1878
    %v2422 = vpack.c.b16 %v1885, %v1882
    %v2423 = vpack.c.b16 %v1886, %v1883
    %v2424 = vpack.c.b16 %v1887, %v1884
    %v2425 = vpack.c.b16 %v1891, %v1888
    %v2426 = vpack.c.b16 %v1892, %v1889
    %v2427 = vpack.c.b16 %v1893, %v1890
    %v2428 = vpack.c.b16 %v1897, %v1894
    %v2429 = vpack.c.b16 %v1898, %v1895
    %v2430 = vpack.c.b16 %v1899, %v1896
    %v2431 = vpack.c.b16 %v1903, %v1900
    %v2432 = vpack.c.b16 %v1904, %v1901
    %v2433 = vpack.c.b16 %v1905, %v1902
    %v2434 = vpack.c.b16 %v1909, %v1906
    %v2435 = vpack.c.b16 %v1910, %v1907
    %v2436 = vpack.c.b16 %v1911, %v1908
    %v2437 = vpack.c.b16 %v1915, %v1912
    %v2438 = vpack.c.b16 %v1916, %v1913
    %v2439 = vpack.c.b16 %v1917, %v1914
    %v2440 = vpack.c.b16 %v1921, %v1918
    %v2441 = vpack.c.b16 %v1922, %v1919
    %v2442 = vpack.c.b16 %v1923, %v1920
    %v2443 = vpack.c.b16 %v1927, %v1924
    %v2444 = vpack.c.b16 %v1928, %v1925
    %v2445 = vpack.c.b16 %v1929, %v1926
    %v2446 = vpack.c.b16 %v1933, %v1930
    %v2447 = vpack.c.b16 %v1934, %v1931
    %v2448 = vpack.c.b16 %v1935, %v1932
    %v2449 = vpack.c.b16 %v1939, %v1936
    %v2450 = vpack.c.b16 %v1940, %v1937
    %v2451 = vpack.c.b16 %v1941, %v1938
    %v2452 = vpack.c.b16 %v1945, %v1942
    %v2453 = vpack.c.b16 %v1946, %v1943
    %v2454 = vpack.c.b16 %v1947, %v1944
    %v2455 = vpack.c.b16 %v1951, %v1948
    %v2456 = vpack.c.b16 %v1952, %v1949
    %v2457 = vpack.c.b16 %v1953, %v1950
    %v2458 = vpack.c.b16 %v1957, %v1954
    %v2459 = vpack.c.b16 %v1958, %v1955
    %v2460 = vpack.c.b16 %v1959, %v1956
    %v2461 = vpack.c.b16 %v1963, %v1960
    %v2462 = vpack.c.b16 %v1964, %v1961
    %v2463 = vpack.c.b16 %v1965, %v1962
    %v2464 = vpack.c.b16 %v1969, %v1966
    %v2465 = vpack.c.b16 %v1970, %v1967
    %v2466 = vpack.c.b16 %v1971, %v1968
    %v2467 = vpack.c.b16 %v1975, %v1972
    %v2468 = vpack.c.b16 %v1976, %v1973
    %v2469 = vpack.c.b16 %v1977, %v1974
    %v2470 = vpack.c.b16 %v1981, %v1978
    %v2471 = vpack.c.b16 %v1982, %v1979
    %v2472 = vpack.c.b16 %v1983, %v1980
    %v2473 = vpack.c.b16 %v1987, %v1984
    %v2474 = vpack.c.b16 %v1988, %v1985
    %v2475 = vpack.c.b16 %v1989, %v1986
    %v2476 = vpack.c.b16 %v1993, %v1990
    %v2477 = vpack.c.b16 %v1994, %v1991
    %v2478 = vpack.c.b16 %v1995, %v1992
    %v2479 = vpack.c.b16 %v1999, %v1996
    %v2480 = vpack.c.b16 %v2000, %v1997
    %v2481 = vpack.c.b16 %v2001, %v1998
    %v2482 = vpack.c.b16 %v2005, %v2002
    %v2483 = vpack.c.b16 %v2006, %v2003
    %v2484 = vpack.c.b16 %v2007, %v2004
    %v2485 = vpack.c.b16 %v2011, %v2008
    %v2486 = vpack.c.b16 %v2012, %v2009
    %v2487 = vpack.c.b16 %v2013, %v2010
    %v2488 = vpack.c.b16 %v2017, %v2014
    %v2489 = vpack.c.b16 %v2018, %v2015
    %v2490 = vpack.c.b16 %v2019, %v2016
    %v2491 = vpack.c.b16 %v2023, %v2020
    %v2492 = vpack.c.b16 %v2024, %v2021
    %v2493 = vpack.c.b16 %v2025, %v2022
    %v2494 = vpack.c.b16 %v2029, %v2026
    %v2495 = vpack.c.b16 %v2030, %v2027
    %v2496 = vpack.c.b16 %v2031, %v2028
    %v2497 = vpack.c.b16 %v2035, %v2032
    %v2498 = vpack.c.b16 %v2036, %v2033
    %v2499 = vpack.c.b16 %v2037, %v2034
    %v2500 = vpack.c.b16 %v2041, %v2038
    %v2501 = vpack.c.b16 %v2042, %v2039
    %v2502 = vpack.c.b16 %v2043, %v2040
    %v2503 = vpack.c.b16 %v2047, %v2044
    %v2504 = vpack.c.b16 %v2048, %v2045
    %v2505 = vpack.c.b16 %v2049, %v2046
    %v2506 = vpack.c.b16 %v2053, %v2050
    %v2507 = vpack.c.b16 %v2054, %v2051
    %v2508 = vpack.c.b16 %v2055, %v2052
    %v2509 = vpack.c.b16 %v2059, %v2056
    %v2510 = vpack.c.b16 %v2060, %v2057
    %v2511 = vpack.c.b16 %v2061, %v2058
    %v2512 = vpack.c.b16 %v2065, %v2062
    %v2513 = vpack.c.b16 %v2066, %v2063
    %v2514 = vpack.c.b16 %v2067, %v2064
    %v2515 = vpack.c.b16 %v2071, %v2068
    %v2516 = vpack.c.b16 %v2072, %v2069
    %v2517 = vpack.c.b16 %v2073, %v2070
    %v2518 = vpack.c.b16 %v2077, %v2074
    %v2519 = vpack.c.b16 %v2078, %v2075
    %v2520 = vpack.c.b16 %v2079, %v2076
    %v2521 = vpack.c.b16 %v2083, %v2080
    %v2522 = vpack.c.b16 %v2084, %v2081
    %v2523 = vpack.c.b16 %v2085, %v2082
    %v2524 = vpack.c.b16 %v2089, %v2086
    %v2525 = vpack.c.b16 %v2090, %v2087
    %v2526 = vpack.c.b16 %v2091, %v2088
    %v2527 = vpack.c.b16 %v2095, %v2092
    %v2528 = vpack.c.b16 %v2096, %v2093
    %v2529 = vpack.c.b16 %v2097, %v2094
    %v2530 = vpack.c.b16 %v2101, %v2098
    %v2531 = vpack.c.b16 %v2102, %v2099
    %v2532 = vpack.c.b16 %v2103, %v2100
    %v2533 = vpack.c.b16 %v2107, %v2104
    %v2534 = vpack.c.b16 %v2108, %v2105
    %v2535 = vpack.c.b16 %v2109, %v2106
    %v2536 = vpack.c.b16 %v2113, %v2110
    %v2537 = vpack.c.b16 %v2114, %v2111
    %v2538 = vpack.c.b16 %v2115, %v2112
    %v2539 = vpack.c.b16 %v2119, %v2116
    %v2540 = vpack.c.b16 %v2120, %v2117
    %v2541 = vpack.c.b16 %v2121, %v2118
    %v2542 = vpack.c.b16 %v2125, %v2122
    %v2543 = vpack.c.b16 %v2126, %v2123
    %v2544 = vpack.c.b16 %v2127, %v2124
    %v2545 = vpack.c.b16 %v2131, %v2128
    %v2546 = vpack.c.b16 %v2132, %v2129
    %v2547 = vpack.c.b16 %v2133, %v2130
    %v2548 = vpack.c.b16 %v2137, %v2134
    %v2549 = vpack.c.b16 %v2138, %v2135
    %v2550 = vpack.c.b16 %v2139, %v2136
    %v2551 = vpack.c.b16 %v2143, %v2140
    %v2552 = vpack.c.b16 %v2144, %v2141
    %v2553 = vpack.c.b16 %v2145, %v2142
    %v2554 = vpack.c.b16 %v2149, %v2146
    %v2555 = vpack.c.b16 %v2150, %v2147
    %v2556 = vpack.c.b16 %v2151, %v2148
    %v2557 = vpack.c.b16 %v2155, %v2152
    %v2558 = vpack.c.b16 %v2156, %v2153
    %v2559 = vpack.c.b16 %v2157, %v2154
    %v2560 = vpack.c.b16 %v2161, %v2158
    %v2561 = vpack.c.b16 %v2162, %v2159
    %v2562 = vpack.c.b16 %v2163, %v2160
    %v2563 = vpack.c.b16 %v2167, %v2164
    %v2564 = vpack.c.b16 %v2168, %v2165
    %v2565 = vpack.c.b16 %v2169, %v2166
    %v2566 = vpack.c.b16 %v2173, %v2170
    %v2567 = vpack.c.b16 %v2174, %v2171
    %v2568 = vpack.c.b16 %v2175, %v2172
    %v2569 = vpack.c.b16 %v2179, %v2176
    %v2570 = vpack.c.b16 %v2180, %v2177
    %v2571 = vpack.c.b16 %v2181, %v2178
    %v2572 = vpack.c.b16 %v2185, %v2182
    %v2573 = vpack.c.b16 %v2186, %v2183
    %v2574 = vpack.c.b16 %v2187, %v2184
    %v2575 = vpack.c.b16 %v2191, %v2188
    %v2576 = vpack.c.b16 %v2192, %v2189
    %v2577 = vpack.c.b16 %v2193, %v2190
    %v2578 = vpack.c.b16 %v2197, %v2194
    %v2579 = vpack.c.b16 %v2198, %v2195
    %v2580 = vpack.c.b16 %v2199, %v2196
    %v2581 = vpack.c.b16 %v2203, %v2200
    %v2582 = vpack.c.b16 %v2204, %v2201
    %v2583 = vpack.c.b16 %v2205, %v2202
    %v2584 = vpack.c.b16 %v2209, %v2206
    %v2585 = vpack.c.b16 %v2210, %v2207
    %v2586 = vpack.c.b16 %v2211, %v2208
    %v2587 = vpack.c.b16 %v2215, %v2212
    %v2588 = vpack.c.b16 %v2216, %v2213
    %v2589 = vpack.c.b16 %v2217, %v2214
    %v2590 = vpack.c.b16 %v2221, %v2218
    %v2591 = vpack.c.b16 %v2222, %v2219
    %v2592 = vpack.c.b16 %v2223, %v2220
    %v2593 = vpack.c.b16 %v2227, %v2224
    %v2594 = vpack.c.b16 %v2228, %v2225
    %v2595 = vpack.c.b16 %v2229, %v2226
    %v2596 = vpack.c.b16 %v2233, %v2230
    %v2597 = vpack.c.b16 %v2234, %v2231
    %v2598 = vpack.c.b16 %v2235, %v2232
    %v2599 = vpack.c.b16 %v2239, %v2236
    %v2600 = vpack.c.b16 %v2240, %v2237
    %v2601 = vpack.c.b16 %v2241, %v2238
    %v2602 = vpack.c.b16 %v2245, %v2242
    %v2603 = vpack.c.b16 %v2246, %v2243
    %v2604 = vpack.c.b16 %v2247, %v2244
    %v2605 = vpack.c.b16 %v2251, %v2248
    %v2606 = vpack.c.b16 %v2252, %v2249
    %v2607 = vpack.c.b16 %v2253, %v2250
    %v2608 = vpack.c.b16 %v2257, %v2254
    %v2609 = vpack.c.b16 %v2258, %v2255
    %v2610 = vpack.c.b16 %v2259, %v2256
    %v2611 = vpack.c.b16 %v2263, %v2260
    %v2612 = vpack.c.b16 %v2264, %v2261
    %v2613 = vpack.c.b16 %v2265, %v2262
    %v2614 = vpack.c.b16 %v2269, %v2266
    %v2615 = vpack.c.b16 %v2270, %v2267
    %v2616 = vpack.c.b16 %v2271, %v2268
    %v2617 = vpack.c.b16 %v2275, %v2272
    %v2618 = vpack.c.b16 %v2276, %v2273
    %v2619 = vpack.c.b16 %v2277, %v2274
    %v2620 = vpack.c.b16 %v2281, %v2278
    %v2621 = vpack.c.b16 %v2282, %v2279
    %v2622 = vpack.c.b16 %v2283, %v2280
    %v2623 = vpack.c.b16 %v2287, %v2284
    %v2624 = vpack.c.b16 %v2288, %v2285
    %v2625 = vpack.c.b16 %v2289, %v2286
    %v2626 = vpack.c.b16 %v2293, %v2290
    %v2627 = vpack.c.b16 %v2294, %v2291
    %v2628 = vpack.c.b16 %v2295, %v2292
    %v2629 = vpack.c.b16 %v2299, %v2296
    %v2630 = vpack.c.b16 %v2300, %v2297
    %v2631 = vpack.c.b16 %v2301, %v2298
    %v2632 = vpack.c.b16 %v2305, %v2302
    %v2633 = vpack.c.b16 %v2306, %v2303
    %v2634 = vpack.c.b16 %v2307, %v2304
    %v2635 = vpack.c.b16 %v2311, %v2308
    %v2636 = vpack.c.b16 %v2312, %v2309
    %v2637 = vpack.c.b16 %v2313, %v2310
    %v2638 = vpack.c.b16 %v2317, %v2314
    %v2639 = vpack.c.b16 %v2318, %v2315
    %v2640 = vpack.c.b16 %v2319, %v2316
    %v2641 = vpack.c.b16 %v2323, %v2320
    %v2642 = vpack.c.b16 %v2324, %v2321
    %v2643 = vpack.c.b16 %v2325, %v2322
    %v2644 = vpack.c.b16 %v2329, %v2326
    %v2645 = vpack.c.b16 %v2330, %v2327
    %v2646 = vpack.c.b16 %v2331, %v2328
    %v2647 = vpack.c.b16 %v2335, %v2332
    %v2648 = vpack.c.b16 %v2336, %v2333
    %v2649 = vpack.c.b16 %v2337, %v2334
    %v2650 = vpack.c.b16 %v2341, %v2338
    %v2651 = vpack.c.b16 %v2342, %v2339
    %v2652 = vpack.c.b16 %v2343, %v2340
    %v2653 = vpack.c.b16 %v2347, %v2344
    %v2654 = vpack.c.b16 %v2348, %v2345
    %v2655 = vpack.c.b16 %v2349, %v2346
    %v2656 = vpack.c.b16 %v2353, %v2350
    %v2657 = vpack.c.b16 %v2354, %v2351
    %v2658 = vpack.c.b16 %v2355, %v2352
    %v2659 = vpack.c.b16 %v2359, %v2356
    %v2660 = vpack.c.b16 %v2360, %v2357
    %v2661 = vpack.c.b16 %v2361, %v2358
    %vm2962 = vcmask 523264
    %v2964 = vsel %vm2962, %v961, 0
    %2966 = vmatpush.bf16.msra.mxu0 %v2383
    %2967 = vmatpush.bf16.msra.mxu0 %v2380
    %2968 = vmatpush.bf16.msra.mxu0 %v2377
    %2969 = vmatpush.bf16.msra.mxu0 %v2374
    %2970 = vmatpush.bf16.msra.mxu0 %v2371
    %2971 = vmatpush.bf16.msra.mxu0 %v2368
    %2972 = vmatpush.bf16.msra.mxu0 %v2365
    %2973 = vmatpush.bf16.msra.mxu0 %v2362
    %2974 = vmatmul.bf16.gmra.mxu0 %v949
    %v2975 = vpop.f32.mrf.mxu0
    %v2976 = vadd.f32 0.0, %v2975
    %v2977 = vpop.f32.mrf.mxu0
    %2978 = vdwg.mxu0
    %2979 = vmatpush.bf16.msra.mxu0 %v2407
    %2980 = vmatpush.bf16.msra.mxu0 %v2404
    %2981 = vmatpush.bf16.msra.mxu0 %v2401
    %2982 = vmatpush.bf16.msra.mxu0 %v2398
    %2983 = vmatpush.bf16.msra.mxu0 %v2395
    %2984 = vmatpush.bf16.msra.mxu0 %v2392
    %2985 = vmatpush.bf16.msra.mxu0 %v2389
    %2986 = vmatpush.bf16.msra.mxu0 %v2386
    %2987 = vmatmul.bf16.gmra.mxu0 %v950
    %v2988 = vpop.f32.mrf.mxu0
    %v2989 = vadd.f32 %v2976, %v2988
    %v2990 = vpop.f32.mrf.mxu0
    %2991 = vdwg.mxu0
    %2992 = vmatpush.bf16.msra.mxu0 %v2431
    %2993 = vmatpush.bf16.msra.mxu0 %v2428
    %2994 = vmatpush.bf16.msra.mxu0 %v2425
    %2995 = vmatpush.bf16.msra.mxu0 %v2422
    %2996 = vmatpush.bf16.msra.mxu0 %v2419
    %2997 = vmatpush.bf16.msra.mxu0 %v2416
    %2998 = vmatpush.bf16.msra.mxu0 %v2413
    %2999 = vmatpush.bf16.msra.mxu0 %v2410
    %3000 = vmatmul.bf16.gmra.mxu0 %v951
    %v3001 = vpop.f32.mrf.mxu0
    %v3002 = vadd.f32 %v2989, %v3001
    %v3003 = vpop.f32.mrf.mxu0
    %3004 = vdwg.mxu0
    %3005 = vmatpush.bf16.msra.mxu0 %v2455
    %3006 = vmatpush.bf16.msra.mxu0 %v2452
    %3007 = vmatpush.bf16.msra.mxu0 %v2449
    %3008 = vmatpush.bf16.msra.mxu0 %v2446
    %3009 = vmatpush.bf16.msra.mxu0 %v2443
    %3010 = vmatpush.bf16.msra.mxu0 %v2440
    %3011 = vmatpush.bf16.msra.mxu0 %v2437
    %3012 = vmatpush.bf16.msra.mxu0 %v2434
    %3013 = vmatmul.bf16.gmra.mxu0 %v952
    %v3014 = vpop.f32.mrf.mxu0
    %v3015 = vadd.f32 %v3002, %v3014
    %v3016 = vpop.f32.mrf.mxu0
    %3017 = vdwg.mxu0
    %3018 = vmatpush.bf16.msra.mxu0 %v2479
    %3019 = vmatpush.bf16.msra.mxu0 %v2476
    %3020 = vmatpush.bf16.msra.mxu0 %v2473
    %3021 = vmatpush.bf16.msra.mxu0 %v2470
    %3022 = vmatpush.bf16.msra.mxu0 %v2467
    %3023 = vmatpush.bf16.msra.mxu0 %v2464
    %3024 = vmatpush.bf16.msra.mxu0 %v2461
    %3025 = vmatpush.bf16.msra.mxu0 %v2458
    %3026 = vmatmul.bf16.gmra.mxu0 %v953
    %v3027 = vpop.f32.mrf.mxu0
    %v3028 = vadd.f32 %v3015, %v3027
    %v3029 = vpop.f32.mrf.mxu0
    %3030 = vdwg.mxu0
    %3031 = vmatpush.bf16.msra.mxu0 %v2503
    %3032 = vmatpush.bf16.msra.mxu0 %v2500
    %3033 = vmatpush.bf16.msra.mxu0 %v2497
    %3034 = vmatpush.bf16.msra.mxu0 %v2494
    %3035 = vmatpush.bf16.msra.mxu0 %v2491
    %3036 = vmatpush.bf16.msra.mxu0 %v2488
    %3037 = vmatpush.bf16.msra.mxu0 %v2485
    %3038 = vmatpush.bf16.msra.mxu0 %v2482
    %3039 = vmatmul.bf16.gmra.mxu0 %v954
    %v3040 = vpop.f32.mrf.mxu0
    %v3041 = vadd.f32 %v3028, %v3040
    %v3042 = vpop.f32.mrf.mxu0
    %3043 = vdwg.mxu0
    %3044 = vmatpush.bf16.msra.mxu0 %v2527
    %3045 = vmatpush.bf16.msra.mxu0 %v2524
    %3046 = vmatpush.bf16.msra.mxu0 %v2521
    %3047 = vmatpush.bf16.msra.mxu0 %v2518
    %3048 = vmatpush.bf16.msra.mxu0 %v2515
    %3049 = vmatpush.bf16.msra.mxu0 %v2512
    %3050 = vmatpush.bf16.msra.mxu0 %v2509
    %3051 = vmatpush.bf16.msra.mxu0 %v2506
    %3052 = vmatmul.bf16.gmra.mxu0 %v955
    %v3053 = vpop.f32.mrf.mxu0
    %v3054 = vadd.f32 %v3041, %v3053
    %v3055 = vpop.f32.mrf.mxu0
    %3056 = vdwg.mxu0
    %3057 = vmatpush.bf16.msra.mxu0 %v2551
    %3058 = vmatpush.bf16.msra.mxu0 %v2548
    %3059 = vmatpush.bf16.msra.mxu0 %v2545
    %3060 = vmatpush.bf16.msra.mxu0 %v2542
    %3061 = vmatpush.bf16.msra.mxu0 %v2539
    %3062 = vmatpush.bf16.msra.mxu0 %v2536
    %3063 = vmatpush.bf16.msra.mxu0 %v2533
    %3064 = vmatpush.bf16.msra.mxu0 %v2530
    %3065 = vmatmul.bf16.gmra.mxu0 %v956
    %v3066 = vpop.f32.mrf.mxu0
    %v3067 = vadd.f32 %v3054, %v3066
    %v3068 = vpop.f32.mrf.mxu0
    %3069 = vdwg.mxu0
    %3070 = vmatpush.bf16.msra.mxu0 %v2575
    %3071 = vmatpush.bf16.msra.mxu0 %v2572
    %3072 = vmatpush.bf16.msra.mxu0 %v2569
    %3073 = vmatpush.bf16.msra.mxu0 %v2566
    %3074 = vmatpush.bf16.msra.mxu0 %v2563
    %3075 = vmatpush.bf16.msra.mxu0 %v2560
    %3076 = vmatpush.bf16.msra.mxu0 %v2557
    %3077 = vmatpush.bf16.msra.mxu0 %v2554
    %3078 = vmatmul.bf16.gmra.mxu0 %v957
    %v3079 = vpop.f32.mrf.mxu0
    %v3080 = vadd.f32 %v3067, %v3079
    %v3081 = vpop.f32.mrf.mxu0
    %3082 = vdwg.mxu0
    %3083 = vmatpush.bf16.msra.mxu0 %v2599
    %3084 = vmatpush.bf16.msra.mxu0 %v2596
    %3085 = vmatpush.bf16.msra.mxu0 %v2593
    %3086 = vmatpush.bf16.msra.mxu0 %v2590
    %3087 = vmatpush.bf16.msra.mxu0 %v2587
    %3088 = vmatpush.bf16.msra.mxu0 %v2584
    %3089 = vmatpush.bf16.msra.mxu0 %v2581
    %3090 = vmatpush.bf16.msra.mxu0 %v2578
    %3091 = vmatmul.bf16.gmra.mxu0 %v958
    %v3092 = vpop.f32.mrf.mxu0
    %v3093 = vadd.f32 %v3080, %v3092
    %v3094 = vpop.f32.mrf.mxu0
    %3095 = vdwg.mxu0
    %3096 = vmatpush.bf16.msra.mxu0 %v2623
    %3097 = vmatpush.bf16.msra.mxu0 %v2620
    %3098 = vmatpush.bf16.msra.mxu0 %v2617
    %3099 = vmatpush.bf16.msra.mxu0 %v2614
    %3100 = vmatpush.bf16.msra.mxu0 %v2611
    %3101 = vmatpush.bf16.msra.mxu0 %v2608
    %3102 = vmatpush.bf16.msra.mxu0 %v2605
    %3103 = vmatpush.bf16.msra.mxu0 %v2602
    %3104 = vmatmul.bf16.gmra.mxu0 %v959
    %v3105 = vpop.f32.mrf.mxu0
    %v3106 = vadd.f32 %v3093, %v3105
    %v3107 = vpop.f32.mrf.mxu0
    %3108 = vdwg.mxu0
    %3109 = vmatpush.bf16.msra.mxu0 %v2647
    %3110 = vmatpush.bf16.msra.mxu0 %v2644
    %3111 = vmatpush.bf16.msra.mxu0 %v2641
    %3112 = vmatpush.bf16.msra.mxu0 %v2638
    %3113 = vmatpush.bf16.msra.mxu0 %v2635
    %3114 = vmatpush.bf16.msra.mxu0 %v2632
    %3115 = vmatpush.bf16.msra.mxu0 %v2629
    %3116 = vmatpush.bf16.msra.mxu0 %v2626
    %3117 = vmatmul.bf16.gmra.mxu0 %v960
    %v3118 = vpop.f32.mrf.mxu0
    %v3119 = vadd.f32 %v3106, %v3118
    %v3120 = vpop.f32.mrf.mxu0
    %3121 = vdwg.mxu0
    %3122 = vmatpush.bf16.msra.mxu0 0
    %3123 = vmatpush.bf16.msra.mxu0 0
    %3124 = vmatpush.bf16.msra.mxu0 0
    %3125 = vmatpush.bf16.msra.mxu0 0
    %3126 = vmatpush.bf16.msra.mxu0 %v2659
    %3127 = vmatpush.bf16.msra.mxu0 %v2656
    %3128 = vmatpush.bf16.msra.mxu0 %v2653
    %3129 = vmatpush.bf16.msra.mxu0 %v2650
    %3130 = vmatmul.bf16.gmra.mxu0 %v2964
    %v3131 = vpop.f32.mrf.mxu0
    %v3132 = vadd.f32 %v3119, %v3131
    %v3133 = vpop.f32.mrf.mxu0
    %3134 = vdwg.mxu0
    %3135 = vmatpush.bf16.msra.mxu0 %v2384
    %3136 = vmatpush.bf16.msra.mxu0 %v2381
    %3137 = vmatpush.bf16.msra.mxu0 %v2378
    %3138 = vmatpush.bf16.msra.mxu0 %v2375
    %3139 = vmatpush.bf16.msra.mxu0 %v2372
    %3140 = vmatpush.bf16.msra.mxu0 %v2369
    %3141 = vmatpush.bf16.msra.mxu0 %v2366
    %3142 = vmatpush.bf16.msra.mxu0 %v2363
    %3143 = vmatmul.bf16.gmra.mxu0 %v949
    %v3144 = vpop.f32.mrf.mxu0
    %v3145 = vadd.f32 0.0, %v3144
    %v3146 = vpop.f32.mrf.mxu0
    %3147 = vdwg.mxu0
    %3148 = vmatpush.bf16.msra.mxu0 %v2408
    %3149 = vmatpush.bf16.msra.mxu0 %v2405
    %3150 = vmatpush.bf16.msra.mxu0 %v2402
    %3151 = vmatpush.bf16.msra.mxu0 %v2399
    %3152 = vmatpush.bf16.msra.mxu0 %v2396
    %3153 = vmatpush.bf16.msra.mxu0 %v2393
    %3154 = vmatpush.bf16.msra.mxu0 %v2390
    %3155 = vmatpush.bf16.msra.mxu0 %v2387
    %3156 = vmatmul.bf16.gmra.mxu0 %v950
    %v3157 = vpop.f32.mrf.mxu0
    %v3158 = vadd.f32 %v3145, %v3157
    %v3159 = vpop.f32.mrf.mxu0
    %3160 = vdwg.mxu0
    %3161 = vmatpush.bf16.msra.mxu0 %v2432
    %3162 = vmatpush.bf16.msra.mxu0 %v2429
    %3163 = vmatpush.bf16.msra.mxu0 %v2426
    %3164 = vmatpush.bf16.msra.mxu0 %v2423
    %3165 = vmatpush.bf16.msra.mxu0 %v2420
    %3166 = vmatpush.bf16.msra.mxu0 %v2417
    %3167 = vmatpush.bf16.msra.mxu0 %v2414
    %3168 = vmatpush.bf16.msra.mxu0 %v2411
    %3169 = vmatmul.bf16.gmra.mxu0 %v951
    %v3170 = vpop.f32.mrf.mxu0
    %v3171 = vadd.f32 %v3158, %v3170
    %v3172 = vpop.f32.mrf.mxu0
    %3173 = vdwg.mxu0
    %3174 = vmatpush.bf16.msra.mxu0 %v2456
    %3175 = vmatpush.bf16.msra.mxu0 %v2453
    %3176 = vmatpush.bf16.msra.mxu0 %v2450
    %3177 = vmatpush.bf16.msra.mxu0 %v2447
    %3178 = vmatpush.bf16.msra.mxu0 %v2444
    %3179 = vmatpush.bf16.msra.mxu0 %v2441
    %3180 = vmatpush.bf16.msra.mxu0 %v2438
    %3181 = vmatpush.bf16.msra.mxu0 %v2435
    %3182 = vmatmul.bf16.gmra.mxu0 %v952
    %v3183 = vpop.f32.mrf.mxu0
    %v3184 = vadd.f32 %v3171, %v3183
    %v3185 = vpop.f32.mrf.mxu0
    %3186 = vdwg.mxu0
    %3187 = vmatpush.bf16.msra.mxu0 %v2480
    %3188 = vmatpush.bf16.msra.mxu0 %v2477
    %3189 = vmatpush.bf16.msra.mxu0 %v2474
    %3190 = vmatpush.bf16.msra.mxu0 %v2471
    %3191 = vmatpush.bf16.msra.mxu0 %v2468
    %3192 = vmatpush.bf16.msra.mxu0 %v2465
    %3193 = vmatpush.bf16.msra.mxu0 %v2462
    %3194 = vmatpush.bf16.msra.mxu0 %v2459
    %3195 = vmatmul.bf16.gmra.mxu0 %v953
    %v3196 = vpop.f32.mrf.mxu0
    %v3197 = vadd.f32 %v3184, %v3196
    %v3198 = vpop.f32.mrf.mxu0
    %3199 = vdwg.mxu0
    %3200 = vmatpush.bf16.msra.mxu0 %v2504
    %3201 = vmatpush.bf16.msra.mxu0 %v2501
    %3202 = vmatpush.bf16.msra.mxu0 %v2498
    %3203 = vmatpush.bf16.msra.mxu0 %v2495
    %3204 = vmatpush.bf16.msra.mxu0 %v2492
    %3205 = vmatpush.bf16.msra.mxu0 %v2489
    %3206 = vmatpush.bf16.msra.mxu0 %v2486
    %3207 = vmatpush.bf16.msra.mxu0 %v2483
    %3208 = vmatmul.bf16.gmra.mxu0 %v954
    %v3209 = vpop.f32.mrf.mxu0
    %v3210 = vadd.f32 %v3197, %v3209
    %v3211 = vpop.f32.mrf.mxu0
    %3212 = vdwg.mxu0
    %3213 = vmatpush.bf16.msra.mxu0 %v2528
    %3214 = vmatpush.bf16.msra.mxu0 %v2525
    %3215 = vmatpush.bf16.msra.mxu0 %v2522
    %3216 = vmatpush.bf16.msra.mxu0 %v2519
    %3217 = vmatpush.bf16.msra.mxu0 %v2516
    %3218 = vmatpush.bf16.msra.mxu0 %v2513
    %3219 = vmatpush.bf16.msra.mxu0 %v2510
    %3220 = vmatpush.bf16.msra.mxu0 %v2507
    %3221 = vmatmul.bf16.gmra.mxu0 %v955
    %v3222 = vpop.f32.mrf.mxu0
    %v3223 = vadd.f32 %v3210, %v3222
    %v3224 = vpop.f32.mrf.mxu0
    %3225 = vdwg.mxu0
    %3226 = vmatpush.bf16.msra.mxu0 %v2552
    %3227 = vmatpush.bf16.msra.mxu0 %v2549
    %3228 = vmatpush.bf16.msra.mxu0 %v2546
    %3229 = vmatpush.bf16.msra.mxu0 %v2543
    %3230 = vmatpush.bf16.msra.mxu0 %v2540
    %3231 = vmatpush.bf16.msra.mxu0 %v2537
    %3232 = vmatpush.bf16.msra.mxu0 %v2534
    %3233 = vmatpush.bf16.msra.mxu0 %v2531
    %3234 = vmatmul.bf16.gmra.mxu0 %v956
    %v3235 = vpop.f32.mrf.mxu0
    %v3236 = vadd.f32 %v3223, %v3235
    %v3237 = vpop.f32.mrf.mxu0
    %3238 = vdwg.mxu0
    %3239 = vmatpush.bf16.msra.mxu0 %v2576
    %3240 = vmatpush.bf16.msra.mxu0 %v2573
    %3241 = vmatpush.bf16.msra.mxu0 %v2570
    %3242 = vmatpush.bf16.msra.mxu0 %v2567
    %3243 = vmatpush.bf16.msra.mxu0 %v2564
    %3244 = vmatpush.bf16.msra.mxu0 %v2561
    %3245 = vmatpush.bf16.msra.mxu0 %v2558
    %3246 = vmatpush.bf16.msra.mxu0 %v2555
    %3247 = vmatmul.bf16.gmra.mxu0 %v957
    %v3248 = vpop.f32.mrf.mxu0
    %v3249 = vadd.f32 %v3236, %v3248
    %v3250 = vpop.f32.mrf.mxu0
    %3251 = vdwg.mxu0
    %3252 = vmatpush.bf16.msra.mxu0 %v2600
    %3253 = vmatpush.bf16.msra.mxu0 %v2597
    %3254 = vmatpush.bf16.msra.mxu0 %v2594
    %3255 = vmatpush.bf16.msra.mxu0 %v2591
    %3256 = vmatpush.bf16.msra.mxu0 %v2588
    %3257 = vmatpush.bf16.msra.mxu0 %v2585
    %3258 = vmatpush.bf16.msra.mxu0 %v2582
    %3259 = vmatpush.bf16.msra.mxu0 %v2579
    %3260 = vmatmul.bf16.gmra.mxu0 %v958
    %v3261 = vpop.f32.mrf.mxu0
    %v3262 = vadd.f32 %v3249, %v3261
    %v3263 = vpop.f32.mrf.mxu0
    %3264 = vdwg.mxu0
    %3265 = vmatpush.bf16.msra.mxu0 %v2624
    %3266 = vmatpush.bf16.msra.mxu0 %v2621
    %3267 = vmatpush.bf16.msra.mxu0 %v2618
    %3268 = vmatpush.bf16.msra.mxu0 %v2615
    %3269 = vmatpush.bf16.msra.mxu0 %v2612
    %3270 = vmatpush.bf16.msra.mxu0 %v2609
    %3271 = vmatpush.bf16.msra.mxu0 %v2606
    %3272 = vmatpush.bf16.msra.mxu0 %v2603
    %3273 = vmatmul.bf16.gmra.mxu0 %v959
    %v3274 = vpop.f32.mrf.mxu0
    %v3275 = vadd.f32 %v3262, %v3274
    %v3276 = vpop.f32.mrf.mxu0
    %3277 = vdwg.mxu0
    %3278 = vmatpush.bf16.msra.mxu0 %v2648
    %3279 = vmatpush.bf16.msra.mxu0 %v2645
    %3280 = vmatpush.bf16.msra.mxu0 %v2642
    %3281 = vmatpush.bf16.msra.mxu0 %v2639
    %3282 = vmatpush.bf16.msra.mxu0 %v2636
    %3283 = vmatpush.bf16.msra.mxu0 %v2633
    %3284 = vmatpush.bf16.msra.mxu0 %v2630
    %3285 = vmatpush.bf16.msra.mxu0 %v2627
    %3286 = vmatmul.bf16.gmra.mxu0 %v960
    %v3287 = vpop.f32.mrf.mxu0
    %v3288 = vadd.f32 %v3275, %v3287
    %v3289 = vpop.f32.mrf.mxu0
    %3290 = vdwg.mxu0
    %3291 = vmatpush.bf16.msra.mxu0 0
    %3292 = vmatpush.bf16.msra.mxu0 0
    %3293 = vmatpush.bf16.msra.mxu0 0
    %3294 = vmatpush.bf16.msra.mxu0 0
    %3295 = vmatpush.bf16.msra.mxu0 %v2660
    %3296 = vmatpush.bf16.msra.mxu0 %v2657
    %3297 = vmatpush.bf16.msra.mxu0 %v2654
    %3298 = vmatpush.bf16.msra.mxu0 %v2651
    %3299 = vmatmul.bf16.gmra.mxu0 %v2964
    %v3300 = vpop.f32.mrf.mxu0
    %v3301 = vadd.f32 %v3288, %v3300
    %v3302 = vpop.f32.mrf.mxu0
    %3303 = vdwg.mxu0
    %3304 = vmatpush.bf16.msra.mxu0 %v2385
    %3305 = vmatpush.bf16.msra.mxu0 %v2382
    %3306 = vmatpush.bf16.msra.mxu0 %v2379
    %3307 = vmatpush.bf16.msra.mxu0 %v2376
    %3308 = vmatpush.bf16.msra.mxu0 %v2373
    %3309 = vmatpush.bf16.msra.mxu0 %v2370
    %3310 = vmatpush.bf16.msra.mxu0 %v2367
    %3311 = vmatpush.bf16.msra.mxu0 %v2364
    %3312 = vmatmul.bf16.gmra.mxu0 %v949
    %v3313 = vpop.f32.mrf.mxu0
    %v3314 = vadd.f32 0.0, %v3313
    %v3315 = vpop.f32.mrf.mxu0
    %3316 = vdwg.mxu0
    %3317 = vmatpush.bf16.msra.mxu0 %v2409
    %3318 = vmatpush.bf16.msra.mxu0 %v2406
    %3319 = vmatpush.bf16.msra.mxu0 %v2403
    %3320 = vmatpush.bf16.msra.mxu0 %v2400
    %3321 = vmatpush.bf16.msra.mxu0 %v2397
    %3322 = vmatpush.bf16.msra.mxu0 %v2394
    %3323 = vmatpush.bf16.msra.mxu0 %v2391
    %3324 = vmatpush.bf16.msra.mxu0 %v2388
    %3325 = vmatmul.bf16.gmra.mxu0 %v950
    %v3326 = vpop.f32.mrf.mxu0
    %v3327 = vadd.f32 %v3314, %v3326
    %v3328 = vpop.f32.mrf.mxu0
    %3329 = vdwg.mxu0
    %3330 = vmatpush.bf16.msra.mxu0 %v2433
    %3331 = vmatpush.bf16.msra.mxu0 %v2430
    %3332 = vmatpush.bf16.msra.mxu0 %v2427
    %3333 = vmatpush.bf16.msra.mxu0 %v2424
    %3334 = vmatpush.bf16.msra.mxu0 %v2421
    %3335 = vmatpush.bf16.msra.mxu0 %v2418
    %3336 = vmatpush.bf16.msra.mxu0 %v2415
    %3337 = vmatpush.bf16.msra.mxu0 %v2412
    %3338 = vmatmul.bf16.gmra.mxu0 %v951
    %v3339 = vpop.f32.mrf.mxu0
    %v3340 = vadd.f32 %v3327, %v3339
    %v3341 = vpop.f32.mrf.mxu0
    %3342 = vdwg.mxu0
    %3343 = vmatpush.bf16.msra.mxu0 %v2457
    %3344 = vmatpush.bf16.msra.mxu0 %v2454
    %3345 = vmatpush.bf16.msra.mxu0 %v2451
    %3346 = vmatpush.bf16.msra.mxu0 %v2448
    %3347 = vmatpush.bf16.msra.mxu0 %v2445
    %3348 = vmatpush.bf16.msra.mxu0 %v2442
    %3349 = vmatpush.bf16.msra.mxu0 %v2439
    %3350 = vmatpush.bf16.msra.mxu0 %v2436
    %3351 = vmatmul.bf16.gmra.mxu0 %v952
    %v3352 = vpop.f32.mrf.mxu0
    %v3353 = vadd.f32 %v3340, %v3352
    %v3354 = vpop.f32.mrf.mxu0
    %3355 = vdwg.mxu0
    %3356 = vmatpush.bf16.msra.mxu0 %v2481
    %3357 = vmatpush.bf16.msra.mxu0 %v2478
    %3358 = vmatpush.bf16.msra.mxu0 %v2475
    %3359 = vmatpush.bf16.msra.mxu0 %v2472
    %3360 = vmatpush.bf16.msra.mxu0 %v2469
    %3361 = vmatpush.bf16.msra.mxu0 %v2466
    %3362 = vmatpush.bf16.msra.mxu0 %v2463
    %3363 = vmatpush.bf16.msra.mxu0 %v2460
    %3364 = vmatmul.bf16.gmra.mxu0 %v953
    %v3365 = vpop.f32.mrf.mxu0
    %v3366 = vadd.f32 %v3353, %v3365
    %v3367 = vpop.f32.mrf.mxu0
    %3368 = vdwg.mxu0
    %3369 = vmatpush.bf16.msra.mxu0 %v2505
    %3370 = vmatpush.bf16.msra.mxu0 %v2502
    %3371 = vmatpush.bf16.msra.mxu0 %v2499
    %3372 = vmatpush.bf16.msra.mxu0 %v2496
    %3373 = vmatpush.bf16.msra.mxu0 %v2493
    %3374 = vmatpush.bf16.msra.mxu0 %v2490
    %3375 = vmatpush.bf16.msra.mxu0 %v2487
    %3376 = vmatpush.bf16.msra.mxu0 %v2484
    %3377 = vmatmul.bf16.gmra.mxu0 %v954
    %v3378 = vpop.f32.mrf.mxu0
    %v3379 = vadd.f32 %v3366, %v3378
    %v3380 = vpop.f32.mrf.mxu0
    %3381 = vdwg.mxu0
    %3382 = vmatpush.bf16.msra.mxu0 %v2529
    %3383 = vmatpush.bf16.msra.mxu0 %v2526
    %3384 = vmatpush.bf16.msra.mxu0 %v2523
    %3385 = vmatpush.bf16.msra.mxu0 %v2520
    %3386 = vmatpush.bf16.msra.mxu0 %v2517
    %3387 = vmatpush.bf16.msra.mxu0 %v2514
    %3388 = vmatpush.bf16.msra.mxu0 %v2511
    %3389 = vmatpush.bf16.msra.mxu0 %v2508
    %3390 = vmatmul.bf16.gmra.mxu0 %v955
    %v3391 = vpop.f32.mrf.mxu0
    %v3392 = vadd.f32 %v3379, %v3391
    %v3393 = vpop.f32.mrf.mxu0
    %3394 = vdwg.mxu0
    %3395 = vmatpush.bf16.msra.mxu0 %v2553
    %3396 = vmatpush.bf16.msra.mxu0 %v2550
    %3397 = vmatpush.bf16.msra.mxu0 %v2547
    %3398 = vmatpush.bf16.msra.mxu0 %v2544
    %3399 = vmatpush.bf16.msra.mxu0 %v2541
    %3400 = vmatpush.bf16.msra.mxu0 %v2538
    %3401 = vmatpush.bf16.msra.mxu0 %v2535
    %3402 = vmatpush.bf16.msra.mxu0 %v2532
    %3403 = vmatmul.bf16.gmra.mxu0 %v956
    %v3404 = vpop.f32.mrf.mxu0
    %v3405 = vadd.f32 %v3392, %v3404
    %v3406 = vpop.f32.mrf.mxu0
    %3407 = vdwg.mxu0
    %3408 = vmatpush.bf16.msra.mxu0 %v2577
    %3409 = vmatpush.bf16.msra.mxu0 %v2574
    %3410 = vmatpush.bf16.msra.mxu0 %v2571
    %3411 = vmatpush.bf16.msra.mxu0 %v2568
    %3412 = vmatpush.bf16.msra.mxu0 %v2565
    %3413 = vmatpush.bf16.msra.mxu0 %v2562
    %3414 = vmatpush.bf16.msra.mxu0 %v2559
    %3415 = vmatpush.bf16.msra.mxu0 %v2556
    %3416 = vmatmul.bf16.gmra.mxu0 %v957
    %v3417 = vpop.f32.mrf.mxu0
    %v3418 = vadd.f32 %v3405, %v3417
    %v3419 = vpop.f32.mrf.mxu0
    %3420 = vdwg.mxu0
    %3421 = vmatpush.bf16.msra.mxu0 %v2601
    %3422 = vmatpush.bf16.msra.mxu0 %v2598
    %3423 = vmatpush.bf16.msra.mxu0 %v2595
    %3424 = vmatpush.bf16.msra.mxu0 %v2592
    %3425 = vmatpush.bf16.msra.mxu0 %v2589
    %3426 = vmatpush.bf16.msra.mxu0 %v2586
    %3427 = vmatpush.bf16.msra.mxu0 %v2583
    %3428 = vmatpush.bf16.msra.mxu0 %v2580
    %3429 = vmatmul.bf16.gmra.mxu0 %v958
    %v3430 = vpop.f32.mrf.mxu0
    %v3431 = vadd.f32 %v3418, %v3430
    %v3432 = vpop.f32.mrf.mxu0
    %3433 = vdwg.mxu0
    %3434 = vmatpush.bf16.msra.mxu0 %v2625
    %3435 = vmatpush.bf16.msra.mxu0 %v2622
    %3436 = vmatpush.bf16.msra.mxu0 %v2619
    %3437 = vmatpush.bf16.msra.mxu0 %v2616
    %3438 = vmatpush.bf16.msra.mxu0 %v2613
    %3439 = vmatpush.bf16.msra.mxu0 %v2610
    %3440 = vmatpush.bf16.msra.mxu0 %v2607
    %3441 = vmatpush.bf16.msra.mxu0 %v2604
    %3442 = vmatmul.bf16.gmra.mxu0 %v959
    %v3443 = vpop.f32.mrf.mxu0
    %v3444 = vadd.f32 %v3431, %v3443
    %v3445 = vpop.f32.mrf.mxu0
    %3446 = vdwg.mxu0
    %3447 = vmatpush.bf16.msra.mxu0 %v2649
    %3448 = vmatpush.bf16.msra.mxu0 %v2646
    %3449 = vmatpush.bf16.msra.mxu0 %v2643
    %3450 = vmatpush.bf16.msra.mxu0 %v2640
    %3451 = vmatpush.bf16.msra.mxu0 %v2637
    %3452 = vmatpush.bf16.msra.mxu0 %v2634
    %3453 = vmatpush.bf16.msra.mxu0 %v2631
    %3454 = vmatpush.bf16.msra.mxu0 %v2628
    %3455 = vmatmul.bf16.gmra.mxu0 %v960
    %v3456 = vpop.f32.mrf.mxu0
    %v3457 = vadd.f32 %v3444, %v3456
    %v3458 = vpop.f32.mrf.mxu0
    %3459 = vdwg.mxu0
    %3460 = vmatpush.bf16.msra.mxu0 0
    %3461 = vmatpush.bf16.msra.mxu0 0
    %3462 = vmatpush.bf16.msra.mxu0 0
    %3463 = vmatpush.bf16.msra.mxu0 0
    %3464 = vmatpush.bf16.msra.mxu0 %v2661
    %3465 = vmatpush.bf16.msra.mxu0 %v2658
    %3466 = vmatpush.bf16.msra.mxu0 %v2655
    %3467 = vmatpush.bf16.msra.mxu0 %v2652
    %3468 = vmatmul.bf16.gmra.mxu0 %v2964
    %v3469 = vpop.f32.mrf.mxu0
    %v3470 = vadd.f32 %v3457, %v3469
    %v3471 = vpop.f32.mrf.mxu0
    %3472 = vdwg.mxu0
    %v3889 = vunpack.c.l.b16 %v302
    %v3890 = vunpack.c.h.b16 %v302
    %v3891 = vunpack.c.l.b16 %v303
    %v3892 = vunpack.c.l.b16 %v304
    %v3893 = vunpack.c.h.b16 %v304
    %v3894 = vunpack.c.l.b16 %v305
    %v3895 = vunpack.c.l.b16 %v306
    %v3896 = vunpack.c.h.b16 %v306
    %v3897 = vunpack.c.l.b16 %v307
    %v3898 = vunpack.c.l.b16 %v308
    %v3899 = vunpack.c.h.b16 %v308
    %v3900 = vunpack.c.l.b16 %v309
    %v3901 = vunpack.c.l.b16 %v310
    %v3902 = vunpack.c.h.b16 %v310
    %v3903 = vunpack.c.l.b16 %v311
    %v3904 = vunpack.c.l.b16 %v312
    %v3905 = vunpack.c.h.b16 %v312
    %v3906 = vunpack.c.l.b16 %v313
    %v3907 = vunpack.c.l.b16 %v314
    %v3908 = vunpack.c.h.b16 %v314
    %v3909 = vunpack.c.l.b16 %v315
    %v3910 = vunpack.c.l.b16 %v316
    %v3911 = vunpack.c.h.b16 %v316
    %v3912 = vunpack.c.l.b16 %v317
    %v3913 = vunpack.c.l.b16 %v318
    %v3914 = vunpack.c.h.b16 %v318
    %v3915 = vunpack.c.l.b16 %v319
    %v3916 = vunpack.c.l.b16 %v320
    %v3917 = vunpack.c.h.b16 %v320
    %v3918 = vunpack.c.l.b16 %v321
    %v3919 = vunpack.c.l.b16 %v322
    %v3920 = vunpack.c.h.b16 %v322
    %v3921 = vunpack.c.l.b16 %v323
    %v3922 = vunpack.c.l.b16 %v324
    %v3923 = vunpack.c.h.b16 %v324
    %v3924 = vunpack.c.l.b16 %v325
    %v3925 = vunpack.c.l.b16 %v326
    %v3926 = vunpack.c.h.b16 %v326
    %v3927 = vunpack.c.l.b16 %v327
    %v3928 = vunpack.c.l.b16 %v328
    %v3929 = vunpack.c.h.b16 %v328
    %v3930 = vunpack.c.l.b16 %v329
    %v3931 = vunpack.c.l.b16 %v330
    %v3932 = vunpack.c.h.b16 %v330
    %v3933 = vunpack.c.l.b16 %v331
    %v3934 = vunpack.c.l.b16 %v332
    %v3935 = vunpack.c.h.b16 %v332
    %v3936 = vunpack.c.l.b16 %v333
    %v3937 = vunpack.c.l.b16 %v334
    %v3938 = vunpack.c.h.b16 %v334
    %v3939 = vunpack.c.l.b16 %v335
    %v3940 = vunpack.c.l.b16 %v336
    %v3941 = vunpack.c.h.b16 %v336
    %v3942 = vunpack.c.l.b16 %v337
    %v3943 = vunpack.c.l.b16 %v338
    %v3944 = vunpack.c.h.b16 %v338
    %v3945 = vunpack.c.l.b16 %v339
    %v3946 = vunpack.c.l.b16 %v340
    %v3947 = vunpack.c.h.b16 %v340
    %v3948 = vunpack.c.l.b16 %v341
    %v3949 = vunpack.c.l.b16 %v342
    %v3950 = vunpack.c.h.b16 %v342
    %v3951 = vunpack.c.l.b16 %v343
    %v3952 = vunpack.c.l.b16 %v344
    %v3953 = vunpack.c.h.b16 %v344
    %v3954 = vunpack.c.l.b16 %v345
    %v3955 = vunpack.c.l.b16 %v346
    %v3956 = vunpack.c.h.b16 %v346
    %v3957 = vunpack.c.l.b16 %v347
    %v3958 = vunpack.c.l.b16 %v348
    %v3959 = vunpack.c.h.b16 %v348
    %v3960 = vunpack.c.l.b16 %v349
    %v3961 = vunpack.c.l.b16 %v350
    %v3962 = vunpack.c.h.b16 %v350
    %v3963 = vunpack.c.l.b16 %v351
    %v3964 = vunpack.c.l.b16 %v352
    %v3965 = vunpack.c.h.b16 %v352
    %v3966 = vunpack.c.l.b16 %v353
    %v3967 = vunpack.c.l.b16 %v354
    %v3968 = vunpack.c.h.b16 %v354
    %v3969 = vunpack.c.l.b16 %v355
    %v3970 = vunpack.c.l.b16 %v356
    %v3971 = vunpack.c.h.b16 %v356
    %v3972 = vunpack.c.l.b16 %v357
    %v3973 = vunpack.c.l.b16 %v358
    %v3974 = vunpack.c.h.b16 %v358
    %v3975 = vunpack.c.l.b16 %v359
    %v3976 = vunpack.c.l.b16 %v360
    %v3977 = vunpack.c.h.b16 %v360
    %v3978 = vunpack.c.l.b16 %v361
    %v3979 = vunpack.c.l.b16 %v362
    %v3980 = vunpack.c.h.b16 %v362
    %v3981 = vunpack.c.l.b16 %v363
    %v3982 = vunpack.c.l.b16 %v364
    %v3983 = vunpack.c.h.b16 %v364
    %v3984 = vunpack.c.l.b16 %v365
    %v3985 = vunpack.c.l.b16 %v366
    %v3986 = vunpack.c.h.b16 %v366
    %v3987 = vunpack.c.l.b16 %v367
    %v3988 = vunpack.c.l.b16 %v368
    %v3989 = vunpack.c.h.b16 %v368
    %v3990 = vunpack.c.l.b16 %v369
    %v3991 = vunpack.c.l.b16 %v370
    %v3992 = vunpack.c.h.b16 %v370
    %v3993 = vunpack.c.l.b16 %v371
    %v3994 = vunpack.c.l.b16 %v372
    %v3995 = vunpack.c.h.b16 %v372
    %v3996 = vunpack.c.l.b16 %v373
    %v3997 = vunpack.c.l.b16 %v374
    %v3998 = vunpack.c.h.b16 %v374
    %v3999 = vunpack.c.l.b16 %v375
    %v4000 = vunpack.c.l.b16 %v376
    %v4001 = vunpack.c.h.b16 %v376
    %v4002 = vunpack.c.l.b16 %v377
    %v4003 = vunpack.c.l.b16 %v378
    %v4004 = vunpack.c.h.b16 %v378
    %v4005 = vunpack.c.l.b16 %v379
    %v4006 = vunpack.c.l.b16 %v380
    %v4007 = vunpack.c.h.b16 %v380
    %v4008 = vunpack.c.l.b16 %v381
    %v4009 = vunpack.c.l.b16 %v382
    %v4010 = vunpack.c.h.b16 %v382
    %v4011 = vunpack.c.l.b16 %v383
    %v4012 = vunpack.c.l.b16 %v384
    %v4013 = vunpack.c.h.b16 %v384
    %v4014 = vunpack.c.l.b16 %v385
    %v4015 = vunpack.c.l.b16 %v386
    %v4016 = vunpack.c.h.b16 %v386
    %v4017 = vunpack.c.l.b16 %v387
    %v4018 = vunpack.c.l.b16 %v388
    %v4019 = vunpack.c.h.b16 %v388
    %v4020 = vunpack.c.l.b16 %v389
    %v4021 = vunpack.c.l.b16 %v390
    %v4022 = vunpack.c.h.b16 %v390
    %v4023 = vunpack.c.l.b16 %v391
    %v4024 = vunpack.c.l.b16 %v392
    %v4025 = vunpack.c.h.b16 %v392
    %v4026 = vunpack.c.l.b16 %v393
    %v4027 = vunpack.c.l.b16 %v394
    %v4028 = vunpack.c.h.b16 %v394
    %v4029 = vunpack.c.l.b16 %v395
    %v4030 = vunpack.c.l.b16 %v396
    %v4031 = vunpack.c.h.b16 %v396
    %v4032 = vunpack.c.l.b16 %v397
    %v4033 = vunpack.c.l.b16 %v398
    %v4034 = vunpack.c.h.b16 %v398
    %v4035 = vunpack.c.l.b16 %v399
    %v4036 = vunpack.c.l.b16 %v400
    %v4037 = vunpack.c.h.b16 %v400
    %v4038 = vunpack.c.l.b16 %v401
    %v4039 = vunpack.c.l.b16 %v402
    %v4040 = vunpack.c.h.b16 %v402
    %v4041 = vunpack.c.l.b16 %v403
    %v4042 = vunpack.c.l.b16 %v404
    %v4043 = vunpack.c.h.b16 %v404
    %v4044 = vunpack.c.l.b16 %v405
    %v4045 = vunpack.c.l.b16 %v406
    %v4046 = vunpack.c.h.b16 %v406
    %v4047 = vunpack.c.l.b16 %v407
    %v4048 = vunpack.c.l.b16 %v408
    %v4049 = vunpack.c.h.b16 %v408
    %v4050 = vunpack.c.l.b16 %v409
    %v4051 = vunpack.c.l.b16 %v410
    %v4052 = vunpack.c.h.b16 %v410
    %v4053 = vunpack.c.l.b16 %v411
    %v4054 = vunpack.c.l.b16 %v412
    %v4055 = vunpack.c.h.b16 %v412
    %v4056 = vunpack.c.l.b16 %v413
    %v4057 = vunpack.c.l.b16 %v414
    %v4058 = vunpack.c.h.b16 %v414
    %v4059 = vunpack.c.l.b16 %v415
    %v4060 = vunpack.c.l.b16 %v416
    %v4061 = vunpack.c.h.b16 %v416
    %v4062 = vunpack.c.l.b16 %v417
    %v4063 = vunpack.c.l.b16 %v418
    %v4064 = vunpack.c.h.b16 %v418
    %v4065 = vunpack.c.l.b16 %v419
    %v4066 = vunpack.c.l.b16 %v420
    %v4067 = vunpack.c.h.b16 %v420
    %v4068 = vunpack.c.l.b16 %v421
    %v4069 = vunpack.c.l.b16 %v422
    %v4070 = vunpack.c.h.b16 %v422
    %v4071 = vunpack.c.l.b16 %v423
    %v4072 = vunpack.c.l.b16 %v424
    %v4073 = vunpack.c.h.b16 %v424
    %v4074 = vunpack.c.l.b16 %v425
    %v4075 = vunpack.c.l.b16 %v426
    %v4076 = vunpack.c.h.b16 %v426
    %v4077 = vunpack.c.l.b16 %v427
    %v4078 = vunpack.c.l.b16 %v428
    %v4079 = vunpack.c.h.b16 %v428
    %v4080 = vunpack.c.l.b16 %v429
    %v4081 = vunpack.c.l.b16 %v430
    %v4082 = vunpack.c.h.b16 %v430
    %v4083 = vunpack.c.l.b16 %v431
    %v4084 = vunpack.c.l.b16 %v432
    %v4085 = vunpack.c.h.b16 %v432
    %v4086 = vunpack.c.l.b16 %v433
    %v4087 = vunpack.c.l.b16 %v434
    %v4088 = vunpack.c.h.b16 %v434
    %v4089 = vunpack.c.l.b16 %v435
    %v4090 = vunpack.c.l.b16 %v436
    %v4091 = vunpack.c.h.b16 %v436
    %v4092 = vunpack.c.l.b16 %v437
    %v4093 = vunpack.c.l.b16 %v438
    %v4094 = vunpack.c.h.b16 %v438
    %v4095 = vunpack.c.l.b16 %v439
    %v4096 = vunpack.c.l.b16 %v440
    %v4097 = vunpack.c.h.b16 %v440
    %v4098 = vunpack.c.l.b16 %v441
    %v4099 = vunpack.c.l.b16 %v442
    %v4100 = vunpack.c.h.b16 %v442
    %v4101 = vunpack.c.l.b16 %v443
    %v4102 = vunpack.c.l.b16 %v444
    %v4103 = vunpack.c.h.b16 %v444
    %v4104 = vunpack.c.l.b16 %v445
    %v4105 = vunpack.c.l.b16 %v446
    %v4106 = vunpack.c.h.b16 %v446
    %v4107 = vunpack.c.l.b16 %v447
    %v4108 = vunpack.c.l.b16 %v448
    %v4109 = vunpack.c.h.b16 %v448
    %v4110 = vunpack.c.l.b16 %v449
    %v4111 = vunpack.c.l.b16 %v450
    %v4112 = vunpack.c.h.b16 %v450
    %v4113 = vunpack.c.l.b16 %v451
    %v4114 = vunpack.c.l.b16 %v452
    %v4115 = vunpack.c.h.b16 %v452
    %v4116 = vunpack.c.l.b16 %v453
    %v4117 = vunpack.c.l.b16 %v454
    %v4118 = vunpack.c.h.b16 %v454
    %v4119 = vunpack.c.l.b16 %v455
    %v4120 = vunpack.c.l.b16 %v456
    %v4121 = vunpack.c.h.b16 %v456
    %v4122 = vunpack.c.l.b16 %v457
    %v4123 = vunpack.c.l.b16 %v458
    %v4124 = vunpack.c.h.b16 %v458
    %v4125 = vunpack.c.l.b16 %v459
    %v4126 = vunpack.c.l.b16 %v460
    %v4127 = vunpack.c.h.b16 %v460
    %v4128 = vunpack.c.l.b16 %v461
    %v4129 = vunpack.c.l.b16 %v462
    %v4130 = vunpack.c.h.b16 %v462
    %v4131 = vunpack.c.l.b16 %v463
    %v4132 = vunpack.c.l.b16 %v464
    %v4133 = vunpack.c.h.b16 %v464
    %v4134 = vunpack.c.l.b16 %v465
    %v4135 = vunpack.c.l.b16 %v466
    %v4136 = vunpack.c.h.b16 %v466
    %v4137 = vunpack.c.l.b16 %v467
    %v4138 = vunpack.c.l.b16 %v468
    %v4139 = vunpack.c.h.b16 %v468
    %v4140 = vunpack.c.l.b16 %v469
    %v4141 = vunpack.c.l.b16 %v470
    %v4142 = vunpack.c.h.b16 %v470
    %v4143 = vunpack.c.l.b16 %v471
    %v4144 = vunpack.c.l.b16 %v472
    %v4145 = vunpack.c.h.b16 %v472
    %v4146 = vunpack.c.l.b16 %v473
    %v4147 = vunpack.c.l.b16 %v474
    %v4148 = vunpack.c.h.b16 %v474
    %v4149 = vunpack.c.l.b16 %v475
    %v4150 = vunpack.c.l.b16 %v476
    %v4151 = vunpack.c.h.b16 %v476
    %v4152 = vunpack.c.l.b16 %v477
    %v4153 = vunpack.c.l.b16 %v478
    %v4154 = vunpack.c.h.b16 %v478
    %v4155 = vunpack.c.l.b16 %v479
    %v4156 = vunpack.c.l.b16 %v480
    %v4157 = vunpack.c.h.b16 %v480
    %v4158 = vunpack.c.l.b16 %v481
    %v4159 = vunpack.c.l.b16 %v482
    %v4160 = vunpack.c.h.b16 %v482
    %v4161 = vunpack.c.l.b16 %v483
    %v4162 = vunpack.c.l.b16 %v484
    %v4163 = vunpack.c.h.b16 %v484
    %v4164 = vunpack.c.l.b16 %v485
    %v4165 = vunpack.c.l.b16 %v486
    %v4166 = vunpack.c.h.b16 %v486
    %v4167 = vunpack.c.l.b16 %v487
    %v4168 = vunpack.c.l.b16 %v488
    %v4169 = vunpack.c.h.b16 %v488
    %v4170 = vunpack.c.l.b16 %v489
    %v4171 = vunpack.c.l.b16 %v490
    %v4172 = vunpack.c.h.b16 %v490
    %v4173 = vunpack.c.l.b16 %v491
    %v4174 = vunpack.c.l.b16 %v492
    %v4175 = vunpack.c.h.b16 %v492
    %v4176 = vunpack.c.l.b16 %v493
    %v4177 = vunpack.c.l.b16 %v494
    %v4178 = vunpack.c.h.b16 %v494
    %v4179 = vunpack.c.l.b16 %v495
    %v4180 = vunpack.c.l.b16 %v496
    %v4181 = vunpack.c.h.b16 %v496
    %v4182 = vunpack.c.l.b16 %v497
    %v4183 = vunpack.c.l.b16 %v498
    %v4184 = vunpack.c.h.b16 %v498
    %v4185 = vunpack.c.l.b16 %v499
    %v4186 = vunpack.c.l.b16 %v500
    %v4187 = vunpack.c.h.b16 %v500
    %v4188 = vunpack.c.l.b16 %v501
    %v4189 = vunpack.c.l.b16 %v502
    %v4190 = vunpack.c.h.b16 %v502
    %v4191 = vunpack.c.l.b16 %v503
    %v4192 = vunpack.c.l.b16 %v504
    %v4193 = vunpack.c.h.b16 %v504
    %v4194 = vunpack.c.l.b16 %v505
    %v4195 = vunpack.c.l.b16 %v506
    %v4196 = vunpack.c.h.b16 %v506
    %v4197 = vunpack.c.l.b16 %v507
    %v4198 = vunpack.c.l.b16 %v508
    %v4199 = vunpack.c.h.b16 %v508
    %v4200 = vunpack.c.l.b16 %v509
    %v4201 = vunpack.c.l.b16 %v510
    %v4202 = vunpack.c.h.b16 %v510
    %v4203 = vunpack.c.l.b16 %v511
    %v4204 = vunpack.c.l.b16 %v512
    %v4205 = vunpack.c.h.b16 %v512
    %v4206 = vunpack.c.l.b16 %v513
    %v4207 = vunpack.c.l.b16 %v514
    %v4208 = vunpack.c.h.b16 %v514
    %v4209 = vunpack.c.l.b16 %v515
    %v4210 = vunpack.c.l.b16 %v516
    %v4211 = vunpack.c.h.b16 %v516
    %v4212 = vunpack.c.l.b16 %v517
    %v4213 = vunpack.c.l.b16 %v518
    %v4214 = vunpack.c.h.b16 %v518
    %v4215 = vunpack.c.l.b16 %v519
    %v4216 = vunpack.c.l.b16 %v520
    %v4217 = vunpack.c.h.b16 %v520
    %v4218 = vunpack.c.l.b16 %v521
    %v4219 = vunpack.c.l.b16 %v522
    %v4220 = vunpack.c.h.b16 %v522
    %v4221 = vunpack.c.l.b16 %v523
    %v4222 = vunpack.c.l.b16 %v524
    %v4223 = vunpack.c.h.b16 %v524
    %v4224 = vunpack.c.l.b16 %v525
    %v4225 = vunpack.c.l.b16 %v526
    %v4226 = vunpack.c.h.b16 %v526
    %v4227 = vunpack.c.l.b16 %v527
    %v4228 = vunpack.c.l.b16 %v528
    %v4229 = vunpack.c.h.b16 %v528
    %v4230 = vunpack.c.l.b16 %v529
    %v4231 = vunpack.c.l.b16 %v530
    %v4232 = vunpack.c.h.b16 %v530
    %v4233 = vunpack.c.l.b16 %v531
    %v4234 = vunpack.c.l.b16 %v532
    %v4235 = vunpack.c.h.b16 %v532
    %v4236 = vunpack.c.l.b16 %v533
    %v4237 = vunpack.c.l.b16 %v534
    %v4238 = vunpack.c.h.b16 %v534
    %v4239 = vunpack.c.l.b16 %v535
    %v4240 = vunpack.c.l.b16 %v536
    %v4241 = vunpack.c.h.b16 %v536
    %v4242 = vunpack.c.l.b16 %v537
    %v4243 = vunpack.c.l.b16 %v538
    %v4244 = vunpack.c.h.b16 %v538
    %v4245 = vunpack.c.l.b16 %v539
    %v4246 = vunpack.c.l.b16 %v540
    %v4247 = vunpack.c.h.b16 %v540
    %v4248 = vunpack.c.l.b16 %v541
    %v4249 = vunpack.c.l.b16 %v542
    %v4250 = vunpack.c.h.b16 %v542
    %v4251 = vunpack.c.l.b16 %v543
    %v4252 = vunpack.c.l.b16 %v544
    %v4253 = vunpack.c.h.b16 %v544
    %v4254 = vunpack.c.l.b16 %v545
    %v4255 = vunpack.c.l.b16 %v546
    %v4256 = vunpack.c.h.b16 %v546
    %v4257 = vunpack.c.l.b16 %v547
    %v4258 = vunpack.c.l.b16 %v548
    %v4259 = vunpack.c.h.b16 %v548
    %v4260 = vunpack.c.l.b16 %v549
    %v4261 = vunpack.c.l.b16 %v550
    %v4262 = vunpack.c.h.b16 %v550
    %v4263 = vunpack.c.l.b16 %v551
    %v4264 = vunpack.c.l.b16 %v552
    %v4265 = vunpack.c.h.b16 %v552
    %v4266 = vunpack.c.l.b16 %v553
    %v4267 = vunpack.c.l.b16 %v554
    %v4268 = vunpack.c.h.b16 %v554
    %v4269 = vunpack.c.l.b16 %v555
    %v4270 = vunpack.c.l.b16 %v556
    %v4271 = vunpack.c.h.b16 %v556
    %v4272 = vunpack.c.l.b16 %v557
    %v4273 = vunpack.c.l.b16 %v558
    %v4274 = vunpack.c.h.b16 %v558
    %v4275 = vunpack.c.l.b16 %v559
    %v4276 = vunpack.c.l.b16 %v560
    %v4277 = vunpack.c.h.b16 %v560
    %v4278 = vunpack.c.l.b16 %v561
    %v4279 = vunpack.c.l.b16 %v562
    %v4280 = vunpack.c.h.b16 %v562
    %v4281 = vunpack.c.l.b16 %v563
    %v4282 = vunpack.c.l.b16 %v564
    %v4283 = vunpack.c.h.b16 %v564
    %v4284 = vunpack.c.l.b16 %v565
    %v4285 = vunpack.c.l.b16 %v566
    %v4286 = vunpack.c.h.b16 %v566
    %v4287 = vunpack.c.l.b16 %v567
    %v4288 = vunpack.c.l.b16 %v568
    %v4289 = vunpack.c.h.b16 %v568
    %v4290 = vunpack.c.l.b16 %v569
    %v4291 = vunpack.c.l.b16 %v570
    %v4292 = vunpack.c.h.b16 %v570
    %v4293 = vunpack.c.l.b16 %v571
    %v4294 = vunpack.c.l.b16 %v572
    %v4295 = vunpack.c.h.b16 %v572
    %v4296 = vunpack.c.l.b16 %v573
    %v4297 = vunpack.c.l.b16 %v574
    %v4298 = vunpack.c.h.b16 %v574
    %v4299 = vunpack.c.l.b16 %v575
    %v4300 = vunpack.c.l.b16 %v576
    %v4301 = vunpack.c.h.b16 %v576
    %v4302 = vunpack.c.l.b16 %v577
    %v4303 = vunpack.c.l.b16 %v578
    %v4304 = vunpack.c.h.b16 %v578
    %v4305 = vunpack.c.l.b16 %v579
    %v4306 = vunpack.c.l.b16 %v580
    %v4307 = vunpack.c.h.b16 %v580
    %v4308 = vunpack.c.l.b16 %v581
    %v4309 = vunpack.c.l.b16 %v582
    %v4310 = vunpack.c.h.b16 %v582
    %v4311 = vunpack.c.l.b16 %v583
    %v4312 = vunpack.c.l.b16 %v584
    %v4313 = vunpack.c.h.b16 %v584
    %v4314 = vunpack.c.l.b16 %v585
    %v4315 = vunpack.c.l.b16 %v586
    %v4316 = vunpack.c.h.b16 %v586
    %v4317 = vunpack.c.l.b16 %v587
    %v4318 = vunpack.c.l.b16 %v588
    %v4319 = vunpack.c.h.b16 %v588
    %v4320 = vunpack.c.l.b16 %v589
    %v4321 = vunpack.c.l.b16 %v590
    %v4322 = vunpack.c.h.b16 %v590
    %v4323 = vunpack.c.l.b16 %v591
    %v4324 = vunpack.c.l.b16 %v592
    %v4325 = vunpack.c.h.b16 %v592
    %v4326 = vunpack.c.l.b16 %v593
    %v4327 = vunpack.c.l.b16 %v594
    %v4328 = vunpack.c.h.b16 %v594
    %v4329 = vunpack.c.l.b16 %v595
    %v4330 = vunpack.c.l.b16 %v596
    %v4331 = vunpack.c.h.b16 %v596
    %v4332 = vunpack.c.l.b16 %v597
    %v4333 = vunpack.c.l.b16 %v598
    %v4334 = vunpack.c.h.b16 %v598
    %v4335 = vunpack.c.l.b16 %v599
    %v4336 = vunpack.c.l.b16 %v600
    %v4337 = vunpack.c.h.b16 %v600
    %v4338 = vunpack.c.l.b16 %v601
    %v4339 = vunpack.c.l.b16 %v602
    %v4340 = vunpack.c.h.b16 %v602
    %v4341 = vunpack.c.l.b16 %v603
    %v4342 = vunpack.c.l.b16 %v604
    %v4343 = vunpack.c.h.b16 %v604
    %v4344 = vunpack.c.l.b16 %v605
    %v4345 = vunpack.c.l.b16 %v606
    %v4346 = vunpack.c.h.b16 %v606
    %v4347 = vunpack.c.l.b16 %v607
    %v4348 = vunpack.c.l.b16 %v608
    %v4349 = vunpack.c.h.b16 %v608
    %v4350 = vunpack.c.l.b16 %v609
    %v4351 = vunpack.c.l.b16 %v610
    %v4352 = vunpack.c.h.b16 %v610
    %v4353 = vunpack.c.l.b16 %v611
    %v4354 = vunpack.c.l.b16 %v612
    %v4355 = vunpack.c.h.b16 %v612
    %v4356 = vunpack.c.l.b16 %v613
    %v4357 = vunpack.c.l.b16 %v614
    %v4358 = vunpack.c.h.b16 %v614
    %v4359 = vunpack.c.l.b16 %v615
    %v4360 = vunpack.c.l.b16 %v616
    %v4361 = vunpack.c.h.b16 %v616
    %v4362 = vunpack.c.l.b16 %v617
    %v4363 = vunpack.c.l.b16 %v618
    %v4364 = vunpack.c.h.b16 %v618
    %v4365 = vunpack.c.l.b16 %v619
    %v4366 = vunpack.c.l.b16 %v620
    %v4367 = vunpack.c.h.b16 %v620
    %v4368 = vunpack.c.l.b16 %v621
    %v4369 = vunpack.c.l.b16 %v622
    %v4370 = vunpack.c.h.b16 %v622
    %v4371 = vunpack.c.l.b16 %v623
    %v4372 = vunpack.c.l.b16 %v624
    %v4373 = vunpack.c.h.b16 %v624
    %v4374 = vunpack.c.l.b16 %v625
    %v4375 = vunpack.c.l.b16 %v626
    %v4376 = vunpack.c.h.b16 %v626
    %v4377 = vunpack.c.l.b16 %v627
    %v4378 = vunpack.c.l.b16 %v628
    %v4379 = vunpack.c.h.b16 %v628
    %v4380 = vunpack.c.l.b16 %v629
    %v4381 = vunpack.c.l.b16 %v630
    %v4382 = vunpack.c.h.b16 %v630
    %v4383 = vunpack.c.l.b16 %v631
    %v4384 = vunpack.c.l.b16 %v632
    %v4385 = vunpack.c.h.b16 %v632
    %v4386 = vunpack.c.l.b16 %v633
    %v4387 = vunpack.c.l.b16 %v634
    %v4388 = vunpack.c.h.b16 %v634
    %v4389 = vunpack.c.l.b16 %v635
    %v4390 = vunpack.c.l.b16 %v636
    %v4391 = vunpack.c.h.b16 %v636
    %v4392 = vunpack.c.l.b16 %v637
    %v4393 = vunpack.c.l.b16 %v638
    %v4394 = vunpack.c.h.b16 %v638
    %v4395 = vunpack.c.l.b16 %v639
    %v4396 = vunpack.c.l.b16 %v640
    %v4397 = vunpack.c.h.b16 %v640
    %v4398 = vunpack.c.l.b16 %v641
    %v4399 = vunpack.c.l.b16 %v642
    %v4400 = vunpack.c.h.b16 %v642
    %v4401 = vunpack.c.l.b16 %v643
    %v4402 = vunpack.c.l.b16 %v644
    %v4403 = vunpack.c.h.b16 %v644
    %v4404 = vunpack.c.l.b16 %v645
    %v4405 = vunpack.c.l.b16 %v646
    %v4406 = vunpack.c.h.b16 %v646
    %v4407 = vunpack.c.l.b16 %v647
    %v4408 = vunpack.c.l.b16 %v648
    %v4409 = vunpack.c.h.b16 %v648
    %v4410 = vunpack.c.l.b16 %v649
    %v4411 = vunpack.c.l.b16 %v650
    %v4412 = vunpack.c.h.b16 %v650
    %v4413 = vunpack.c.l.b16 %v651
    %v4414 = vunpack.c.l.b16 %v652
    %v4415 = vunpack.c.h.b16 %v652
    %v4416 = vunpack.c.l.b16 %v653
    %v4417 = vunpack.c.l.b16 %v654
    %v4418 = vunpack.c.h.b16 %v654
    %v4419 = vunpack.c.l.b16 %v655
    %v4420 = vunpack.c.l.b16 %v656
    %v4421 = vunpack.c.h.b16 %v656
    %v4422 = vunpack.c.l.b16 %v657
    %v4423 = vunpack.c.l.b16 %v658
    %v4424 = vunpack.c.h.b16 %v658
    %v4425 = vunpack.c.l.b16 %v659
    %v4426 = vunpack.c.l.b16 %v660
    %v4427 = vunpack.c.h.b16 %v660
    %v4428 = vunpack.c.l.b16 %v661
    %v4429 = vunpack.c.l.b16 %v662
    %v4430 = vunpack.c.h.b16 %v662
    %v4431 = vunpack.c.l.b16 %v663
    %v4432 = vunpack.c.l.b16 %v664
    %v4433 = vunpack.c.h.b16 %v664
    %v4434 = vunpack.c.l.b16 %v665
    %v4435 = vunpack.c.l.b16 %v666
    %v4436 = vunpack.c.h.b16 %v666
    %v4437 = vunpack.c.l.b16 %v667
    %v4438 = vunpack.c.l.b16 %v668
    %v4439 = vunpack.c.h.b16 %v668
    %v4440 = vunpack.c.l.b16 %v669
    %v4441 = vunpack.c.l.b16 %v670
    %v4442 = vunpack.c.h.b16 %v670
    %v4443 = vunpack.c.l.b16 %v671
    %v4444 = vunpack.c.l.b16 %v672
    %v4445 = vunpack.c.h.b16 %v672
    %v4446 = vunpack.c.l.b16 %v673
    %v4447 = vunpack.c.l.b16 %v674
    %v4448 = vunpack.c.h.b16 %v674
    %v4449 = vunpack.c.l.b16 %v675
    %v4450 = vunpack.c.l.b16 %v676
    %v4451 = vunpack.c.h.b16 %v676
    %v4452 = vunpack.c.l.b16 %v677
    %v4453 = vunpack.c.l.b16 %v678
    %v4454 = vunpack.c.h.b16 %v678
    %v4455 = vunpack.c.l.b16 %v679
    %v4456 = vunpack.c.l.b16 %v680
    %v4457 = vunpack.c.h.b16 %v680
    %v4458 = vunpack.c.l.b16 %v681
    %v4459 = vunpack.c.l.b16 %v682
    %v4460 = vunpack.c.h.b16 %v682
    %v4461 = vunpack.c.l.b16 %v683
    %v4462 = vunpack.c.l.b16 %v684
    %v4463 = vunpack.c.h.b16 %v684
    %v4464 = vunpack.c.l.b16 %v685
    %v4465 = vunpack.c.l.b16 %v686
    %v4466 = vunpack.c.h.b16 %v686
    %v4467 = vunpack.c.l.b16 %v687
    %v4468 = vunpack.c.l.b16 %v688
    %v4469 = vunpack.c.h.b16 %v688
    %v4470 = vunpack.c.l.b16 %v689
    %v4471 = vunpack.c.l.b16 %v690
    %v4472 = vunpack.c.h.b16 %v690
    %v4473 = vunpack.c.l.b16 %v691
    %v4474 = vunpack.c.l.b16 %v692
    %v4475 = vunpack.c.h.b16 %v692
    %v4476 = vunpack.c.l.b16 %v693
    %v4477 = vunpack.c.l.b16 %v694
    %v4478 = vunpack.c.h.b16 %v694
    %v4479 = vunpack.c.l.b16 %v695
    %v4480 = vunpack.c.l.b16 %v696
    %v4481 = vunpack.c.h.b16 %v696
    %v4482 = vunpack.c.l.b16 %v697
    %v4483 = vunpack.c.l.b16 %v698
    %v4484 = vunpack.c.h.b16 %v698
    %v4485 = vunpack.c.l.b16 %v699
    %v4486 = vunpack.c.l.b16 %v700
    %v4487 = vunpack.c.h.b16 %v700
    %v4488 = vunpack.c.l.b16 %v701
    %v4489 = vunpack.c.l.b16 %v702
    %v4490 = vunpack.c.h.b16 %v702
    %v4491 = vunpack.c.l.b16 %v703
    %v4492 = vunpack.c.l.b16 %v704
    %v4493 = vunpack.c.h.b16 %v704
    %v4494 = vunpack.c.l.b16 %v705
    %v4495 = vunpack.c.l.b16 %v706
    %v4496 = vunpack.c.h.b16 %v706
    %v4497 = vunpack.c.l.b16 %v707
    %v4498 = vunpack.c.l.b16 %v708
    %v4499 = vunpack.c.h.b16 %v708
    %v4500 = vunpack.c.l.b16 %v709
    %v4501 = vunpack.c.l.b16 %v710
    %v4502 = vunpack.c.h.b16 %v710
    %v4503 = vunpack.c.l.b16 %v711
    %v4504 = vunpack.c.l.b16 %v712
    %v4505 = vunpack.c.h.b16 %v712
    %v4506 = vunpack.c.l.b16 %v713
    %v4507 = vunpack.c.l.b16 %v714
    %v4508 = vunpack.c.h.b16 %v714
    %v4509 = vunpack.c.l.b16 %v715
    %v4510 = vunpack.c.l.b16 %v716
    %v4511 = vunpack.c.h.b16 %v716
    %v4512 = vunpack.c.l.b16 %v717
    %v4513 = vpack.c.b16 %v3892, %v3889
    %v4514 = vpack.c.b16 %v3893, %v3890
    %v4515 = vpack.c.b16 %v3894, %v3891
    %v4516 = vpack.c.b16 %v3898, %v3895
    %v4517 = vpack.c.b16 %v3899, %v3896
    %v4518 = vpack.c.b16 %v3900, %v3897
    %v4519 = vpack.c.b16 %v3904, %v3901
    %v4520 = vpack.c.b16 %v3905, %v3902
    %v4521 = vpack.c.b16 %v3906, %v3903
    %v4522 = vpack.c.b16 %v3910, %v3907
    %v4523 = vpack.c.b16 %v3911, %v3908
    %v4524 = vpack.c.b16 %v3912, %v3909
    %v4525 = vpack.c.b16 %v3916, %v3913
    %v4526 = vpack.c.b16 %v3917, %v3914
    %v4527 = vpack.c.b16 %v3918, %v3915
    %v4528 = vpack.c.b16 %v3922, %v3919
    %v4529 = vpack.c.b16 %v3923, %v3920
    %v4530 = vpack.c.b16 %v3924, %v3921
    %v4531 = vpack.c.b16 %v3928, %v3925
    %v4532 = vpack.c.b16 %v3929, %v3926
    %v4533 = vpack.c.b16 %v3930, %v3927
    %v4534 = vpack.c.b16 %v3934, %v3931
    %v4535 = vpack.c.b16 %v3935, %v3932
    %v4536 = vpack.c.b16 %v3936, %v3933
    %v4537 = vpack.c.b16 %v3940, %v3937
    %v4538 = vpack.c.b16 %v3941, %v3938
    %v4539 = vpack.c.b16 %v3942, %v3939
    %v4540 = vpack.c.b16 %v3946, %v3943
    %v4541 = vpack.c.b16 %v3947, %v3944
    %v4542 = vpack.c.b16 %v3948, %v3945
    %v4543 = vpack.c.b16 %v3952, %v3949
    %v4544 = vpack.c.b16 %v3953, %v3950
    %v4545 = vpack.c.b16 %v3954, %v3951
    %v4546 = vpack.c.b16 %v3958, %v3955
    %v4547 = vpack.c.b16 %v3959, %v3956
    %v4548 = vpack.c.b16 %v3960, %v3957
    %v4549 = vpack.c.b16 %v3964, %v3961
    %v4550 = vpack.c.b16 %v3965, %v3962
    %v4551 = vpack.c.b16 %v3966, %v3963
    %v4552 = vpack.c.b16 %v3970, %v3967
    %v4553 = vpack.c.b16 %v3971, %v3968
    %v4554 = vpack.c.b16 %v3972, %v3969
    %v4555 = vpack.c.b16 %v3976, %v3973
    %v4556 = vpack.c.b16 %v3977, %v3974
    %v4557 = vpack.c.b16 %v3978, %v3975
    %v4558 = vpack.c.b16 %v3982, %v3979
    %v4559 = vpack.c.b16 %v3983, %v3980
    %v4560 = vpack.c.b16 %v3984, %v3981
    %v4561 = vpack.c.b16 %v3988, %v3985
    %v4562 = vpack.c.b16 %v3989, %v3986
    %v4563 = vpack.c.b16 %v3990, %v3987
    %v4564 = vpack.c.b16 %v3994, %v3991
    %v4565 = vpack.c.b16 %v3995, %v3992
    %v4566 = vpack.c.b16 %v3996, %v3993
    %v4567 = vpack.c.b16 %v4000, %v3997
    %v4568 = vpack.c.b16 %v4001, %v3998
    %v4569 = vpack.c.b16 %v4002, %v3999
    %v4570 = vpack.c.b16 %v4006, %v4003
    %v4571 = vpack.c.b16 %v4007, %v4004
    %v4572 = vpack.c.b16 %v4008, %v4005
    %v4573 = vpack.c.b16 %v4012, %v4009
    %v4574 = vpack.c.b16 %v4013, %v4010
    %v4575 = vpack.c.b16 %v4014, %v4011
    %v4576 = vpack.c.b16 %v4018, %v4015
    %v4577 = vpack.c.b16 %v4019, %v4016
    %v4578 = vpack.c.b16 %v4020, %v4017
    %v4579 = vpack.c.b16 %v4024, %v4021
    %v4580 = vpack.c.b16 %v4025, %v4022
    %v4581 = vpack.c.b16 %v4026, %v4023
    %v4582 = vpack.c.b16 %v4030, %v4027
    %v4583 = vpack.c.b16 %v4031, %v4028
    %v4584 = vpack.c.b16 %v4032, %v4029
    %v4585 = vpack.c.b16 %v4036, %v4033
    %v4586 = vpack.c.b16 %v4037, %v4034
    %v4587 = vpack.c.b16 %v4038, %v4035
    %v4588 = vpack.c.b16 %v4042, %v4039
    %v4589 = vpack.c.b16 %v4043, %v4040
    %v4590 = vpack.c.b16 %v4044, %v4041
    %v4591 = vpack.c.b16 %v4048, %v4045
    %v4592 = vpack.c.b16 %v4049, %v4046
    %v4593 = vpack.c.b16 %v4050, %v4047
    %v4594 = vpack.c.b16 %v4054, %v4051
    %v4595 = vpack.c.b16 %v4055, %v4052
    %v4596 = vpack.c.b16 %v4056, %v4053
    %v4597 = vpack.c.b16 %v4060, %v4057
    %v4598 = vpack.c.b16 %v4061, %v4058
    %v4599 = vpack.c.b16 %v4062, %v4059
    %v4600 = vpack.c.b16 %v4066, %v4063
    %v4601 = vpack.c.b16 %v4067, %v4064
    %v4602 = vpack.c.b16 %v4068, %v4065
    %v4603 = vpack.c.b16 %v4072, %v4069
    %v4604 = vpack.c.b16 %v4073, %v4070
    %v4605 = vpack.c.b16 %v4074, %v4071
    %v4606 = vpack.c.b16 %v4078, %v4075
    %v4607 = vpack.c.b16 %v4079, %v4076
    %v4608 = vpack.c.b16 %v4080, %v4077
    %v4609 = vpack.c.b16 %v4084, %v4081
    %v4610 = vpack.c.b16 %v4085, %v4082
    %v4611 = vpack.c.b16 %v4086, %v4083
    %v4612 = vpack.c.b16 %v4090, %v4087
    %v4613 = vpack.c.b16 %v4091, %v4088
    %v4614 = vpack.c.b16 %v4092, %v4089
    %v4615 = vpack.c.b16 %v4096, %v4093
    %v4616 = vpack.c.b16 %v4097, %v4094
    %v4617 = vpack.c.b16 %v4098, %v4095
    %v4618 = vpack.c.b16 %v4102, %v4099
    %v4619 = vpack.c.b16 %v4103, %v4100
    %v4620 = vpack.c.b16 %v4104, %v4101
    %v4621 = vpack.c.b16 %v4108, %v4105
    %v4622 = vpack.c.b16 %v4109, %v4106
    %v4623 = vpack.c.b16 %v4110, %v4107
    %v4624 = vpack.c.b16 %v4114, %v4111
    %v4625 = vpack.c.b16 %v4115, %v4112
    %v4626 = vpack.c.b16 %v4116, %v4113
    %v4627 = vpack.c.b16 %v4120, %v4117
    %v4628 = vpack.c.b16 %v4121, %v4118
    %v4629 = vpack.c.b16 %v4122, %v4119
    %v4630 = vpack.c.b16 %v4126, %v4123
    %v4631 = vpack.c.b16 %v4127, %v4124
    %v4632 = vpack.c.b16 %v4128, %v4125
    %v4633 = vpack.c.b16 %v4132, %v4129
    %v4634 = vpack.c.b16 %v4133, %v4130
    %v4635 = vpack.c.b16 %v4134, %v4131
    %v4636 = vpack.c.b16 %v4138, %v4135
    %v4637 = vpack.c.b16 %v4139, %v4136
    %v4638 = vpack.c.b16 %v4140, %v4137
    %v4639 = vpack.c.b16 %v4144, %v4141
    %v4640 = vpack.c.b16 %v4145, %v4142
    %v4641 = vpack.c.b16 %v4146, %v4143
    %v4642 = vpack.c.b16 %v4150, %v4147
    %v4643 = vpack.c.b16 %v4151, %v4148
    %v4644 = vpack.c.b16 %v4152, %v4149
    %v4645 = vpack.c.b16 %v4156, %v4153
    %v4646 = vpack.c.b16 %v4157, %v4154
    %v4647 = vpack.c.b16 %v4158, %v4155
    %v4648 = vpack.c.b16 %v4162, %v4159
    %v4649 = vpack.c.b16 %v4163, %v4160
    %v4650 = vpack.c.b16 %v4164, %v4161
    %v4651 = vpack.c.b16 %v4168, %v4165
    %v4652 = vpack.c.b16 %v4169, %v4166
    %v4653 = vpack.c.b16 %v4170, %v4167
    %v4654 = vpack.c.b16 %v4174, %v4171
    %v4655 = vpack.c.b16 %v4175, %v4172
    %v4656 = vpack.c.b16 %v4176, %v4173
    %v4657 = vpack.c.b16 %v4180, %v4177
    %v4658 = vpack.c.b16 %v4181, %v4178
    %v4659 = vpack.c.b16 %v4182, %v4179
    %v4660 = vpack.c.b16 %v4186, %v4183
    %v4661 = vpack.c.b16 %v4187, %v4184
    %v4662 = vpack.c.b16 %v4188, %v4185
    %v4663 = vpack.c.b16 %v4192, %v4189
    %v4664 = vpack.c.b16 %v4193, %v4190
    %v4665 = vpack.c.b16 %v4194, %v4191
    %v4666 = vpack.c.b16 %v4198, %v4195
    %v4667 = vpack.c.b16 %v4199, %v4196
    %v4668 = vpack.c.b16 %v4200, %v4197
    %v4669 = vpack.c.b16 %v4204, %v4201
    %v4670 = vpack.c.b16 %v4205, %v4202
    %v4671 = vpack.c.b16 %v4206, %v4203
    %v4672 = vpack.c.b16 %v4210, %v4207
    %v4673 = vpack.c.b16 %v4211, %v4208
    %v4674 = vpack.c.b16 %v4212, %v4209
    %v4675 = vpack.c.b16 %v4216, %v4213
    %v4676 = vpack.c.b16 %v4217, %v4214
    %v4677 = vpack.c.b16 %v4218, %v4215
    %v4678 = vpack.c.b16 %v4222, %v4219
    %v4679 = vpack.c.b16 %v4223, %v4220
    %v4680 = vpack.c.b16 %v4224, %v4221
    %v4681 = vpack.c.b16 %v4228, %v4225
    %v4682 = vpack.c.b16 %v4229, %v4226
    %v4683 = vpack.c.b16 %v4230, %v4227
    %v4684 = vpack.c.b16 %v4234, %v4231
    %v4685 = vpack.c.b16 %v4235, %v4232
    %v4686 = vpack.c.b16 %v4236, %v4233
    %v4687 = vpack.c.b16 %v4240, %v4237
    %v4688 = vpack.c.b16 %v4241, %v4238
    %v4689 = vpack.c.b16 %v4242, %v4239
    %v4690 = vpack.c.b16 %v4246, %v4243
    %v4691 = vpack.c.b16 %v4247, %v4244
    %v4692 = vpack.c.b16 %v4248, %v4245
    %v4693 = vpack.c.b16 %v4252, %v4249
    %v4694 = vpack.c.b16 %v4253, %v4250
    %v4695 = vpack.c.b16 %v4254, %v4251
    %v4696 = vpack.c.b16 %v4258, %v4255
    %v4697 = vpack.c.b16 %v4259, %v4256
    %v4698 = vpack.c.b16 %v4260, %v4257
    %v4699 = vpack.c.b16 %v4264, %v4261
    %v4700 = vpack.c.b16 %v4265, %v4262
    %v4701 = vpack.c.b16 %v4266, %v4263
    %v4702 = vpack.c.b16 %v4270, %v4267
    %v4703 = vpack.c.b16 %v4271, %v4268
    %v4704 = vpack.c.b16 %v4272, %v4269
    %v4705 = vpack.c.b16 %v4276, %v4273
    %v4706 = vpack.c.b16 %v4277, %v4274
    %v4707 = vpack.c.b16 %v4278, %v4275
    %v4708 = vpack.c.b16 %v4282, %v4279
    %v4709 = vpack.c.b16 %v4283, %v4280
    %v4710 = vpack.c.b16 %v4284, %v4281
    %v4711 = vpack.c.b16 %v4288, %v4285
    %v4712 = vpack.c.b16 %v4289, %v4286
    %v4713 = vpack.c.b16 %v4290, %v4287
    %v4714 = vpack.c.b16 %v4294, %v4291
    %v4715 = vpack.c.b16 %v4295, %v4292
    %v4716 = vpack.c.b16 %v4296, %v4293
    %v4717 = vpack.c.b16 %v4300, %v4297
    %v4718 = vpack.c.b16 %v4301, %v4298
    %v4719 = vpack.c.b16 %v4302, %v4299
    %v4720 = vpack.c.b16 %v4306, %v4303
    %v4721 = vpack.c.b16 %v4307, %v4304
    %v4722 = vpack.c.b16 %v4308, %v4305
    %v4723 = vpack.c.b16 %v4312, %v4309
    %v4724 = vpack.c.b16 %v4313, %v4310
    %v4725 = vpack.c.b16 %v4314, %v4311
    %v4726 = vpack.c.b16 %v4318, %v4315
    %v4727 = vpack.c.b16 %v4319, %v4316
    %v4728 = vpack.c.b16 %v4320, %v4317
    %v4729 = vpack.c.b16 %v4324, %v4321
    %v4730 = vpack.c.b16 %v4325, %v4322
    %v4731 = vpack.c.b16 %v4326, %v4323
    %v4732 = vpack.c.b16 %v4330, %v4327
    %v4733 = vpack.c.b16 %v4331, %v4328
    %v4734 = vpack.c.b16 %v4332, %v4329
    %v4735 = vpack.c.b16 %v4336, %v4333
    %v4736 = vpack.c.b16 %v4337, %v4334
    %v4737 = vpack.c.b16 %v4338, %v4335
    %v4738 = vpack.c.b16 %v4342, %v4339
    %v4739 = vpack.c.b16 %v4343, %v4340
    %v4740 = vpack.c.b16 %v4344, %v4341
    %v4741 = vpack.c.b16 %v4348, %v4345
    %v4742 = vpack.c.b16 %v4349, %v4346
    %v4743 = vpack.c.b16 %v4350, %v4347
    %v4744 = vpack.c.b16 %v4354, %v4351
    %v4745 = vpack.c.b16 %v4355, %v4352
    %v4746 = vpack.c.b16 %v4356, %v4353
    %v4747 = vpack.c.b16 %v4360, %v4357
    %v4748 = vpack.c.b16 %v4361, %v4358
    %v4749 = vpack.c.b16 %v4362, %v4359
    %v4750 = vpack.c.b16 %v4366, %v4363
    %v4751 = vpack.c.b16 %v4367, %v4364
    %v4752 = vpack.c.b16 %v4368, %v4365
    %v4753 = vpack.c.b16 %v4372, %v4369
    %v4754 = vpack.c.b16 %v4373, %v4370
    %v4755 = vpack.c.b16 %v4374, %v4371
    %v4756 = vpack.c.b16 %v4378, %v4375
    %v4757 = vpack.c.b16 %v4379, %v4376
    %v4758 = vpack.c.b16 %v4380, %v4377
    %v4759 = vpack.c.b16 %v4384, %v4381
    %v4760 = vpack.c.b16 %v4385, %v4382
    %v4761 = vpack.c.b16 %v4386, %v4383
    %v4762 = vpack.c.b16 %v4390, %v4387
    %v4763 = vpack.c.b16 %v4391, %v4388
    %v4764 = vpack.c.b16 %v4392, %v4389
    %v4765 = vpack.c.b16 %v4396, %v4393
    %v4766 = vpack.c.b16 %v4397, %v4394
    %v4767 = vpack.c.b16 %v4398, %v4395
    %v4768 = vpack.c.b16 %v4402, %v4399
    %v4769 = vpack.c.b16 %v4403, %v4400
    %v4770 = vpack.c.b16 %v4404, %v4401
    %v4771 = vpack.c.b16 %v4408, %v4405
    %v4772 = vpack.c.b16 %v4409, %v4406
    %v4773 = vpack.c.b16 %v4410, %v4407
    %v4774 = vpack.c.b16 %v4414, %v4411
    %v4775 = vpack.c.b16 %v4415, %v4412
    %v4776 = vpack.c.b16 %v4416, %v4413
    %v4777 = vpack.c.b16 %v4420, %v4417
    %v4778 = vpack.c.b16 %v4421, %v4418
    %v4779 = vpack.c.b16 %v4422, %v4419
    %v4780 = vpack.c.b16 %v4426, %v4423
    %v4781 = vpack.c.b16 %v4427, %v4424
    %v4782 = vpack.c.b16 %v4428, %v4425
    %v4783 = vpack.c.b16 %v4432, %v4429
    %v4784 = vpack.c.b16 %v4433, %v4430
    %v4785 = vpack.c.b16 %v4434, %v4431
    %v4786 = vpack.c.b16 %v4438, %v4435
    %v4787 = vpack.c.b16 %v4439, %v4436
    %v4788 = vpack.c.b16 %v4440, %v4437
    %v4789 = vpack.c.b16 %v4444, %v4441
    %v4790 = vpack.c.b16 %v4445, %v4442
    %v4791 = vpack.c.b16 %v4446, %v4443
    %v4792 = vpack.c.b16 %v4450, %v4447
    %v4793 = vpack.c.b16 %v4451, %v4448
    %v4794 = vpack.c.b16 %v4452, %v4449
    %v4795 = vpack.c.b16 %v4456, %v4453
    %v4796 = vpack.c.b16 %v4457, %v4454
    %v4797 = vpack.c.b16 %v4458, %v4455
    %v4798 = vpack.c.b16 %v4462, %v4459
    %v4799 = vpack.c.b16 %v4463, %v4460
    %v4800 = vpack.c.b16 %v4464, %v4461
    %v4801 = vpack.c.b16 %v4468, %v4465
    %v4802 = vpack.c.b16 %v4469, %v4466
    %v4803 = vpack.c.b16 %v4470, %v4467
    %v4804 = vpack.c.b16 %v4474, %v4471
    %v4805 = vpack.c.b16 %v4475, %v4472
    %v4806 = vpack.c.b16 %v4476, %v4473
    %v4807 = vpack.c.b16 %v4480, %v4477
    %v4808 = vpack.c.b16 %v4481, %v4478
    %v4809 = vpack.c.b16 %v4482, %v4479
    %v4810 = vpack.c.b16 %v4486, %v4483
    %v4811 = vpack.c.b16 %v4487, %v4484
    %v4812 = vpack.c.b16 %v4488, %v4485
    %v4813 = vpack.c.b16 %v4492, %v4489
    %v4814 = vpack.c.b16 %v4493, %v4490
    %v4815 = vpack.c.b16 %v4494, %v4491
    %v4816 = vpack.c.b16 %v4498, %v4495
    %v4817 = vpack.c.b16 %v4499, %v4496
    %v4818 = vpack.c.b16 %v4500, %v4497
    %v4819 = vpack.c.b16 %v4504, %v4501
    %v4820 = vpack.c.b16 %v4505, %v4502
    %v4821 = vpack.c.b16 %v4506, %v4503
    %v4822 = vpack.c.b16 %v4510, %v4507
    %v4823 = vpack.c.b16 %v4511, %v4508
    %v4824 = vpack.c.b16 %v4512, %v4509
    %5137 = vmatpush.bf16.msra.mxu0 %v4534
    %5138 = vmatpush.bf16.msra.mxu0 %v4531
    %5139 = vmatpush.bf16.msra.mxu0 %v4528
    %5140 = vmatpush.bf16.msra.mxu0 %v4525
    %5141 = vmatpush.bf16.msra.mxu0 %v4522
    %5142 = vmatpush.bf16.msra.mxu0 %v4519
    %5143 = vmatpush.bf16.msra.mxu0 %v4516
    %5144 = vmatpush.bf16.msra.mxu0 %v4513
    %5145 = vmatmul.bf16.gmra.mxu0 %v289
    %v5146 = vpop.f32.mrf.mxu0
    %v5147 = vadd.f32 %v3132, %v5146
    %v5148 = vpop.f32.mrf.mxu0
    %5149 = vdwg.mxu0
    %5150 = vmatpush.bf16.msra.mxu0 %v4558
    %5151 = vmatpush.bf16.msra.mxu0 %v4555
    %5152 = vmatpush.bf16.msra.mxu0 %v4552
    %5153 = vmatpush.bf16.msra.mxu0 %v4549
    %5154 = vmatpush.bf16.msra.mxu0 %v4546
    %5155 = vmatpush.bf16.msra.mxu0 %v4543
    %5156 = vmatpush.bf16.msra.mxu0 %v4540
    %5157 = vmatpush.bf16.msra.mxu0 %v4537
    %5158 = vmatmul.bf16.gmra.mxu0 %v290
    %v5159 = vpop.f32.mrf.mxu0
    %v5160 = vadd.f32 %v5147, %v5159
    %v5161 = vpop.f32.mrf.mxu0
    %5162 = vdwg.mxu0
    %5163 = vmatpush.bf16.msra.mxu0 %v4582
    %5164 = vmatpush.bf16.msra.mxu0 %v4579
    %5165 = vmatpush.bf16.msra.mxu0 %v4576
    %5166 = vmatpush.bf16.msra.mxu0 %v4573
    %5167 = vmatpush.bf16.msra.mxu0 %v4570
    %5168 = vmatpush.bf16.msra.mxu0 %v4567
    %5169 = vmatpush.bf16.msra.mxu0 %v4564
    %5170 = vmatpush.bf16.msra.mxu0 %v4561
    %5171 = vmatmul.bf16.gmra.mxu0 %v291
    %v5172 = vpop.f32.mrf.mxu0
    %v5173 = vadd.f32 %v5160, %v5172
    %v5174 = vpop.f32.mrf.mxu0
    %5175 = vdwg.mxu0
    %5176 = vmatpush.bf16.msra.mxu0 %v4606
    %5177 = vmatpush.bf16.msra.mxu0 %v4603
    %5178 = vmatpush.bf16.msra.mxu0 %v4600
    %5179 = vmatpush.bf16.msra.mxu0 %v4597
    %5180 = vmatpush.bf16.msra.mxu0 %v4594
    %5181 = vmatpush.bf16.msra.mxu0 %v4591
    %5182 = vmatpush.bf16.msra.mxu0 %v4588
    %5183 = vmatpush.bf16.msra.mxu0 %v4585
    %5184 = vmatmul.bf16.gmra.mxu0 %v292
    %v5185 = vpop.f32.mrf.mxu0
    %v5186 = vadd.f32 %v5173, %v5185
    %v5187 = vpop.f32.mrf.mxu0
    %5188 = vdwg.mxu0
    %5189 = vmatpush.bf16.msra.mxu0 %v4630
    %5190 = vmatpush.bf16.msra.mxu0 %v4627
    %5191 = vmatpush.bf16.msra.mxu0 %v4624
    %5192 = vmatpush.bf16.msra.mxu0 %v4621
    %5193 = vmatpush.bf16.msra.mxu0 %v4618
    %5194 = vmatpush.bf16.msra.mxu0 %v4615
    %5195 = vmatpush.bf16.msra.mxu0 %v4612
    %5196 = vmatpush.bf16.msra.mxu0 %v4609
    %5197 = vmatmul.bf16.gmra.mxu0 %v293
    %v5198 = vpop.f32.mrf.mxu0
    %v5199 = vadd.f32 %v5186, %v5198
    %v5200 = vpop.f32.mrf.mxu0
    %5201 = vdwg.mxu0
    %5202 = vmatpush.bf16.msra.mxu0 %v4654
    %5203 = vmatpush.bf16.msra.mxu0 %v4651
    %5204 = vmatpush.bf16.msra.mxu0 %v4648
    %5205 = vmatpush.bf16.msra.mxu0 %v4645
    %5206 = vmatpush.bf16.msra.mxu0 %v4642
    %5207 = vmatpush.bf16.msra.mxu0 %v4639
    %5208 = vmatpush.bf16.msra.mxu0 %v4636
    %5209 = vmatpush.bf16.msra.mxu0 %v4633
    %5210 = vmatmul.bf16.gmra.mxu0 %v294
    %v5211 = vpop.f32.mrf.mxu0
    %v5212 = vadd.f32 %v5199, %v5211
    %v5213 = vpop.f32.mrf.mxu0
    %5214 = vdwg.mxu0
    %5215 = vmatpush.bf16.msra.mxu0 %v4678
    %5216 = vmatpush.bf16.msra.mxu0 %v4675
    %5217 = vmatpush.bf16.msra.mxu0 %v4672
    %5218 = vmatpush.bf16.msra.mxu0 %v4669
    %5219 = vmatpush.bf16.msra.mxu0 %v4666
    %5220 = vmatpush.bf16.msra.mxu0 %v4663
    %5221 = vmatpush.bf16.msra.mxu0 %v4660
    %5222 = vmatpush.bf16.msra.mxu0 %v4657
    %5223 = vmatmul.bf16.gmra.mxu0 %v295
    %v5224 = vpop.f32.mrf.mxu0
    %v5225 = vadd.f32 %v5212, %v5224
    %v5226 = vpop.f32.mrf.mxu0
    %5227 = vdwg.mxu0
    %5228 = vmatpush.bf16.msra.mxu0 %v4702
    %5229 = vmatpush.bf16.msra.mxu0 %v4699
    %5230 = vmatpush.bf16.msra.mxu0 %v4696
    %5231 = vmatpush.bf16.msra.mxu0 %v4693
    %5232 = vmatpush.bf16.msra.mxu0 %v4690
    %5233 = vmatpush.bf16.msra.mxu0 %v4687
    %5234 = vmatpush.bf16.msra.mxu0 %v4684
    %5235 = vmatpush.bf16.msra.mxu0 %v4681
    %5236 = vmatmul.bf16.gmra.mxu0 %v296
    %v5237 = vpop.f32.mrf.mxu0
    %v5238 = vadd.f32 %v5225, %v5237
    %v5239 = vpop.f32.mrf.mxu0
    %5240 = vdwg.mxu0
    %5241 = vmatpush.bf16.msra.mxu0 %v4726
    %5242 = vmatpush.bf16.msra.mxu0 %v4723
    %5243 = vmatpush.bf16.msra.mxu0 %v4720
    %5244 = vmatpush.bf16.msra.mxu0 %v4717
    %5245 = vmatpush.bf16.msra.mxu0 %v4714
    %5246 = vmatpush.bf16.msra.mxu0 %v4711
    %5247 = vmatpush.bf16.msra.mxu0 %v4708
    %5248 = vmatpush.bf16.msra.mxu0 %v4705
    %5249 = vmatmul.bf16.gmra.mxu0 %v297
    %v5250 = vpop.f32.mrf.mxu0
    %v5251 = vadd.f32 %v5238, %v5250
    %v5252 = vpop.f32.mrf.mxu0
    %5253 = vdwg.mxu0
    %5254 = vmatpush.bf16.msra.mxu0 %v4750
    %5255 = vmatpush.bf16.msra.mxu0 %v4747
    %5256 = vmatpush.bf16.msra.mxu0 %v4744
    %5257 = vmatpush.bf16.msra.mxu0 %v4741
    %5258 = vmatpush.bf16.msra.mxu0 %v4738
    %5259 = vmatpush.bf16.msra.mxu0 %v4735
    %5260 = vmatpush.bf16.msra.mxu0 %v4732
    %5261 = vmatpush.bf16.msra.mxu0 %v4729
    %5262 = vmatmul.bf16.gmra.mxu0 %v298
    %v5263 = vpop.f32.mrf.mxu0
    %v5264 = vadd.f32 %v5251, %v5263
    %v5265 = vpop.f32.mrf.mxu0
    %5266 = vdwg.mxu0
    %5267 = vmatpush.bf16.msra.mxu0 %v4774
    %5268 = vmatpush.bf16.msra.mxu0 %v4771
    %5269 = vmatpush.bf16.msra.mxu0 %v4768
    %5270 = vmatpush.bf16.msra.mxu0 %v4765
    %5271 = vmatpush.bf16.msra.mxu0 %v4762
    %5272 = vmatpush.bf16.msra.mxu0 %v4759
    %5273 = vmatpush.bf16.msra.mxu0 %v4756
    %5274 = vmatpush.bf16.msra.mxu0 %v4753
    %5275 = vmatmul.bf16.gmra.mxu0 %v299
    %v5276 = vpop.f32.mrf.mxu0
    %v5277 = vadd.f32 %v5264, %v5276
    %v5278 = vpop.f32.mrf.mxu0
    %5279 = vdwg.mxu0
    %5280 = vmatpush.bf16.msra.mxu0 %v4798
    %5281 = vmatpush.bf16.msra.mxu0 %v4795
    %5282 = vmatpush.bf16.msra.mxu0 %v4792
    %5283 = vmatpush.bf16.msra.mxu0 %v4789
    %5284 = vmatpush.bf16.msra.mxu0 %v4786
    %5285 = vmatpush.bf16.msra.mxu0 %v4783
    %5286 = vmatpush.bf16.msra.mxu0 %v4780
    %5287 = vmatpush.bf16.msra.mxu0 %v4777
    %5288 = vmatmul.bf16.gmra.mxu0 %v300
    %v5289 = vpop.f32.mrf.mxu0
    %v5290 = vadd.f32 %v5277, %v5289
    %v5291 = vpop.f32.mrf.mxu0
    %5292 = vdwg.mxu0
    %5293 = vmatpush.bf16.msra.mxu0 %v4822
    %5294 = vmatpush.bf16.msra.mxu0 %v4819
    %5295 = vmatpush.bf16.msra.mxu0 %v4816
    %5296 = vmatpush.bf16.msra.mxu0 %v4813
    %5297 = vmatpush.bf16.msra.mxu0 %v4810
    %5298 = vmatpush.bf16.msra.mxu0 %v4807
    %5299 = vmatpush.bf16.msra.mxu0 %v4804
    %5300 = vmatpush.bf16.msra.mxu0 %v4801
    %5301 = vmatmul.bf16.gmra.mxu0 %v301
    %v5302 = vpop.f32.mrf.mxu0
    %v5303 = vadd.f32 %v5290, %v5302
    %v5304 = vpop.f32.mrf.mxu0
    %5305 = vdwg.mxu0
    %5306 = vmatpush.bf16.msra.mxu0 %v4535
    %5307 = vmatpush.bf16.msra.mxu0 %v4532
    %5308 = vmatpush.bf16.msra.mxu0 %v4529
    %5309 = vmatpush.bf16.msra.mxu0 %v4526
    %5310 = vmatpush.bf16.msra.mxu0 %v4523
    %5311 = vmatpush.bf16.msra.mxu0 %v4520
    %5312 = vmatpush.bf16.msra.mxu0 %v4517
    %5313 = vmatpush.bf16.msra.mxu0 %v4514
    %5314 = vmatmul.bf16.gmra.mxu0 %v289
    %v5315 = vpop.f32.mrf.mxu0
    %v5316 = vadd.f32 %v3301, %v5315
    %v5317 = vpop.f32.mrf.mxu0
    %5318 = vdwg.mxu0
    %5319 = vmatpush.bf16.msra.mxu0 %v4559
    %5320 = vmatpush.bf16.msra.mxu0 %v4556
    %5321 = vmatpush.bf16.msra.mxu0 %v4553
    %5322 = vmatpush.bf16.msra.mxu0 %v4550
    %5323 = vmatpush.bf16.msra.mxu0 %v4547
    %5324 = vmatpush.bf16.msra.mxu0 %v4544
    %5325 = vmatpush.bf16.msra.mxu0 %v4541
    %5326 = vmatpush.bf16.msra.mxu0 %v4538
    %5327 = vmatmul.bf16.gmra.mxu0 %v290
    %v5328 = vpop.f32.mrf.mxu0
    %v5329 = vadd.f32 %v5316, %v5328
    %v5330 = vpop.f32.mrf.mxu0
    %5331 = vdwg.mxu0
    %5332 = vmatpush.bf16.msra.mxu0 %v4583
    %5333 = vmatpush.bf16.msra.mxu0 %v4580
    %5334 = vmatpush.bf16.msra.mxu0 %v4577
    %5335 = vmatpush.bf16.msra.mxu0 %v4574
    %5336 = vmatpush.bf16.msra.mxu0 %v4571
    %5337 = vmatpush.bf16.msra.mxu0 %v4568
    %5338 = vmatpush.bf16.msra.mxu0 %v4565
    %5339 = vmatpush.bf16.msra.mxu0 %v4562
    %5340 = vmatmul.bf16.gmra.mxu0 %v291
    %v5341 = vpop.f32.mrf.mxu0
    %v5342 = vadd.f32 %v5329, %v5341
    %v5343 = vpop.f32.mrf.mxu0
    %5344 = vdwg.mxu0
    %5345 = vmatpush.bf16.msra.mxu0 %v4607
    %5346 = vmatpush.bf16.msra.mxu0 %v4604
    %5347 = vmatpush.bf16.msra.mxu0 %v4601
    %5348 = vmatpush.bf16.msra.mxu0 %v4598
    %5349 = vmatpush.bf16.msra.mxu0 %v4595
    %5350 = vmatpush.bf16.msra.mxu0 %v4592
    %5351 = vmatpush.bf16.msra.mxu0 %v4589
    %5352 = vmatpush.bf16.msra.mxu0 %v4586
    %5353 = vmatmul.bf16.gmra.mxu0 %v292
    %v5354 = vpop.f32.mrf.mxu0
    %v5355 = vadd.f32 %v5342, %v5354
    %v5356 = vpop.f32.mrf.mxu0
    %5357 = vdwg.mxu0
    %5358 = vmatpush.bf16.msra.mxu0 %v4631
    %5359 = vmatpush.bf16.msra.mxu0 %v4628
    %5360 = vmatpush.bf16.msra.mxu0 %v4625
    %5361 = vmatpush.bf16.msra.mxu0 %v4622
    %5362 = vmatpush.bf16.msra.mxu0 %v4619
    %5363 = vmatpush.bf16.msra.mxu0 %v4616
    %5364 = vmatpush.bf16.msra.mxu0 %v4613
    %5365 = vmatpush.bf16.msra.mxu0 %v4610
    %5366 = vmatmul.bf16.gmra.mxu0 %v293
    %v5367 = vpop.f32.mrf.mxu0
    %v5368 = vadd.f32 %v5355, %v5367
    %v5369 = vpop.f32.mrf.mxu0
    %5370 = vdwg.mxu0
    %5371 = vmatpush.bf16.msra.mxu0 %v4655
    %5372 = vmatpush.bf16.msra.mxu0 %v4652
    %5373 = vmatpush.bf16.msra.mxu0 %v4649
    %5374 = vmatpush.bf16.msra.mxu0 %v4646
    %5375 = vmatpush.bf16.msra.mxu0 %v4643
    %5376 = vmatpush.bf16.msra.mxu0 %v4640
    %5377 = vmatpush.bf16.msra.mxu0 %v4637
    %5378 = vmatpush.bf16.msra.mxu0 %v4634
    %5379 = vmatmul.bf16.gmra.mxu0 %v294
    %v5380 = vpop.f32.mrf.mxu0
    %v5381 = vadd.f32 %v5368, %v5380
    %v5382 = vpop.f32.mrf.mxu0
    %5383 = vdwg.mxu0
    %5384 = vmatpush.bf16.msra.mxu0 %v4679
    %5385 = vmatpush.bf16.msra.mxu0 %v4676
    %5386 = vmatpush.bf16.msra.mxu0 %v4673
    %5387 = vmatpush.bf16.msra.mxu0 %v4670
    %5388 = vmatpush.bf16.msra.mxu0 %v4667
    %5389 = vmatpush.bf16.msra.mxu0 %v4664
    %5390 = vmatpush.bf16.msra.mxu0 %v4661
    %5391 = vmatpush.bf16.msra.mxu0 %v4658
    %5392 = vmatmul.bf16.gmra.mxu0 %v295
    %v5393 = vpop.f32.mrf.mxu0
    %v5394 = vadd.f32 %v5381, %v5393
    %v5395 = vpop.f32.mrf.mxu0
    %5396 = vdwg.mxu0
    %5397 = vmatpush.bf16.msra.mxu0 %v4703
    %5398 = vmatpush.bf16.msra.mxu0 %v4700
    %5399 = vmatpush.bf16.msra.mxu0 %v4697
    %5400 = vmatpush.bf16.msra.mxu0 %v4694
    %5401 = vmatpush.bf16.msra.mxu0 %v4691
    %5402 = vmatpush.bf16.msra.mxu0 %v4688
    %5403 = vmatpush.bf16.msra.mxu0 %v4685
    %5404 = vmatpush.bf16.msra.mxu0 %v4682
    %5405 = vmatmul.bf16.gmra.mxu0 %v296
    %v5406 = vpop.f32.mrf.mxu0
    %v5407 = vadd.f32 %v5394, %v5406
    %v5408 = vpop.f32.mrf.mxu0
    %5409 = vdwg.mxu0
    %5410 = vmatpush.bf16.msra.mxu0 %v4727
    %5411 = vmatpush.bf16.msra.mxu0 %v4724
    %5412 = vmatpush.bf16.msra.mxu0 %v4721
    %5413 = vmatpush.bf16.msra.mxu0 %v4718
    %5414 = vmatpush.bf16.msra.mxu0 %v4715
    %5415 = vmatpush.bf16.msra.mxu0 %v4712
    %5416 = vmatpush.bf16.msra.mxu0 %v4709
    %5417 = vmatpush.bf16.msra.mxu0 %v4706
    %5418 = vmatmul.bf16.gmra.mxu0 %v297
    %v5419 = vpop.f32.mrf.mxu0
    %v5420 = vadd.f32 %v5407, %v5419
    %v5421 = vpop.f32.mrf.mxu0
    %5422 = vdwg.mxu0
    %5423 = vmatpush.bf16.msra.mxu0 %v4751
    %5424 = vmatpush.bf16.msra.mxu0 %v4748
    %5425 = vmatpush.bf16.msra.mxu0 %v4745
    %5426 = vmatpush.bf16.msra.mxu0 %v4742
    %5427 = vmatpush.bf16.msra.mxu0 %v4739
    %5428 = vmatpush.bf16.msra.mxu0 %v4736
    %5429 = vmatpush.bf16.msra.mxu0 %v4733
    %5430 = vmatpush.bf16.msra.mxu0 %v4730
    %5431 = vmatmul.bf16.gmra.mxu0 %v298
    %v5432 = vpop.f32.mrf.mxu0
    %v5433 = vadd.f32 %v5420, %v5432
    %v5434 = vpop.f32.mrf.mxu0
    %5435 = vdwg.mxu0
    %5436 = vmatpush.bf16.msra.mxu0 %v4775
    %5437 = vmatpush.bf16.msra.mxu0 %v4772
    %5438 = vmatpush.bf16.msra.mxu0 %v4769
    %5439 = vmatpush.bf16.msra.mxu0 %v4766
    %5440 = vmatpush.bf16.msra.mxu0 %v4763
    %5441 = vmatpush.bf16.msra.mxu0 %v4760
    %5442 = vmatpush.bf16.msra.mxu0 %v4757
    %5443 = vmatpush.bf16.msra.mxu0 %v4754
    %5444 = vmatmul.bf16.gmra.mxu0 %v299
    %v5445 = vpop.f32.mrf.mxu0
    %v5446 = vadd.f32 %v5433, %v5445
    %v5447 = vpop.f32.mrf.mxu0
    %5448 = vdwg.mxu0
    %5449 = vmatpush.bf16.msra.mxu0 %v4799
    %5450 = vmatpush.bf16.msra.mxu0 %v4796
    %5451 = vmatpush.bf16.msra.mxu0 %v4793
    %5452 = vmatpush.bf16.msra.mxu0 %v4790
    %5453 = vmatpush.bf16.msra.mxu0 %v4787
    %5454 = vmatpush.bf16.msra.mxu0 %v4784
    %5455 = vmatpush.bf16.msra.mxu0 %v4781
    %5456 = vmatpush.bf16.msra.mxu0 %v4778
    %5457 = vmatmul.bf16.gmra.mxu0 %v300
    %v5458 = vpop.f32.mrf.mxu0
    %v5459 = vadd.f32 %v5446, %v5458
    %v5460 = vpop.f32.mrf.mxu0
    %5461 = vdwg.mxu0
    %5462 = vmatpush.bf16.msra.mxu0 %v4823
    %5463 = vmatpush.bf16.msra.mxu0 %v4820
    %5464 = vmatpush.bf16.msra.mxu0 %v4817
    %5465 = vmatpush.bf16.msra.mxu0 %v4814
    %5466 = vmatpush.bf16.msra.mxu0 %v4811
    %5467 = vmatpush.bf16.msra.mxu0 %v4808
    %5468 = vmatpush.bf16.msra.mxu0 %v4805
    %5469 = vmatpush.bf16.msra.mxu0 %v4802
    %5470 = vmatmul.bf16.gmra.mxu0 %v301
    %v5471 = vpop.f32.mrf.mxu0
    %v5472 = vadd.f32 %v5459, %v5471
    %v5473 = vpop.f32.mrf.mxu0
    %5474 = vdwg.mxu0
    %5475 = vmatpush.bf16.msra.mxu0 %v4536
    %5476 = vmatpush.bf16.msra.mxu0 %v4533
    %5477 = vmatpush.bf16.msra.mxu0 %v4530
    %5478 = vmatpush.bf16.msra.mxu0 %v4527
    %5479 = vmatpush.bf16.msra.mxu0 %v4524
    %5480 = vmatpush.bf16.msra.mxu0 %v4521
    %5481 = vmatpush.bf16.msra.mxu0 %v4518
    %5482 = vmatpush.bf16.msra.mxu0 %v4515
    %5483 = vmatmul.bf16.gmra.mxu0 %v289
    %v5484 = vpop.f32.mrf.mxu0
    %v5485 = vadd.f32 %v3470, %v5484
    %v5486 = vpop.f32.mrf.mxu0
    %5487 = vdwg.mxu0
    %5488 = vmatpush.bf16.msra.mxu0 %v4560
    %5489 = vmatpush.bf16.msra.mxu0 %v4557
    %5490 = vmatpush.bf16.msra.mxu0 %v4554
    %5491 = vmatpush.bf16.msra.mxu0 %v4551
    %5492 = vmatpush.bf16.msra.mxu0 %v4548
    %5493 = vmatpush.bf16.msra.mxu0 %v4545
    %5494 = vmatpush.bf16.msra.mxu0 %v4542
    %5495 = vmatpush.bf16.msra.mxu0 %v4539
    %5496 = vmatmul.bf16.gmra.mxu0 %v290
    %v5497 = vpop.f32.mrf.mxu0
    %v5498 = vadd.f32 %v5485, %v5497
    %v5499 = vpop.f32.mrf.mxu0
    %5500 = vdwg.mxu0
    %5501 = vmatpush.bf16.msra.mxu0 %v4584
    %5502 = vmatpush.bf16.msra.mxu0 %v4581
    %5503 = vmatpush.bf16.msra.mxu0 %v4578
    %5504 = vmatpush.bf16.msra.mxu0 %v4575
    %5505 = vmatpush.bf16.msra.mxu0 %v4572
    %5506 = vmatpush.bf16.msra.mxu0 %v4569
    %5507 = vmatpush.bf16.msra.mxu0 %v4566
    %5508 = vmatpush.bf16.msra.mxu0 %v4563
    %5509 = vmatmul.bf16.gmra.mxu0 %v291
    %v5510 = vpop.f32.mrf.mxu0
    %v5511 = vadd.f32 %v5498, %v5510
    %v5512 = vpop.f32.mrf.mxu0
    %5513 = vdwg.mxu0
    %5514 = vmatpush.bf16.msra.mxu0 %v4608
    %5515 = vmatpush.bf16.msra.mxu0 %v4605
    %5516 = vmatpush.bf16.msra.mxu0 %v4602
    %5517 = vmatpush.bf16.msra.mxu0 %v4599
    %5518 = vmatpush.bf16.msra.mxu0 %v4596
    %5519 = vmatpush.bf16.msra.mxu0 %v4593
    %5520 = vmatpush.bf16.msra.mxu0 %v4590
    %5521 = vmatpush.bf16.msra.mxu0 %v4587
    %5522 = vmatmul.bf16.gmra.mxu0 %v292
    %v5523 = vpop.f32.mrf.mxu0
    %v5524 = vadd.f32 %v5511, %v5523
    %v5525 = vpop.f32.mrf.mxu0
    %5526 = vdwg.mxu0
    %5527 = vmatpush.bf16.msra.mxu0 %v4632
    %5528 = vmatpush.bf16.msra.mxu0 %v4629
    %5529 = vmatpush.bf16.msra.mxu0 %v4626
    %5530 = vmatpush.bf16.msra.mxu0 %v4623
    %5531 = vmatpush.bf16.msra.mxu0 %v4620
    %5532 = vmatpush.bf16.msra.mxu0 %v4617
    %5533 = vmatpush.bf16.msra.mxu0 %v4614
    %5534 = vmatpush.bf16.msra.mxu0 %v4611
    %5535 = vmatmul.bf16.gmra.mxu0 %v293
    %v5536 = vpop.f32.mrf.mxu0
    %v5537 = vadd.f32 %v5524, %v5536
    %v5538 = vpop.f32.mrf.mxu0
    %5539 = vdwg.mxu0
    %5540 = vmatpush.bf16.msra.mxu0 %v4656
    %5541 = vmatpush.bf16.msra.mxu0 %v4653
    %5542 = vmatpush.bf16.msra.mxu0 %v4650
    %5543 = vmatpush.bf16.msra.mxu0 %v4647
    %5544 = vmatpush.bf16.msra.mxu0 %v4644
    %5545 = vmatpush.bf16.msra.mxu0 %v4641
    %5546 = vmatpush.bf16.msra.mxu0 %v4638
    %5547 = vmatpush.bf16.msra.mxu0 %v4635
    %5548 = vmatmul.bf16.gmra.mxu0 %v294
    %v5549 = vpop.f32.mrf.mxu0
    %v5550 = vadd.f32 %v5537, %v5549
    %v5551 = vpop.f32.mrf.mxu0
    %5552 = vdwg.mxu0
    %5553 = vmatpush.bf16.msra.mxu0 %v4680
    %5554 = vmatpush.bf16.msra.mxu0 %v4677
    %5555 = vmatpush.bf16.msra.mxu0 %v4674
    %5556 = vmatpush.bf16.msra.mxu0 %v4671
    %5557 = vmatpush.bf16.msra.mxu0 %v4668
    %5558 = vmatpush.bf16.msra.mxu0 %v4665
    %5559 = vmatpush.bf16.msra.mxu0 %v4662
    %5560 = vmatpush.bf16.msra.mxu0 %v4659
    %5561 = vmatmul.bf16.gmra.mxu0 %v295
    %v5562 = vpop.f32.mrf.mxu0
    %v5563 = vadd.f32 %v5550, %v5562
    %v5564 = vpop.f32.mrf.mxu0
    %5565 = vdwg.mxu0
    %5566 = vmatpush.bf16.msra.mxu0 %v4704
    %5567 = vmatpush.bf16.msra.mxu0 %v4701
    %5568 = vmatpush.bf16.msra.mxu0 %v4698
    %5569 = vmatpush.bf16.msra.mxu0 %v4695
    %5570 = vmatpush.bf16.msra.mxu0 %v4692
    %5571 = vmatpush.bf16.msra.mxu0 %v4689
    %5572 = vmatpush.bf16.msra.mxu0 %v4686
    %5573 = vmatpush.bf16.msra.mxu0 %v4683
    %5574 = vmatmul.bf16.gmra.mxu0 %v296
    %v5575 = vpop.f32.mrf.mxu0
    %v5576 = vadd.f32 %v5563, %v5575
    %v5577 = vpop.f32.mrf.mxu0
    %5578 = vdwg.mxu0
    %5579 = vmatpush.bf16.msra.mxu0 %v4728
    %5580 = vmatpush.bf16.msra.mxu0 %v4725
    %5581 = vmatpush.bf16.msra.mxu0 %v4722
    %5582 = vmatpush.bf16.msra.mxu0 %v4719
    %5583 = vmatpush.bf16.msra.mxu0 %v4716
    %5584 = vmatpush.bf16.msra.mxu0 %v4713
    %5585 = vmatpush.bf16.msra.mxu0 %v4710
    %5586 = vmatpush.bf16.msra.mxu0 %v4707
    %5587 = vmatmul.bf16.gmra.mxu0 %v297
    %v5588 = vpop.f32.mrf.mxu0
    %v5589 = vadd.f32 %v5576, %v5588
    %v5590 = vpop.f32.mrf.mxu0
    %5591 = vdwg.mxu0
    %5592 = vmatpush.bf16.msra.mxu0 %v4752
    %5593 = vmatpush.bf16.msra.mxu0 %v4749
    %5594 = vmatpush.bf16.msra.mxu0 %v4746
    %5595 = vmatpush.bf16.msra.mxu0 %v4743
    %5596 = vmatpush.bf16.msra.mxu0 %v4740
    %5597 = vmatpush.bf16.msra.mxu0 %v4737
    %5598 = vmatpush.bf16.msra.mxu0 %v4734
    %5599 = vmatpush.bf16.msra.mxu0 %v4731
    %5600 = vmatmul.bf16.gmra.mxu0 %v298
    %v5601 = vpop.f32.mrf.mxu0
    %v5602 = vadd.f32 %v5589, %v5601
    %v5603 = vpop.f32.mrf.mxu0
    %5604 = vdwg.mxu0
    %5605 = vmatpush.bf16.msra.mxu0 %v4776
    %5606 = vmatpush.bf16.msra.mxu0 %v4773
    %5607 = vmatpush.bf16.msra.mxu0 %v4770
    %5608 = vmatpush.bf16.msra.mxu0 %v4767
    %5609 = vmatpush.bf16.msra.mxu0 %v4764
    %5610 = vmatpush.bf16.msra.mxu0 %v4761
    %5611 = vmatpush.bf16.msra.mxu0 %v4758
    %5612 = vmatpush.bf16.msra.mxu0 %v4755
    %5613 = vmatmul.bf16.gmra.mxu0 %v299
    %v5614 = vpop.f32.mrf.mxu0
    %v5615 = vadd.f32 %v5602, %v5614
    %v5616 = vpop.f32.mrf.mxu0
    %5617 = vdwg.mxu0
    %5618 = vmatpush.bf16.msra.mxu0 %v4800
    %5619 = vmatpush.bf16.msra.mxu0 %v4797
    %5620 = vmatpush.bf16.msra.mxu0 %v4794
    %5621 = vmatpush.bf16.msra.mxu0 %v4791
    %5622 = vmatpush.bf16.msra.mxu0 %v4788
    %5623 = vmatpush.bf16.msra.mxu0 %v4785
    %5624 = vmatpush.bf16.msra.mxu0 %v4782
    %5625 = vmatpush.bf16.msra.mxu0 %v4779
    %5626 = vmatmul.bf16.gmra.mxu0 %v300
    %v5627 = vpop.f32.mrf.mxu0
    %v5628 = vadd.f32 %v5615, %v5627
    %v5629 = vpop.f32.mrf.mxu0
    %5630 = vdwg.mxu0
    %5631 = vmatpush.bf16.msra.mxu0 %v4824
    %5632 = vmatpush.bf16.msra.mxu0 %v4821
    %5633 = vmatpush.bf16.msra.mxu0 %v4818
    %5634 = vmatpush.bf16.msra.mxu0 %v4815
    %5635 = vmatpush.bf16.msra.mxu0 %v4812
    %5636 = vmatpush.bf16.msra.mxu0 %v4809
    %5637 = vmatpush.bf16.msra.mxu0 %v4806
    %5638 = vmatpush.bf16.msra.mxu0 %v4803
    %5639 = vmatmul.bf16.gmra.mxu0 %v301
    %v5640 = vpop.f32.mrf.mxu0
    %v5641 = vadd.f32 %v5628, %v5640
    %v5642 = vpop.f32.mrf.mxu0
    %5643 = vdwg.mxu0
    %v5644 = vld [vmem:[%s2] sm:$0x7]
    %v5646 = vperm.slane %v5644, 0
    %v5647 = vperm.slane %v5644, 1
    %v5648 = vperm.slane %v5644, 2
    %v5652 = vadd.f32 %v5303, %v5646
    %v5653 = vadd.f32 %v5472, %v5647
    %v5654 = vadd.f32 %v5641, %v5648
    %v5655 = vmax.f32 %v5652, 0.0
    %v5656 = vmax.f32 %v5653, 0.0
    %v5657 = vmax.f32 %v5654, 0.0
    %v5658 = vld [vmem:[%s3] sm:$0xff]
    %v5659 = vld [vmem:[%s3 + $0x8] sm:$0xff]
    %v5660 = vld [vmem:[%s3 + $0x10] sm:$0xff]
    %v5661 = vld [vmem:[%s3 + $0x18] sm:$0xff]
    %v5662 = vld [vmem:[%s3 + $0x20] sm:$0xff]
    %v5663 = vld [vmem:[%s3 + $0x28] sm:$0xff]
    %v5664 = vld [vmem:[%s3 + $0x30] sm:$0xff]
    %v5665 = vld [vmem:[%s3 + $0x38] sm:$0xff]
    %v5666 = vld [vmem:[%s3 + $0x40] sm:$0xff]
    %v5667 = vld [vmem:[%s3 + $0x48] sm:$0xff]
    %v5668 = vld [vmem:[%s3 + $0x50] sm:$0xff]
    %v5669 = vld [vmem:[%s3 + $0x58] sm:$0xff]
    %v5670 = vld [vmem:[%s3 + $0x60] sm:$0xff]
    %v5671 = vld [vmem:[%s3 + $0x68] sm:$0xff]
    %v5672 = vld [vmem:[%s3 + $0x70] sm:$0xff]
    %v5673 = vld [vmem:[%s3 + $0x78] sm:$0xff]
    %v5674 = vld [vmem:[%s3 + $0x80] sm:$0xff]
    %v5675 = vld [vmem:[%s3 + $0x88] sm:$0xff]
    %v5676 = vld [vmem:[%s3 + $0x90] sm:$0xff]
    %v5677 = vld [vmem:[%s3 + $0x98] sm:$0xff]
    %v5678 = vld [vmem:[%s3 + $0xa0] sm:$0xff]
    %v5679 = vld [vmem:[%s3 + $0xa8] sm:$0xff]
    %v5680 = vld [vmem:[%s3 + $0xb0] sm:$0xff]
    %v5681 = vld [vmem:[%s3 + $0xb8] sm:$0xff]
    %v5682 = vld [vmem:[%s3 + $0xc0] sm:$0xff]
    %v5683 = vld [vmem:[%s3 + $0xc8] sm:$0xff]
    %v5684 = vld [vmem:[%s3 + $0xd0] sm:$0xff]
    %v5685 = vld [vmem:[%s3 + $0xd8] sm:$0xff]
    %v5686 = vld [vmem:[%s3 + $0xe0] sm:$0xff]
    %v5687 = vld [vmem:[%s3 + $0xe8] sm:$0xff]
    %v5688 = vld [vmem:[%s3 + $0xf0] sm:$0xff]
    %v5689 = vld [vmem:[%s3 + $0xf8] sm:$0xff]
    %v5690 = vld [vmem:[%s3 + $0x100] sm:$0xff]
    %v5691 = vld [vmem:[%s3 + $0x108] sm:$0xff]
    %v5692 = vld [vmem:[%s3 + $0x110] sm:$0xff]
    %v5693 = vld [vmem:[%s3 + $0x118] sm:$0xff]
    %v5694 = vld [vmem:[%s3 + $0x120] sm:$0xff]
    %v5695 = vld [vmem:[%s3 + $0x128] sm:$0xf]
    %v5696 = vld [vmem:[%s4] sm:$0x1]
    %v5698 = vperm.slane %v5696, 0
    %vm5700 = vcmask 359424
    %v5702 = vsel %vm5700, %v5657, 0
    %vm5704 = vcmask 1043456
    %v5706 = vsel %vm5704, %v5695, 0
    %5708 = vmatpush.msra.mxu0 %v5673
    %5709 = vmatpush.msra.mxu0 %v5672
    %5710 = vmatpush.msra.mxu0 %v5671
    %5711 = vmatpush.msra.mxu0 %v5670
    %5712 = vmatpush.msra.mxu0 %v5669
    %5713 = vmatpush.msra.mxu0 %v5668
    %5714 = vmatpush.msra.mxu0 %v5667
    %5715 = vmatpush.msra.mxu0 %v5666
    %5716 = vmatpush.msra.mxu0 %v5665
    %5717 = vmatpush.msra.mxu0 %v5664
    %5718 = vmatpush.msra.mxu0 %v5663
    %5719 = vmatpush.msra.mxu0 %v5662
    %5720 = vmatpush.msra.mxu0 %v5661
    %5721 = vmatpush.msra.mxu0 %v5660
    %5722 = vmatpush.msra.mxu0 %v5659
    %5723 = vmatpush.msra.mxu0 %v5658
    %5724 = vmatmul.f32.gmra.mxu0 %v5655
    %v5725 = vpop.f32.mrf.mxu0
    %v5726 = vadd.f32 %v5698, %v5725
    %5727 = vdwg.mxu0
    %5728 = vmatpush.msra.mxu0 %v5689
    %5729 = vmatpush.msra.mxu0 %v5688
    %5730 = vmatpush.msra.mxu0 %v5687
    %5731 = vmatpush.msra.mxu0 %v5686
    %5732 = vmatpush.msra.mxu0 %v5685
    %5733 = vmatpush.msra.mxu0 %v5684
    %5734 = vmatpush.msra.mxu0 %v5683
    %5735 = vmatpush.msra.mxu0 %v5682
    %5736 = vmatpush.msra.mxu0 %v5681
    %5737 = vmatpush.msra.mxu0 %v5680
    %5738 = vmatpush.msra.mxu0 %v5679
    %5739 = vmatpush.msra.mxu0 %v5678
    %5740 = vmatpush.msra.mxu0 %v5677
    %5741 = vmatpush.msra.mxu0 %v5676
    %5742 = vmatpush.msra.mxu0 %v5675
    %5743 = vmatpush.msra.mxu0 %v5674
    %5744 = vmatmul.f32.gmra.mxu0 %v5656
    %v5745 = vpop.f32.mrf.mxu0
    %v5746 = vadd.f32 %v5726, %v5745
    %5747 = vdwg.mxu0
    %5748 = vmatpush.msra.mxu0 0.0
    %5749 = vmatpush.msra.mxu0 0.0
    %5750 = vmatpush.msra.mxu0 0.0
    %5751 = vmatpush.msra.mxu0 0.0
    %5752 = vmatpush.msra.mxu0 0.0
    %5753 = vmatpush.msra.mxu0 0.0
    %5754 = vmatpush.msra.mxu0 0.0
    %5755 = vmatpush.msra.mxu0 0.0
    %5756 = vmatpush.msra.mxu0 0.0
    %5757 = vmatpush.msra.mxu0 0.0
    %5758 = vmatpush.msra.mxu0 %v5706
    %5759 = vmatpush.msra.mxu0 %v5694
    %5760 = vmatpush.msra.mxu0 %v5693
    %5761 = vmatpush.msra.mxu0 %v5692
    %5762 = vmatpush.msra.mxu0 %v5691
    %5763 = vmatpush.msra.mxu0 %v5690
    %5764 = vmatmul.f32.gmra.mxu0 %v5702
    %v5765 = vpop.f32.mrf.mxu0
    %v5766 = vadd.f32 %v5746, %v5765
    %5767 = vdwg.mxu0
    %v5768 = vmax.f32 %v5766, 0.0
    %v5769 = vld [vmem:[%s5] sm:$0xff]
    %v5770 = vld [vmem:[%s5 + $0x8] sm:$0xff]
    %v5771 = vld [vmem:[%s5 + $0x10] sm:$0xff]
    %v5772 = vld [vmem:[%s5 + $0x18] sm:$0x3f]
    %v5773 = vld [vmem:[%s6] sm:$0x1]
    %v5775 = vperm.slane %v5773, 0
    %vm5777 = vcmask 244736
    %v5779 = vsel %vm5777, %v5768, 0
    %vm5781 = vcmask 1045504
    %v5783 = vsel %vm5781, %v5772, 0
    %5785 = vmatpush.msra.mxu0 0.0
    %5786 = vmatpush.msra.mxu0 0.0
    %5787 = vmatpush.msra.mxu0 0.0
    %5788 = vmatpush.msra.mxu0 0.0
    %5789 = vmatpush.msra.mxu0 0.0
    %5790 = vmatpush.msra.mxu0 0.0
    %5791 = vmatpush.msra.mxu0 0.0
    %5792 = vmatpush.msra.mxu0 0.0
    %5793 = vmatpush.msra.mxu0 0.0
    %5794 = vmatpush.msra.mxu0 0.0
    %5795 = vmatpush.msra.mxu0 0.0
    %5796 = vmatpush.msra.mxu0 0.0
    %5797 = vmatpush.msra.mxu0 %v5783
    %5798 = vmatpush.msra.mxu0 %v5771
    %5799 = vmatpush.msra.mxu0 %v5770
    %5800 = vmatpush.msra.mxu0 %v5769
    %5801 = vmatmul.f32.gmra.mxu0 %v5779
    %v5802 = vpop.f32.mrf.mxu0
    %v5803 = vadd.f32 %v5775, %v5802
    %5804 = vdwg.mxu0
    %v5805 = vmax.f32 %v5803, 0.0
    %v5806 = vld [vmem:[%s7] sm:$0xff]
    %v5807 = vld [vmem:[%s7 + $0x8] sm:$0x3]
    %v5808 = vld [vmem:[%s8] sm:$0x1]
    %v5810 = vperm.slane %v5808, 0
    %vm5812 = vcmask 80896
    %v5814 = vsel %vm5812, %v5805, 0
    %vm5816 = vcmask 1041408
    %v5818 = vsel %vm5816, %v5807, 0
    %5820 = vmatpush.msra.mxu0 0.0
    %5821 = vmatpush.msra.mxu0 0.0
    %5822 = vmatpush.msra.mxu0 0.0
    %5823 = vmatpush.msra.mxu0 0.0
    %5824 = vmatpush.msra.mxu0 0.0
    %5825 = vmatpush.msra.mxu0 0.0
    %5826 = vmatpush.msra.mxu0 0.0
    %5827 = vmatpush.msra.mxu0 0.0
    %5828 = vmatpush.msra.mxu0 0.0
    %5829 = vmatpush.msra.mxu0 0.0
    %5830 = vmatpush.msra.mxu0 0.0
    %5831 = vmatpush.msra.mxu0 0.0
    %5832 = vmatpush.msra.mxu0 0.0
    %5833 = vmatpush.msra.mxu0 0.0
    %5834 = vmatpush.msra.mxu0 %v5818
    %5835 = vmatpush.msra.mxu0 %v5806
    %5836 = vmatmul.f32.gmra.mxu0 %v5814
    %v5837 = vpop.f32.mrf.mxu0
    %v5838 = vadd.f32 %v5810, %v5837
    %5839 = vdwg.mxu0
    %vm5840 = vcmask 17408
    %5841 = vst.msk [vmem:[#allocation2] sm:$0x3] %vm5840, %v5838
    // Predicated region
    $region38: #{tpu_custom_call.1} parent=1 // pred_check
      _
    $region39: #{tpu_custom_call.1} parent=1 // pred_check_branch
      %5843 = sbr.rel (0) target = $region41
    $region40: #{tpu_custom_call.1} parent=1 // pred_region
      %5845 = vsyncadd [#allocation3], 0
      %s5847 = sshll.u32 [#allocation2], 4
      %s5848 = int_to_ptr.vmem [resolvable:$true] %s5847
      %s5849 = sshll.u32 %s9, 4
      %s5850 = int_to_ptr.hbm [resolvable:$true] %s5849
      %5852 = dma.vmem_to_hbm [thread:$0]  %s5848, 32, %s5850, [#allocation3]
    $region41: #{tpu_custom_call.1} parent=1 // pred_fallthru
      _
    // Predicated region
    $region42: #{tpu_custom_call.1} parent=1 // pred_check
      _
    $region43: #{tpu_custom_call.1} parent=1 // pred_check_branch
      %5854 = sbr.rel (0) target = $region45
    $region44: #{tpu_custom_call.1} parent=1 // pred_region
      %5856 = dma.done [#allocation3], 32
    $region45: #{tpu_custom_call.1} parent=1 // pred_fallthru
      _
    %5857 = vsyncpa [#allocation3], 1

</llo_original>
